<compile_context>
chip_gen: v7x
topology: tpu7x:2x2x1
jax: 0.10.0
libtpu: 0.0.40
codegen_flags: <defaults>
</compile_context>

<pallas_src>
import math

import jax
import jax.numpy as jnp
from jax.experimental import pallas as pl
from jax.experimental.pallas import tpu as pltpu

# ----------------------------- config ---------------------------------------
B, S = 2, 16            # batch, sequence length
H = 128                 # hidden size (768 in real bert-base)
NUM_HEADS = 4           # 12 in real bert-base
HEAD_DIM = H // NUM_HEADS
FF = 4 * H              # intermediate size
NUM_LAYERS = 2          # 12 in real bert-base
VOCAB = 128
TYPE_VOCAB = 2
MAX_POS = 64
LN_EPS = 1e-12          # BERT LayerNorm eps


# ----------------------------- in-kernel helpers -----------------------------
def _layer_norm(x, g, b, eps=LN_EPS):
    mu = jnp.mean(x, axis=-1, keepdims=True)
    var = jnp.mean(jnp.square(x - mu), axis=-1, keepdims=True)
    return (x - mu) * jax.lax.rsqrt(var + eps) * g + b


def _gelu(x):
    # TODO(synk): HF BERT uses the exact erf GELU; tanh approximation used here.
    c = math.sqrt(2.0 / math.pi)
    return 0.5 * x * (1.0 + jnp.tanh(c * (x + 0.044715 * x * x * x)))


# ----------------------------- fused Pallas kernel ---------------------------
def bert_fused_kernel(emb_ref, mask_ref, eg_ref, eb_ref,
                      wqkv_ref, bqkv_ref, wo_ref, bo_ref,
                      g1_ref, be1_ref, w1_ref, b1_ref, w2_ref, b2_ref,
                      g2_ref, be2_ref,
                      wp_ref, bp_ref, wout_ref, bout_ref,
                      out_ref, x_carry):
    l = pl.program_id(0)
    n_rows = x_carry.shape[0]          # B*S
    batch = n_rows // S

    # --- l == 0 prologue: embedding LayerNorm (folded in; saves a launch) ----
    @pl.when(l == 0)
    def _():
        x_carry[...] = _layer_norm(emb_ref[...], eg_ref[...], eb_ref[...])

    x = x_carry[...]                   # (B*S, H) f32, carried across layers
    xb = x.astype(jnp.bfloat16)

    # --- self-attention: ONE fused (B*S,H) x (H,3H) QKV matmul ----------------
    qkv = jnp.dot(xb, wqkv_ref[0],
                  preferred_element_type=jnp.float32) + bqkv_ref[0]   # (M, 3H)

    # heads -> leading batch dim: one stack of lane-aligned 32-wide chunks.
    qkvh = jnp.stack(
        [qkv[:, c * HEAD_DIM:(c + 1) * HEAD_DIM] for c in range(3 * NUM_HEADS)],
        axis=0)                                                       # (3NH, M, HD)

    def heads(t):          # (NH, B*S, HD) -> (NH*B, S, HD), free regroup
        return t.reshape(NUM_HEADS * batch, S, HEAD_DIM).astype(jnp.bfloat16)

    qh = heads(qkvh[:NUM_HEADS])
    kh = heads(qkvh[NUM_HEADS:2 * NUM_HEADS])
    vh = heads(qkvh[2 * NUM_HEADS:])

    scale = 1.0 / math.sqrt(HEAD_DIM)
    scores = jnp.einsum('hqd,hkd->hqk', qh, kh,
                        preferred_element_type=jnp.float32) * scale   # (NH*B, S, S)

    # additive key mask, broadcast over heads/query rows in-kernel
    s4 = scores.reshape(NUM_HEADS, batch, S, S) + mask_ref[...][None]  # (1,B,1,S)
    s4 = s4 - jnp.max(s4, axis=-1, keepdims=True)
    p4 = jnp.exp(s4)
    p4 = p4 * pl.reciprocal(jnp.sum(p4, axis=-1, keepdims=True), approx=True)
    probs = p4.reshape(NUM_HEADS * batch, S, S).astype(jnp.bfloat16)

    ctx = jnp.einsum('hqk,hkd->hqd', probs, vh,
                     preferred_element_type=jnp.float32)              # (NH*B, S, HD)

    # merge heads back to (B*S, H), then ONE out-proj matmul with original wo
    ctx_h = ctx.reshape(NUM_HEADS, n_rows, HEAD_DIM)                  # free regroup
    ctx_m = jnp.concatenate([ctx_h[h] for h in range(NUM_HEADS)], axis=-1)  # (M, H)
    attn = jnp.dot(ctx_m.astype(jnp.bfloat16), wo_ref[0],
                   preferred_element_type=jnp.float32) + bo_ref[0]

    h1 = _layer_norm(x + attn, g1_ref[0], be1_ref[0])

    # --- feed-forward ---------------------------------------------------------
    ff = _gelu(jnp.dot(h1.astype(jnp.bfloat16), w1_ref[0],
                       preferred_element_type=jnp.float32) + b1_ref[0])
    ff2 = jnp.dot(ff.astype(jnp.bfloat16), w2_ref[0],
                  preferred_element_type=jnp.float32) + b2_ref[0]
    x_new = _layer_norm(h1 + ff2, g2_ref[0], be2_ref[0])
    x_carry[...] = x_new

    # --- last-layer epilogue: pooler tanh(dense(CLS)), dropout(0.3) == identity
    #     at inference, classifier Linear(H, 1); fully vectorized over batch ----
    @pl.when(l == pl.num_programs(0) - 1)
    def _():
        cls = x_carry[pl.ds(0, batch, stride=S), :]                   # (B, H)
        pooled = jnp.tanh(
            jnp.dot(cls.astype(jnp.bfloat16), wp_ref[...],
                    preferred_element_type=jnp.float32) + bp_ref[...])
        logits = jnp.dot(pooled, wout_ref[...],
                         preferred_element_type=jnp.float32) + bout_ref[...]
        out_ref[...] = logits                                         # (B, 1)


# ----------------------------- pallas_call wrapper ----------------------------
def bert_encoder_pallas(emb, mask_b, params):
    lw = params["layers"]
    num_layers = lw["wqkv"].shape[0]
    bs = emb.shape[0]
    batch = bs // S

    def const_spec(a):                       # whole array, resident across layers
        z = (0,) * a.ndim
        return pl.BlockSpec(a.shape, lambda l, z=z: z)

    def layer_spec(a):                       # one layer's slab per grid step
        z = (0,) * (a.ndim - 1)
        return pl.BlockSpec((1,) + a.shape[1:], lambda l, z=z: (l,) + z)

    const_inputs = [emb, mask_b, params["emb_ln_g"], params["emb_ln_b"]]
    layer_inputs = [lw["wqkv"], lw["bqkv"], lw["wo"], lw["bo"],
                    lw["ln1_g"], lw["ln1_b"],
                    lw["w1"], lw["b1"], lw["w2"], lw["b2"],
                    lw["ln2_g"], lw["ln2_b"]]
    tail_inputs = [params["pooler_w"], params["pooler_b"],
                   params["out_w"], params["out_b"]]

    return pl.pallas_call(
        bert_fused_kernel,
        out_shape=jax.ShapeDtypeStruct((batch, 1), jnp.float32),
        grid=(num_layers,),
        in_specs=([const_spec(a) for a in const_inputs]
                  + [layer_spec(a) for a in layer_inputs]
                  + [const_spec(a) for a in tail_inputs]),
        out_specs=pl.BlockSpec((batch, 1), lambda l: (0, 0)),
        scratch_shapes=[pltpu.VMEM((bs, H), jnp.float32)],
        compiler_params=pltpu.CompilerParams(
            # layer axis carries the activation -> sequential
            dimension_semantics=("arbitrary",)),
    )(*const_inputs, *layer_inputs, *tail_inputs)


# ----------------------------- params & forward -------------------------------
def init_params(key):
    ks = iter(jax.random.split(key, 16))

    def nrm(shape, dtype=jnp.float32):
        return (0.02 * jax.random.normal(next(ks), shape, jnp.float32)).astype(dtype)

    L = NUM_LAYERS
    return {
        "word_emb": nrm((VOCAB, H)),
        "pos_emb": nrm((MAX_POS, H)),
        "type_emb": nrm((TYPE_VOCAB, H)),
        "emb_ln_g": jnp.ones((1, H), jnp.float32),
        "emb_ln_b": jnp.zeros((1, H), jnp.float32),
        "pooler_w": nrm((H, H), jnp.bfloat16),
        "pooler_b": jnp.zeros((1, H), jnp.float32),
        "out_w": nrm((H, 1)),
        "out_b": jnp.zeros((1, 1), jnp.float32),
        "layers": {
            # per-layer weights stacked on a leading layer dim; matmul weights bf16
            "wqkv": nrm((L, H, 3 * H), jnp.bfloat16),          # fused [Q|K|V]
            "bqkv": jnp.zeros((L, 1, 3 * H), jnp.float32),
            "wo": nrm((L, H, H), jnp.bfloat16),
            "bo": jnp.zeros((L, 1, H), jnp.float32),
            "ln1_g": jnp.ones((L, 1, H), jnp.float32),
            "ln1_b": jnp.zeros((L, 1, H), jnp.float32),
            "w1": nrm((L, H, FF), jnp.bfloat16), "b1": jnp.zeros((L, 1, FF), jnp.float32),
            "w2": nrm((L, FF, H), jnp.bfloat16), "b2": jnp.zeros((L, 1, H), jnp.float32),
            "ln2_g": jnp.ones((L, 1, H), jnp.float32),
            "ln2_b": jnp.zeros((L, 1, H), jnp.float32),
        },
    }


@jax.jit
def bert_base_uncased_forward(params, ids, mask, token_type_ids):
    b, s = ids.shape
    pos = jnp.arange(s, dtype=jnp.int32)
    # Embedding table gathers are glue (plain JAX); everything downstream
    # (emb LN, all encoder layers, pooler, classifier) runs in ONE Pallas kernel.
    emb = (params["word_emb"][ids]
           + params["pos_emb"][pos][None, :, :]
           + params["type_emb"][token_type_ids]).reshape(b * s, H)

    # additive attention key mask: (B, 1, S); broadcast over heads inside kernel
    mask_b = ((1.0 - mask.astype(jnp.float32)) * -10000.0)[:, None, :]

    # TODO(synk): embedding / hidden / attention / bert_drop dropouts are identity
    # at inference and are therefore omitted.
    return bert_encoder_pallas(emb, mask_b, params)    # (B, 1)


# ----------------------------- main -------------------------------------------
if __name__ == "__main__":
    key = jax.random.PRNGKey(0)
    k_param, k_ids = jax.random.split(key, 2)

    params = init_params(k_param)
    ids = jax.random.randint(k_ids, (B, S), 0, VOCAB, dtype=jnp.int32)
    # second sequence has its last 6 tokens padded/masked out
    mask = jnp.array([[1] * S, [1] * (S - 6) + [0] * 6], dtype=jnp.int32)
    token_type_ids = jnp.concatenate(
        [jnp.zeros((B, S // 2), jnp.int32), jnp.ones((B, S // 2), jnp.int32)], axis=1)

    out = bert_base_uncased_forward(params, ids, mask, token_type_ids)
    out = jax.block_until_ready(out)
    assert out.shape == (B, 1) and out.dtype == jnp.float32
    print("KERNEL_OK")
</pallas_src>

<mosaic_0001>
module attributes {stable_mosaic.version = 11 : i64} {
  func.func @bert_fused_kernel(%arg0: i32, %arg1: memref<32x128xf32, #tpu.memory_space<vmem>>, %arg2: memref<2x1x16xf32, #tpu.memory_space<vmem>>, %arg3: memref<1x128xf32, #tpu.memory_space<vmem>>, %arg4: memref<1x128xf32, #tpu.memory_space<vmem>>, %arg5: memref<1x128x384xbf16, #tpu.memory_space<vmem>>, %arg6: memref<1x1x384xf32, #tpu.memory_space<vmem>>, %arg7: memref<1x128x128xbf16, #tpu.memory_space<vmem>>, %arg8: memref<1x1x128xf32, #tpu.memory_space<vmem>>, %arg9: memref<1x1x128xf32, #tpu.memory_space<vmem>>, %arg10: memref<1x1x128xf32, #tpu.memory_space<vmem>>, %arg11: memref<1x128x512xbf16, #tpu.memory_space<vmem>>, %arg12: memref<1x1x512xf32, #tpu.memory_space<vmem>>, %arg13: memref<1x512x128xbf16, #tpu.memory_space<vmem>>, %arg14: memref<1x1x128xf32, #tpu.memory_space<vmem>>, %arg15: memref<1x1x128xf32, #tpu.memory_space<vmem>>, %arg16: memref<1x1x128xf32, #tpu.memory_space<vmem>>, %arg17: memref<128x128xbf16, #tpu.memory_space<vmem>>, %arg18: memref<1x128xf32, #tpu.memory_space<vmem>>, %arg19: memref<128x1xf32, #tpu.memory_space<vmem>>, %arg20: memref<1x1xf32, #tpu.memory_space<vmem>>, %arg21: memref<2x1xf32, #tpu.memory_space<vmem>>, %arg22: memref<32x128xf32, #tpu.memory_space<vmem>>) attributes {dimension_semantics = [#tpu.dimension_semantics<arbitrary>], iteration_bounds = array<i64: 2>, scalar_prefetch = 0 : i64, scratch_operands = 1 : i64, tpu.core_type = #tpu.core_type<tc>, window_params = [{pipeline_mode = #tpu.pipeline_mode<synchronous>, transform_indices = @transform_0, window_bounds = array<i64: 32, 128>}, {pipeline_mode = #tpu.pipeline_mode<synchronous>, transform_indices = @transform_1, window_bounds = array<i64: 2, 1, 16>}, {pipeline_mode = #tpu.pipeline_mode<synchronous>, transform_indices = @transform_2, window_bounds = array<i64: 1, 128>}, {pipeline_mode = #tpu.pipeline_mode<synchronous>, transform_indices = @transform_3, window_bounds = array<i64: 1, 128>}, {transform_indices = @transform_4, window_bounds = array<i64: 1, 128, 384>}, {transform_indices = @transform_5, window_bounds = array<i64: 1, 1, 384>}, {transform_indices = @transform_6, window_bounds = array<i64: 1, 128, 128>}, {transform_indices = @transform_7, window_bounds = array<i64: 1, 1, 128>}, {transform_indices = @transform_8, window_bounds = array<i64: 1, 1, 128>}, {transform_indices = @transform_9, window_bounds = array<i64: 1, 1, 128>}, {transform_indices = @transform_10, window_bounds = array<i64: 1, 128, 512>}, {transform_indices = @transform_11, window_bounds = array<i64: 1, 1, 512>}, {transform_indices = @transform_12, window_bounds = array<i64: 1, 512, 128>}, {transform_indices = @transform_13, window_bounds = array<i64: 1, 1, 128>}, {transform_indices = @transform_14, window_bounds = array<i64: 1, 1, 128>}, {transform_indices = @transform_15, window_bounds = array<i64: 1, 1, 128>}, {pipeline_mode = #tpu.pipeline_mode<synchronous>, transform_indices = @transform_16, window_bounds = array<i64: 128, 128>}, {pipeline_mode = #tpu.pipeline_mode<synchronous>, transform_indices = @transform_17, window_bounds = array<i64: 1, 128>}, {pipeline_mode = #tpu.pipeline_mode<synchronous>, transform_indices = @transform_18, window_bounds = array<i64: 128, 1>}, {pipeline_mode = #tpu.pipeline_mode<synchronous>, transform_indices = @transform_19, window_bounds = array<i64: 1, 1>}, {pipeline_mode = #tpu.pipeline_mode<synchronous>, transform_indices = @transform_20, window_bounds = array<i64: 2, 1>}]} {
    %c0_i32 = arith.constant 0 : i32
    %0 = arith.cmpi eq, %arg0, %c0_i32 : i32
    %1 = arith.extui %0 : i1 to i32
    %c0_i32_0 = arith.constant 0 : i32
    %2 = arith.cmpi ne, %1, %c0_i32_0 : i32
    scf.if %2 {
      %c0_66 = arith.constant 0 : index
      %c0_67 = arith.constant 0 : index
      %172 = vector.load %arg1[%c0_66, %c0_67] : memref<32x128xf32, #tpu.memory_space<vmem>>, vector<32x128xf32>
      %c0_68 = arith.constant 0 : index
      %c0_69 = arith.constant 0 : index
      %173 = vector.load %arg3[%c0_68, %c0_69] : memref<1x128xf32, #tpu.memory_space<vmem>>, vector<1x128xf32>
      %c0_70 = arith.constant 0 : index
      %c0_71 = arith.constant 0 : index
      %174 = vector.load %arg4[%c0_70, %c0_71] : memref<1x128xf32, #tpu.memory_space<vmem>>, vector<1x128xf32>
      %cst_72 = arith.constant dense<0.000000e+00> : vector<32xf32>
      %175 = vector.multi_reduction <add>, %172, %cst_72 [1] : vector<32x128xf32> to vector<32xf32>
      %176 = vector.shape_cast %175 : vector<32xf32> to vector<32x1xf32>
      %cst_73 = arith.constant 1.280000e+02 : f32
      %177 = vector.broadcast %cst_73 : f32 to vector<32x1xf32>
      %178 = arith.divf %176, %177 : vector<32x1xf32>
      %179 = vector.broadcast %178 : vector<32x1xf32> to vector<32x128xf32>
      %180 = arith.subf %172, %179 : vector<32x128xf32>
      %181 = arith.mulf %180, %180 : vector<32x128xf32>
      %cst_74 = arith.constant dense<0.000000e+00> : vector<32xf32>
      %182 = vector.multi_reduction <add>, %181, %cst_74 [1] : vector<32x128xf32> to vector<32xf32>
      %183 = vector.shape_cast %182 : vector<32xf32> to vector<32x1xf32>
      %cst_75 = arith.constant 1.280000e+02 : f32
      %184 = vector.broadcast %cst_75 : f32 to vector<32x1xf32>
      %185 = arith.divf %183, %184 : vector<32x1xf32>
      %186 = vector.broadcast %178 : vector<32x1xf32> to vector<32x128xf32>
      %187 = arith.subf %172, %186 : vector<32x128xf32>
      %cst_76 = arith.constant 9.99999996E-13 : f32
      %188 = vector.broadcast %cst_76 : f32 to vector<32x1xf32>
      %189 = arith.addf %185, %188 : vector<32x1xf32>
      %190 = math.rsqrt %189 : vector<32x1xf32>
      %191 = vector.broadcast %190 : vector<32x1xf32> to vector<32x128xf32>
      %192 = arith.mulf %187, %191 : vector<32x128xf32>
      %193 = vector.broadcast %173 : vector<1x128xf32> to vector<32x128xf32>
      %194 = arith.mulf %192, %193 : vector<32x128xf32>
      %195 = vector.broadcast %174 : vector<1x128xf32> to vector<32x128xf32>
      %196 = arith.addf %194, %195 : vector<32x128xf32>
      %c0_77 = arith.constant 0 : index
      %c0_78 = arith.constant 0 : index
      %197 = vector.load %arg22[%c0_77, %c0_78] : memref<32x128xf32, #tpu.memory_space<vmem>>, vector<32x128xf32>
      tpu.vector_store %arg22[%c0_77, %c0_78], %196 {strides = array<i32>} : memref<32x128xf32, #tpu.memory_space<vmem>>, vector<32x128xf32>,
    } else {
    }
    %c0 = arith.constant 0 : index
    %c0_1 = arith.constant 0 : index
    %3 = vector.load %arg22[%c0, %c0_1] : memref<32x128xf32, #tpu.memory_space<vmem>>, vector<32x128xf32>
    %4 = arith.truncf %3 : vector<32x128xf32> to vector<32x128xbf16>
    %c0_2 = arith.constant 0 : index
    %c0_3 = arith.constant 0 : index
    %c0_4 = arith.constant 0 : index
    %5 = vector.load %arg5[%c0_2, %c0_3, %c0_4] : memref<1x128x384xbf16, #tpu.memory_space<vmem>>, vector<1x128x384xbf16>
    %6 = vector.shape_cast %5 : vector<1x128x384xbf16> to vector<128x384xbf16>
    %cst = arith.constant dense<0.000000e+00> : vector<32x384xf32>
    %7 = tpu.matmul %4, %6, %cst {dimension_numbers = #tpu.dot_dimension_numbers<[1], [0], [0], [1], [0, 0, 1, 1], [], []>} : vector<32x128xbf16>, vector<128x384xbf16>, vector<32x384xf32> -> vector<32x384xf32>
    %c0_5 = arith.constant 0 : index
    %c0_6 = arith.constant 0 : index
    %c0_7 = arith.constant 0 : index
    %8 = vector.load %arg6[%c0_5, %c0_6, %c0_7] : memref<1x1x384xf32, #tpu.memory_space<vmem>>, vector<1x1x384xf32>
    %9 = vector.shape_cast %8 : vector<1x1x384xf32> to vector<1x384xf32>
    %10 = vector.broadcast %9 : vector<1x384xf32> to vector<32x384xf32>
    %11 = arith.addf %7, %10 : vector<32x384xf32>
    %12 = vector.extract_strided_slice %11 {offsets = [0, 0], sizes = [32, 32], strides = [1, 1]} : vector<32x384xf32> to vector<32x32xf32>
    %13 = vector.extract_strided_slice %11 {offsets = [0, 32], sizes = [32, 32], strides = [1, 1]} : vector<32x384xf32> to vector<32x32xf32>
    %14 = vector.extract_strided_slice %11 {offsets = [0, 64], sizes = [32, 32], strides = [1, 1]} : vector<32x384xf32> to vector<32x32xf32>
    %15 = vector.extract_strided_slice %11 {offsets = [0, 96], sizes = [32, 32], strides = [1, 1]} : vector<32x384xf32> to vector<32x32xf32>
    %16 = vector.extract_strided_slice %11 {offsets = [0, 128], sizes = [32, 32], strides = [1, 1]} : vector<32x384xf32> to vector<32x32xf32>
    %17 = vector.extract_strided_slice %11 {offsets = [0, 160], sizes = [32, 32], strides = [1, 1]} : vector<32x384xf32> to vector<32x32xf32>
    %18 = vector.extract_strided_slice %11 {offsets = [0, 192], sizes = [32, 32], strides = [1, 1]} : vector<32x384xf32> to vector<32x32xf32>
    %19 = vector.extract_strided_slice %11 {offsets = [0, 224], sizes = [32, 32], strides = [1, 1]} : vector<32x384xf32> to vector<32x32xf32>
    %20 = vector.extract_strided_slice %11 {offsets = [0, 256], sizes = [32, 32], strides = [1, 1]} : vector<32x384xf32> to vector<32x32xf32>
    %21 = vector.extract_strided_slice %11 {offsets = [0, 288], sizes = [32, 32], strides = [1, 1]} : vector<32x384xf32> to vector<32x32xf32>
    %22 = vector.extract_strided_slice %11 {offsets = [0, 320], sizes = [32, 32], strides = [1, 1]} : vector<32x384xf32> to vector<32x32xf32>
    %23 = vector.extract_strided_slice %11 {offsets = [0, 352], sizes = [32, 32], strides = [1, 1]} : vector<32x384xf32> to vector<32x32xf32>
    %24 = vector.shape_cast %12 : vector<32x32xf32> to vector<1x32x32xf32>
    %25 = vector.shape_cast %13 : vector<32x32xf32> to vector<1x32x32xf32>
    %26 = vector.shape_cast %14 : vector<32x32xf32> to vector<1x32x32xf32>
    %27 = vector.shape_cast %15 : vector<32x32xf32> to vector<1x32x32xf32>
    %28 = vector.shape_cast %16 : vector<32x32xf32> to vector<1x32x32xf32>
    %29 = vector.shape_cast %17 : vector<32x32xf32> to vector<1x32x32xf32>
    %30 = vector.shape_cast %18 : vector<32x32xf32> to vector<1x32x32xf32>
    %31 = vector.shape_cast %19 : vector<32x32xf32> to vector<1x32x32xf32>
    %32 = vector.shape_cast %20 : vector<32x32xf32> to vector<1x32x32xf32>
    %33 = vector.shape_cast %21 : vector<32x32xf32> to vector<1x32x32xf32>
    %34 = vector.shape_cast %22 : vector<32x32xf32> to vector<1x32x32xf32>
    %35 = vector.shape_cast %23 : vector<32x32xf32> to vector<1x32x32xf32>
    %36 = tpu.concatenate %24, %25, %26, %27, %28, %29, %30, %31, %32, %33, %34, %35 in 0 : vector<1x32x32xf32>, vector<1x32x32xf32>, vector<1x32x32xf32>, vector<1x32x32xf32>, vector<1x32x32xf32>, vector<1x32x32xf32>, vector<1x32x32xf32>, vector<1x32x32xf32>, vector<1x32x32xf32>, vector<1x32x32xf32>, vector<1x32x32xf32>, vector<1x32x32xf32> -> vector<12x32x32xf32>
    %37 = vector.extract_strided_slice %36 {offsets = [0, 0, 0], sizes = [4, 32, 32], strides = [1, 1, 1]} : vector<12x32x32xf32> to vector<4x32x32xf32>
    %38 = vector.shape_cast %37 : vector<4x32x32xf32> to vector<8x16x32xf32>
    %39 = arith.truncf %38 : vector<8x16x32xf32> to vector<8x16x32xbf16>
    %40 = vector.extract_strided_slice %36 {offsets = [4, 0, 0], sizes = [4, 32, 32], strides = [1, 1, 1]} : vector<12x32x32xf32> to vector<4x32x32xf32>
    %41 = vector.shape_cast %40 : vector<4x32x32xf32> to vector<8x16x32xf32>
    %42 = arith.truncf %41 : vector<8x16x32xf32> to vector<8x16x32xbf16>
    %43 = vector.extract_strided_slice %36 {offsets = [8, 0, 0], sizes = [4, 32, 32], strides = [1, 1, 1]} : vector<12x32x32xf32> to vector<4x32x32xf32>
    %44 = vector.shape_cast %43 : vector<4x32x32xf32> to vector<8x16x32xf32>
    %45 = arith.truncf %44 : vector<8x16x32xf32> to vector<8x16x32xbf16>
    "tpu.trace_start"() <{level = 10 : i32, message = "hqd,hkd->hqk"}> : () -> ()
    %cst_8 = arith.constant dense<0.000000e+00> : vector<8x16x16xf32>
    %46 = tpu.matmul %39, %42, %cst_8 {dimension_numbers = #tpu.dot_dimension_numbers<[2], [2], [1], [1], [0, 0, 0, 1, 1, 1], [0], [0]>} : vector<8x16x32xbf16>, vector<8x16x32xbf16>, vector<8x16x16xf32> -> vector<8x16x16xf32>
    "tpu.trace_stop"() : () -> ()
    %cst_9 = arith.constant 0.176776692 : f32
    %47 = vector.broadcast %cst_9 : f32 to vector<8x16x16xf32>
    %48 = arith.mulf %46, %47 : vector<8x16x16xf32>
    %49 = vector.shape_cast %48 : vector<8x16x16xf32> to vector<4x2x16x16xf32>
    %c0_10 = arith.constant 0 : index
    %c0_11 = arith.constant 0 : index
    %c0_12 = arith.constant 0 : index
    %50 = vector.load %arg2[%c0_10, %c0_11, %c0_12] : memref<2x1x16xf32, #tpu.memory_space<vmem>>, vector<2x1x16xf32>
    %51 = vector.shape_cast %50 : vector<2x1x16xf32> to vector<1x2x1x16xf32>
    %52 = vector.broadcast %51 : vector<1x2x1x16xf32> to vector<4x2x16x16xf32>
    %53 = arith.addf %49, %52 : vector<4x2x16x16xf32>
    %cst_13 = arith.constant dense<0xFF800000> : vector<4x2x16xf32>
    %54 = vector.multi_reduction <maximumf>, %53, %cst_13 [3] : vector<4x2x16x16xf32> to vector<4x2x16xf32>
    %55 = vector.shape_cast %54 : vector<4x2x16xf32> to vector<4x2x16x1xf32>
    %56 = vector.broadcast %55 : vector<4x2x16x1xf32> to vector<4x2x16x16xf32>
    %57 = arith.subf %53, %56 : vector<4x2x16x16xf32>
    %58 = math.exp %57 : vector<4x2x16x16xf32>
    %cst_14 = arith.constant dense<0.000000e+00> : vector<4x2x16xf32>
    %59 = vector.multi_reduction <add>, %58, %cst_14 [3] : vector<4x2x16x16xf32> to vector<4x2x16xf32>
    %60 = vector.shape_cast %59 : vector<4x2x16xf32> to vector<4x2x16x1xf32>
    %61 = tpu.reciprocal %60 {approx = true} : vector<4x2x16x1xf32> -> vector<4x2x16x1xf32>
    %62 = vector.broadcast %61 : vector<4x2x16x1xf32> to vector<4x2x16x16xf32>
    %63 = arith.mulf %58, %62 : vector<4x2x16x16xf32>
    %64 = vector.shape_cast %63 : vector<4x2x16x16xf32> to vector<8x16x16xf32>
    %65 = arith.truncf %64 : vector<8x16x16xf32> to vector<8x16x16xbf16>
    "tpu.trace_start"() <{level = 10 : i32, message = "hqk,hkd->hqd"}> : () -> ()
    %cst_15 = arith.constant dense<0.000000e+00> : vector<8x16x32xf32>
    %66 = tpu.matmul %65, %45, %cst_15 {dimension_numbers = #tpu.dot_dimension_numbers<[2], [1], [1], [2], [0, 0, 0, 1, 1, 2], [0], [0]>} : vector<8x16x16xbf16>, vector<8x16x32xbf16>, vector<8x16x32xf32> -> vector<8x16x32xf32>
    "tpu.trace_stop"() : () -> ()
    %67 = vector.shape_cast %66 : vector<8x16x32xf32> to vector<4x32x32xf32>
    %68 = vector.extract_strided_slice %67 {offsets = [0, 0, 0], sizes = [1, 32, 32], strides = [1, 1, 1]} : vector<4x32x32xf32> to vector<1x32x32xf32>
    %69 = vector.shape_cast %68 : vector<1x32x32xf32> to vector<32x32xf32>
    %70 = vector.extract_strided_slice %67 {offsets = [1, 0, 0], sizes = [1, 32, 32], strides = [1, 1, 1]} : vector<4x32x32xf32> to vector<1x32x32xf32>
    %71 = vector.shape_cast %70 : vector<1x32x32xf32> to vector<32x32xf32>
    %72 = vector.extract_strided_slice %67 {offsets = [2, 0, 0], sizes = [1, 32, 32], strides = [1, 1, 1]} : vector<4x32x32xf32> to vector<1x32x32xf32>
    %73 = vector.shape_cast %72 : vector<1x32x32xf32> to vector<32x32xf32>
    %74 = vector.extract_strided_slice %67 {offsets = [3, 0, 0], sizes = [1, 32, 32], strides = [1, 1, 1]} : vector<4x32x32xf32> to vector<1x32x32xf32>
    %75 = vector.shape_cast %74 : vector<1x32x32xf32> to vector<32x32xf32>
    %76 = tpu.concatenate %69, %71, %73, %75 in 1 : vector<32x32xf32>, vector<32x32xf32>, vector<32x32xf32>, vector<32x32xf32> -> vector<32x128xf32>
    %77 = arith.truncf %76 : vector<32x128xf32> to vector<32x128xbf16>
    %c0_16 = arith.constant 0 : index
    %c0_17 = arith.constant 0 : index
    %c0_18 = arith.constant 0 : index
    %78 = vector.load %arg7[%c0_16, %c0_17, %c0_18] : memref<1x128x128xbf16, #tpu.memory_space<vmem>>, vector<1x128x128xbf16>
    %79 = vector.shape_cast %78 : vector<1x128x128xbf16> to vector<128x128xbf16>
    %cst_19 = arith.constant dense<0.000000e+00> : vector<32x128xf32>
    %80 = tpu.matmul %77, %79, %cst_19 {dimension_numbers = #tpu.dot_dimension_numbers<[1], [0], [0], [1], [0, 0, 1, 1], [], []>} : vector<32x128xbf16>, vector<128x128xbf16>, vector<32x128xf32> -> vector<32x128xf32>
    %c0_20 = arith.constant 0 : index
    %c0_21 = arith.constant 0 : index
    %c0_22 = arith.constant 0 : index
    %81 = vector.load %arg8[%c0_20, %c0_21, %c0_22] : memref<1x1x128xf32, #tpu.memory_space<vmem>>, vector<1x1x128xf32>
    %82 = vector.shape_cast %81 : vector<1x1x128xf32> to vector<1x128xf32>
    %83 = vector.broadcast %82 : vector<1x128xf32> to vector<32x128xf32>
    %84 = arith.addf %80, %83 : vector<32x128xf32>
    %85 = arith.addf %3, %84 : vector<32x128xf32>
    %c0_23 = arith.constant 0 : index
    %c0_24 = arith.constant 0 : index
    %c0_25 = arith.constant 0 : index
    %86 = vector.load %arg9[%c0_23, %c0_24, %c0_25] : memref<1x1x128xf32, #tpu.memory_space<vmem>>, vector<1x1x128xf32>
    %87 = vector.shape_cast %86 : vector<1x1x128xf32> to vector<1x128xf32>
    %c0_26 = arith.constant 0 : index
    %c0_27 = arith.constant 0 : index
    %c0_28 = arith.constant 0 : index
    %88 = vector.load %arg10[%c0_26, %c0_27, %c0_28] : memref<1x1x128xf32, #tpu.memory_space<vmem>>, vector<1x1x128xf32>
    %89 = vector.shape_cast %88 : vector<1x1x128xf32> to vector<1x128xf32>
    %cst_29 = arith.constant dense<0.000000e+00> : vector<32xf32>
    %90 = vector.multi_reduction <add>, %85, %cst_29 [1] : vector<32x128xf32> to vector<32xf32>
    %91 = vector.shape_cast %90 : vector<32xf32> to vector<32x1xf32>
    %cst_30 = arith.constant 1.280000e+02 : f32
    %92 = vector.broadcast %cst_30 : f32 to vector<32x1xf32>
    %93 = arith.divf %91, %92 : vector<32x1xf32>
    %94 = vector.broadcast %93 : vector<32x1xf32> to vector<32x128xf32>
    %95 = arith.subf %85, %94 : vector<32x128xf32>
    %96 = arith.mulf %95, %95 : vector<32x128xf32>
    %cst_31 = arith.constant dense<0.000000e+00> : vector<32xf32>
    %97 = vector.multi_reduction <add>, %96, %cst_31 [1] : vector<32x128xf32> to vector<32xf32>
    %98 = vector.shape_cast %97 : vector<32xf32> to vector<32x1xf32>
    %cst_32 = arith.constant 1.280000e+02 : f32
    %99 = vector.broadcast %cst_32 : f32 to vector<32x1xf32>
    %100 = arith.divf %98, %99 : vector<32x1xf32>
    %101 = vector.broadcast %93 : vector<32x1xf32> to vector<32x128xf32>
    %102 = arith.subf %85, %101 : vector<32x128xf32>
    %cst_33 = arith.constant 9.99999996E-13 : f32
    %103 = vector.broadcast %cst_33 : f32 to vector<32x1xf32>
    %104 = arith.addf %100, %103 : vector<32x1xf32>
    %105 = math.rsqrt %104 : vector<32x1xf32>
    %106 = vector.broadcast %105 : vector<32x1xf32> to vector<32x128xf32>
    %107 = arith.mulf %102, %106 : vector<32x128xf32>
    %108 = vector.broadcast %87 : vector<1x128xf32> to vector<32x128xf32>
    %109 = arith.mulf %107, %108 : vector<32x128xf32>
    %110 = vector.broadcast %89 : vector<1x128xf32> to vector<32x128xf32>
    %111 = arith.addf %109, %110 : vector<32x128xf32>
    %112 = arith.truncf %111 : vector<32x128xf32> to vector<32x128xbf16>
    %c0_34 = arith.constant 0 : index
    %c0_35 = arith.constant 0 : index
    %c0_36 = arith.constant 0 : index
    %113 = vector.load %arg11[%c0_34, %c0_35, %c0_36] : memref<1x128x512xbf16, #tpu.memory_space<vmem>>, vector<1x128x512xbf16>
    %114 = vector.shape_cast %113 : vector<1x128x512xbf16> to vector<128x512xbf16>
    %cst_37 = arith.constant dense<0.000000e+00> : vector<32x512xf32>
    %115 = tpu.matmul %112, %114, %cst_37 {dimension_numbers = #tpu.dot_dimension_numbers<[1], [0], [0], [1], [0, 0, 1, 1], [], []>} : vector<32x128xbf16>, vector<128x512xbf16>, vector<32x512xf32> -> vector<32x512xf32>
    %c0_38 = arith.constant 0 : index
    %c0_39 = arith.constant 0 : index
    %c0_40 = arith.constant 0 : index
    %116 = vector.load %arg12[%c0_38, %c0_39, %c0_40] : memref<1x1x512xf32, #tpu.memory_space<vmem>>, vector<1x1x512xf32>
    %117 = vector.shape_cast %116 : vector<1x1x512xf32> to vector<1x512xf32>
    %118 = vector.broadcast %117 : vector<1x512xf32> to vector<32x512xf32>
    %119 = arith.addf %115, %118 : vector<32x512xf32>
    %cst_41 = arith.constant 5.000000e-01 : f32
    %120 = vector.broadcast %cst_41 : f32 to vector<32x512xf32>
    %121 = arith.mulf %120, %119 : vector<32x512xf32>
    %cst_42 = arith.constant 4.471500e-02 : f32
    %122 = vector.broadcast %cst_42 : f32 to vector<32x512xf32>
    %123 = arith.mulf %122, %119 : vector<32x512xf32>
    %124 = arith.mulf %123, %119 : vector<32x512xf32>
    %125 = arith.mulf %124, %119 : vector<32x512xf32>
    %126 = arith.addf %119, %125 : vector<32x512xf32>
    %cst_43 = arith.constant 0.797884583 : f32
    %127 = vector.broadcast %cst_43 : f32 to vector<32x512xf32>
    %128 = arith.mulf %127, %126 : vector<32x512xf32>
    %129 = math.tanh %128 : vector<32x512xf32>
    %cst_44 = arith.constant 1.000000e+00 : f32
    %130 = vector.broadcast %cst_44 : f32 to vector<32x512xf32>
    %131 = arith.addf %130, %129 : vector<32x512xf32>
    %132 = arith.mulf %121, %131 : vector<32x512xf32>
    %133 = arith.truncf %132 : vector<32x512xf32> to vector<32x512xbf16>
    %c0_45 = arith.constant 0 : index
    %c0_46 = arith.constant 0 : index
    %c0_47 = arith.constant 0 : index
    %134 = vector.load %arg13[%c0_45, %c0_46, %c0_47] : memref<1x512x128xbf16, #tpu.memory_space<vmem>>, vector<1x512x128xbf16>
    %135 = vector.shape_cast %134 : vector<1x512x128xbf16> to vector<512x128xbf16>
    %cst_48 = arith.constant dense<0.000000e+00> : vector<32x128xf32>
    %136 = tpu.matmul %133, %135, %cst_48 {dimension_numbers = #tpu.dot_dimension_numbers<[1], [0], [0], [1], [0, 0, 1, 1], [], []>} : vector<32x512xbf16>, vector<512x128xbf16>, vector<32x128xf32> -> vector<32x128xf32>
    %c0_49 = arith.constant 0 : index
    %c0_50 = arith.constant 0 : index
    %c0_51 = arith.constant 0 : index
    %137 = vector.load %arg14[%c0_49, %c0_50, %c0_51] : memref<1x1x128xf32, #tpu.memory_space<vmem>>, vector<1x1x128xf32>
    %138 = vector.shape_cast %137 : vector<1x1x128xf32> to vector<1x128xf32>
    %139 = vector.broadcast %138 : vector<1x128xf32> to vector<32x128xf32>
    %140 = arith.addf %136, %139 : vector<32x128xf32>
    %141 = arith.addf %111, %140 : vector<32x128xf32>
    %c0_52 = arith.constant 0 : index
    %c0_53 = arith.constant 0 : index
    %c0_54 = arith.constant 0 : index
    %142 = vector.load %arg15[%c0_52, %c0_53, %c0_54] : memref<1x1x128xf32, #tpu.memory_space<vmem>>, vector<1x1x128xf32>
    %143 = vector.shape_cast %142 : vector<1x1x128xf32> to vector<1x128xf32>
    %c0_55 = arith.constant 0 : index
    %c0_56 = arith.constant 0 : index
    %c0_57 = arith.constant 0 : index
    %144 = vector.load %arg16[%c0_55, %c0_56, %c0_57] : memref<1x1x128xf32, #tpu.memory_space<vmem>>, vector<1x1x128xf32>
    %145 = vector.shape_cast %144 : vector<1x1x128xf32> to vector<1x128xf32>
    %cst_58 = arith.constant dense<0.000000e+00> : vector<32xf32>
    %146 = vector.multi_reduction <add>, %141, %cst_58 [1] : vector<32x128xf32> to vector<32xf32>
    %147 = vector.shape_cast %146 : vector<32xf32> to vector<32x1xf32>
    %cst_59 = arith.constant 1.280000e+02 : f32
    %148 = vector.broadcast %cst_59 : f32 to vector<32x1xf32>
    %149 = arith.divf %147, %148 : vector<32x1xf32>
    %150 = vector.broadcast %149 : vector<32x1xf32> to vector<32x128xf32>
    %151 = arith.subf %141, %150 : vector<32x128xf32>
    %152 = arith.mulf %151, %151 : vector<32x128xf32>
    %cst_60 = arith.constant dense<0.000000e+00> : vector<32xf32>
    %153 = vector.multi_reduction <add>, %152, %cst_60 [1] : vector<32x128xf32> to vector<32xf32>
    %154 = vector.shape_cast %153 : vector<32xf32> to vector<32x1xf32>
    %cst_61 = arith.constant 1.280000e+02 : f32
    %155 = vector.broadcast %cst_61 : f32 to vector<32x1xf32>
    %156 = arith.divf %154, %155 : vector<32x1xf32>
    %157 = vector.broadcast %149 : vector<32x1xf32> to vector<32x128xf32>
    %158 = arith.subf %141, %157 : vector<32x128xf32>
    %cst_62 = arith.constant 9.99999996E-13 : f32
    %159 = vector.broadcast %cst_62 : f32 to vector<32x1xf32>
    %160 = arith.addf %156, %159 : vector<32x1xf32>
    %161 = math.rsqrt %160 : vector<32x1xf32>
    %162 = vector.broadcast %161 : vector<32x1xf32> to vector<32x128xf32>
    %163 = arith.mulf %158, %162 : vector<32x128xf32>
    %164 = vector.broadcast %143 : vector<1x128xf32> to vector<32x128xf32>
    %165 = arith.mulf %163, %164 : vector<32x128xf32>
    %166 = vector.broadcast %145 : vector<1x128xf32> to vector<32x128xf32>
    %167 = arith.addf %165, %166 : vector<32x128xf32>
    %c0_63 = arith.constant 0 : index
    %c0_64 = arith.constant 0 : index
    %168 = vector.load %arg22[%c0_63, %c0_64] : memref<32x128xf32, #tpu.memory_space<vmem>>, vector<32x128xf32>
    tpu.vector_store %arg22[%c0_63, %c0_64], %167 {strides = array<i32>} : memref<32x128xf32, #tpu.memory_space<vmem>>, vector<32x128xf32>,
    %c1_i32 = arith.constant 1 : i32
    %169 = arith.cmpi eq, %arg0, %c1_i32 : i32
    %170 = arith.extui %169 : i1 to i32
    %c0_i32_65 = arith.constant 0 : i32
    %171 = arith.cmpi ne, %170, %c0_i32_65 : i32
    scf.if %171 {
      %c0_66 = arith.constant 0 : index
      %c0_67 = arith.constant 0 : index
      %172 = tpu.strided_load %arg22[%c0_66, %c0_67] {strides = array<i32: 16, 1>} : memref<32x128xf32, #tpu.memory_space<vmem>>, vector<2x128xf32>
      %173 = arith.truncf %172 : vector<2x128xf32> to vector<2x128xbf16>
      %c0_68 = arith.constant 0 : index
      %c0_69 = arith.constant 0 : index
      %174 = vector.load %arg17[%c0_68, %c0_69] : memref<128x128xbf16, #tpu.memory_space<vmem>>, vector<128x128xbf16>
      %cst_70 = arith.constant dense<0.000000e+00> : vector<2x128xf32>
      %175 = tpu.matmul %173, %174, %cst_70 {dimension_numbers = #tpu.dot_dimension_numbers<[1], [0], [0], [1], [0, 0, 1, 1], [], []>} : vector<2x128xbf16>, vector<128x128xbf16>, vector<2x128xf32> -> vector<2x128xf32>
      %c0_71 = arith.constant 0 : index
      %c0_72 = arith.constant 0 : index
      %176 = vector.load %arg18[%c0_71, %c0_72] : memref<1x128xf32, #tpu.memory_space<vmem>>, vector<1x128xf32>
      %177 = vector.broadcast %176 : vector<1x128xf32> to vector<2x128xf32>
      %178 = arith.addf %175, %177 : vector<2x128xf32>
      %179 = math.tanh %178 : vector<2x128xf32>
      %c0_73 = arith.constant 0 : index
      %c0_74 = arith.constant 0 : index
      %180 = vector.load %arg19[%c0_73, %c0_74] : memref<128x1xf32, #tpu.memory_space<vmem>>, vector<128x1xf32>
      %cst_75 = arith.constant dense<0.000000e+00> : vector<2x1xf32>
      %181 = tpu.matmul %179, %180, %cst_75 {dimension_numbers = #tpu.dot_dimension_numbers<[1], [0], [0], [1], [0, 0, 1, 1], [], []>} : vector<2x128xf32>, vector<128x1xf32>, vector<2x1xf32> -> vector<2x1xf32>
      %c0_76 = arith.constant 0 : index
      %c0_77 = arith.constant 0 : index
      %182 = vector.load %arg20[%c0_76, %c0_77] : memref<1x1xf32, #tpu.memory_space<vmem>>, vector<1x1xf32>
      %183 = vector.broadcast %182 : vector<1x1xf32> to vector<2x1xf32>
      %184 = arith.addf %181, %183 : vector<2x1xf32>
      %c0_78 = arith.constant 0 : index
      %c0_79 = arith.constant 0 : index
      %185 = vector.load %arg21[%c0_78, %c0_79] : memref<2x1xf32, #tpu.memory_space<vmem>>, vector<2x1xf32>
      tpu.vector_store %arg21[%c0_78, %c0_79], %184 {strides = array<i32>} : memref<2x1xf32, #tpu.memory_space<vmem>>, vector<2x1xf32>,
    } else {
    }
    return
  }
  func.func @transform_0(%arg0: i32) -> (i32, i32) {
    %c0_i32 = arith.constant 0 : i32
    %c0_i32_0 = arith.constant 0 : i32
    %c0_i32_1 = arith.constant 0 : i32
    return %c0_i32, %c0_i32_0 : i32, i32
  }
  func.func @transform_1(%arg0: i32) -> (i32, i32, i32) {
    %c0_i32 = arith.constant 0 : i32
    %c0_i32_0 = arith.constant 0 : i32
    %c0_i32_1 = arith.constant 0 : i32
    %c0_i32_2 = arith.constant 0 : i32
    return %c0_i32, %c0_i32_0, %c0_i32_1 : i32, i32, i32
  }
  func.func @transform_2(%arg0: i32) -> (i32, i32) {
    %c0_i32 = arith.constant 0 : i32
    %c0_i32_0 = arith.constant 0 : i32
    %c0_i32_1 = arith.constant 0 : i32
    return %c0_i32, %c0_i32_0 : i32, i32
  }
  func.func @transform_3(%arg0: i32) -> (i32, i32) {
    %c0_i32 = arith.constant 0 : i32
    %c0_i32_0 = arith.constant 0 : i32
    %c0_i32_1 = arith.constant 0 : i32
    return %c0_i32, %c0_i32_0 : i32, i32
  }
  func.func @transform_4(%arg0: i32) -> (i32, i32, i32) {
    %c0_i32 = arith.constant 0 : i32
    %c0_i32_0 = arith.constant 0 : i32
    %c0_i32_1 = arith.constant 0 : i32
    return %arg0, %c0_i32, %c0_i32_0 : i32, i32, i32
  }
  func.func @transform_5(%arg0: i32) -> (i32, i32, i32) {
    %c0_i32 = arith.constant 0 : i32
    %c0_i32_0 = arith.constant 0 : i32
    %c0_i32_1 = arith.constant 0 : i32
    return %arg0, %c0_i32, %c0_i32_0 : i32, i32, i32
  }
  func.func @transform_6(%arg0: i32) -> (i32, i32, i32) {
    %c0_i32 = arith.constant 0 : i32
    %c0_i32_0 = arith.constant 0 : i32
    %c0_i32_1 = arith.constant 0 : i32
    return %arg0, %c0_i32, %c0_i32_0 : i32, i32, i32
  }
  func.func @transform_7(%arg0: i32) -> (i32, i32, i32) {
    %c0_i32 = arith.constant 0 : i32
    %c0_i32_0 = arith.constant 0 : i32
    %c0_i32_1 = arith.constant 0 : i32
    return %arg0, %c0_i32, %c0_i32_0 : i32, i32, i32
  }
  func.func @transform_8(%arg0: i32) -> (i32, i32, i32) {
    %c0_i32 = arith.constant 0 : i32
    %c0_i32_0 = arith.constant 0 : i32
    %c0_i32_1 = arith.constant 0 : i32
    return %arg0, %c0_i32, %c0_i32_0 : i32, i32, i32
  }
  func.func @transform_9(%arg0: i32) -> (i32, i32, i32) {
    %c0_i32 = arith.constant 0 : i32
    %c0_i32_0 = arith.constant 0 : i32
    %c0_i32_1 = arith.constant 0 : i32
    return %arg0, %c0_i32, %c0_i32_0 : i32, i32, i32
  }
  func.func @transform_10(%arg0: i32) -> (i32, i32, i32) {
    %c0_i32 = arith.constant 0 : i32
    %c0_i32_0 = arith.constant 0 : i32
    %c0_i32_1 = arith.constant 0 : i32
    return %arg0, %c0_i32, %c0_i32_0 : i32, i32, i32
  }
  func.func @transform_11(%arg0: i32) -> (i32, i32, i32) {
    %c0_i32 = arith.constant 0 : i32
    %c0_i32_0 = arith.constant 0 : i32
    %c0_i32_1 = arith.constant 0 : i32
    return %arg0, %c0_i32, %c0_i32_0 : i32, i32, i32
  }
  func.func @transform_12(%arg0: i32) -> (i32, i32, i32) {
    %c0_i32 = arith.constant 0 : i32
    %c0_i32_0 = arith.constant 0 : i32
    %c0_i32_1 = arith.constant 0 : i32
    return %arg0, %c0_i32, %c0_i32_0 : i32, i32, i32
  }
  func.func @transform_13(%arg0: i32) -> (i32, i32, i32) {
    %c0_i32 = arith.constant 0 : i32
    %c0_i32_0 = arith.constant 0 : i32
    %c0_i32_1 = arith.constant 0 : i32
    return %arg0, %c0_i32, %c0_i32_0 : i32, i32, i32
  }
  func.func @transform_14(%arg0: i32) -> (i32, i32, i32) {
    %c0_i32 = arith.constant 0 : i32
    %c0_i32_0 = arith.constant 0 : i32
    %c0_i32_1 = arith.constant 0 : i32
    return %arg0, %c0_i32, %c0_i32_0 : i32, i32, i32
  }
  func.func @transform_15(%arg0: i32) -> (i32, i32, i32) {
    %c0_i32 = arith.constant 0 : i32
    %c0_i32_0 = arith.constant 0 : i32
    %c0_i32_1 = arith.constant 0 : i32
    return %arg0, %c0_i32, %c0_i32_0 : i32, i32, i32
  }
  func.func @transform_16(%arg0: i32) -> (i32, i32) {
    %c0_i32 = arith.constant 0 : i32
    %c0_i32_0 = arith.constant 0 : i32
    %c0_i32_1 = arith.constant 0 : i32
    return %c0_i32, %c0_i32_0 : i32, i32
  }
  func.func @transform_17(%arg0: i32) -> (i32, i32) {
    %c0_i32 = arith.constant 0 : i32
    %c0_i32_0 = arith.constant 0 : i32
    %c0_i32_1 = arith.constant 0 : i32
    return %c0_i32, %c0_i32_0 : i32, i32
  }
  func.func @transform_18(%arg0: i32) -> (i32, i32) {
    %c0_i32 = arith.constant 0 : i32
    %c0_i32_0 = arith.constant 0 : i32
    %c0_i32_1 = arith.constant 0 : i32
    return %c0_i32, %c0_i32_0 : i32, i32
  }
  func.func @transform_19(%arg0: i32) -> (i32, i32) {
    %c0_i32 = arith.constant 0 : i32
    %c0_i32_0 = arith.constant 0 : i32
    %c0_i32_1 = arith.constant 0 : i32
    return %c0_i32, %c0_i32_0 : i32, i32
  }
  func.func @transform_20(%arg0: i32) -> (i32, i32) {
    %c0_i32 = arith.constant 0 : i32
    %c0_i32_0 = arith.constant 0 : i32
    %c0_i32_1 = arith.constant 0 : i32
    return %c0_i32, %c0_i32_0 : i32, i32
  }
}

</mosaic_0001>

<llo_original>
// kernel: bert_base_uncased_forward.1
$region0: #{bert_base_uncased_forward.1}
  #allocation0 [shape = 'u32[]', space=smem, size = 0x4, offset = 0x4, fixed_abs, tag = 'smem constant byte address 0x4 - core index']
  #allocation1 [shape = 'u32[144,128]{1,0:T(1,128)}', space=vmem, size = 0x12000, scoped, tag = 'internal scratch']
  #allocation2 [shape = 'f32[32,128]{1,0:T(8,128)}', space=vmem, size = 0x4000, scoped, tag = 'scratch operand']
  #allocation3 [shape = 'f32[1,1]{1,0:T(1,128)S(1)}', space=vmem, size = 0x200, scoped, tag = 'scoped memory for bert_base_uncased_forward.1']
  %s0 = inlined_call_operand.vmem [shape: f32[32,128], index: 0, kind: input, shape index: {}]
  %s1 = inlined_call_operand.vmem [shape: f32[2,1,16], index: 1, kind: input, shape index: {}]
  %s2 = inlined_call_operand.hbm [shape: f32[1,128], index: 2, kind: input, shape index: {}]
  %s3 = inlined_call_operand.hbm [shape: f32[1,128], index: 3, kind: input, shape index: {}]
  %s4 = inlined_call_operand.hbm [shape: bf16[2,128,384], index: 4, kind: input, shape index: {}]
  %s5 = inlined_call_operand.vmem [shape: f32[2,1,384], index: 5, kind: input, shape index: {}]
  %s6 = inlined_call_operand.hbm [shape: bf16[2,128,128], index: 6, kind: input, shape index: {}]
  %s7 = inlined_call_operand.vmem [shape: f32[2,1,128], index: 7, kind: input, shape index: {}]
  %s8 = inlined_call_operand.vmem [shape: f32[2,1,128], index: 8, kind: input, shape index: {}]
  %s9 = inlined_call_operand.vmem [shape: f32[2,1,128], index: 9, kind: input, shape index: {}]
  %s10 = inlined_call_operand.vmem [shape: bf16[2,128,512], index: 10, kind: input, shape index: {}]
  %s11 = inlined_call_operand.vmem [shape: f32[2,1,512], index: 11, kind: input, shape index: {}]
  %s12 = inlined_call_operand.vmem [shape: bf16[2,512,128], index: 12, kind: input, shape index: {}]
  %s13 = inlined_call_operand.vmem [shape: f32[2,1,128], index: 13, kind: input, shape index: {}]
  %s14 = inlined_call_operand.vmem [shape: f32[2,1,128], index: 14, kind: input, shape index: {}]
  %s15 = inlined_call_operand.vmem [shape: f32[2,1,128], index: 15, kind: input, shape index: {}]
  %s16 = inlined_call_operand.hbm [shape: bf16[128,128], index: 16, kind: input, shape index: {}]
  %s17 = inlined_call_operand.vmem [shape: f32[1,128], index: 17, kind: input, shape index: {}]
  %s18 = inlined_call_operand.vmem [shape: f32[128,1], index: 18, kind: input, shape index: {}]
  %s19 = inlined_call_operand.<no memory space> [shape: f32[1,1], index: 19, kind: input, shape index: {}]
  %s20 = inlined_call_operand.vmem [shape: f32[2,1], index: 20, kind: output, shape index: {}]
  %s21 = sld [smem:[#allocation0]]
  $region141: #{bert_base_uncased_forward.1} parent=0
    _
  %s23 = ssub.s32 1, %s21
  %s24 = scalar_select 0, %s23, %s21
  %v25 = vstv %s19
  %26 = vst [vmem:[#allocation3] sm:$0x1] %v25
  $region1: #{bert_base_uncased_forward.1} parent=0
    #allocation4 [shape = 'u8[512]{0}', space=vmem, size = 0x400, scoped, tag = 'input window, operand 2, single buffered']
    #allocation5 [shape = 's32[2]{0}', space=sflag, size = 0x8, scoped, tag = 'scoped memory for bert_base_uncased_forward.1']
    #allocation6 [shape = 'u8[512]{0}', space=vmem, size = 0x400, scoped, tag = 'input window, operand 3, single buffered']
    #allocation7 [shape = 's32[1]{0}', space=sflag, size = 0x4, scoped, tag = 'scoped memory for bert_base_uncased_forward.1']
    #allocation8 [shape = 'u8[196608]{0}', space=vmem, size = 0x30000, scoped, tag = 'input window, operand 4']
    #allocation9 [shape = 'u8[65536]{0}', space=vmem, size = 0x10000, scoped, tag = 'input window, operand 6']
    #allocation10 [shape = 'u8[32768]{0}', space=vmem, size = 0x8000, scoped, tag = 'input window, operand 16, single buffered']
    %27 = vsyncpa [#allocation5], 0
    %28 = vsyncpa [#allocation7], 0
    loop: start=0, step=1, limit=4
    $region2: #{bert_base_uncased_forward.1} parent=1 // loop_pre_header
      _
    $region3: #{bert_base_uncased_forward.1} parent=1 // loop_header
      %s30 = sphi 0, %s34
      %p31 = scmp.ge.s32.totalorder %s30, 4
      %s38 = sphi 0, %s38
      %s40 = sphi 0, %s38
      %s41 = sphi 0, %s40
      %s55 = sphi 0, %s41
      %s59 = sphi 0, %s59
      %s61 = sphi 0, %s59
      %s62 = sphi 0, %s61
      %s76 = sphi 0, %s62
      %s80 = sphi 0, %s80
      %s82 = sphi 0, %s80
      %s83 = sphi 0, %s82
      %s97 = sphi 0, %s83
      %s101 = sphi 0, %s101
      %s103 = sphi 0, %s101
      %s104 = sphi 0, %s103
      %s118 = sphi 0, %s104
      %s124 = sphi 0, %s126
      %s127 = sphi 0, %s124
      %s128 = sphi 0, %s127
      %s144 = sphi 0, %s128
      %s150 = sphi 0, %s152
      %s153 = sphi 0, %s150
      %s154 = sphi 0, %s153
      %s170 = sphi 0, %s154
      %s176 = sphi 0, %s178
      %s179 = sphi 0, %s176
      %s180 = sphi 0, %s179
      %s196 = sphi 0, %s180
      %s202 = sphi 0, %s204
      %s205 = sphi 0, %s202
      %s206 = sphi 0, %s205
      %s222 = sphi 0, %s206
      %s228 = sphi 0, %s230
      %s231 = sphi 0, %s228
      %s232 = sphi 0, %s231
      %s248 = sphi 0, %s232
      %s254 = sphi 0, %s256
      %s257 = sphi 0, %s254
      %s258 = sphi 0, %s257
      %s274 = sphi 0, %s258
      %s280 = sphi 0, %s282
      %s283 = sphi 0, %s280
      %s284 = sphi 0, %s283
      %s300 = sphi 0, %s284
      %s306 = sphi 0, %s308
      %s309 = sphi 0, %s306
      %s310 = sphi 0, %s309
      %s326 = sphi 0, %s310
      %s332 = sphi 0, %s334
      %s335 = sphi 0, %s332
      %s336 = sphi 0, %s335
      %s352 = sphi 0, %s336
      %s358 = sphi 0, %s360
      %s361 = sphi 0, %s358
      %s362 = sphi 0, %s361
      %s378 = sphi 0, %s362
      %s384 = sphi 0, %s386
      %s387 = sphi 0, %s384
      %s388 = sphi 0, %s387
      %s404 = sphi 0, %s388
      %s410 = sphi 0, %s412
      %s413 = sphi 0, %s410
      %s414 = sphi 0, %s413
      %s430 = sphi 0, %s414
      %s434 = sphi 0, %s434
      %s436 = sphi 0, %s434
      %s437 = sphi 0, %s436
      %s451 = sphi 0, %s437
      %s455 = sphi 0, %s455
      %s457 = sphi 0, %s455
      %s458 = sphi 0, %s457
      %s472 = sphi 0, %s458
      %s476 = sphi 0, %s476
      %s478 = sphi 0, %s476
      %s479 = sphi 0, %s478
      %s493 = sphi 0, %s479
      %s497 = sphi 0, %s497
      %s499 = sphi 0, %s497
      %s500 = sphi 0, %s499
      %s514 = sphi 0, %s500
      %s518 = sphi 0, %s518
      %s520 = sphi 0, %s518
      %s521 = sphi 0, %s520
      %s535 = sphi 0, %s521
    $region4: #{bert_base_uncased_forward.1} parent=1 // loop_header_branch
      %33 = sbr.rel (%p31) target = $region8
    $region5: #{bert_base_uncased_forward.1} parent=1 // loop_body
      %s35 = ssub.s32 %s30, 1
      %s36 = ssub.s32 %s30, 2
      %s37 = sadd.s32 %s30, 1
      %s39 = sadd.s32 %s38, 1
      %p42 = scmp.eq.s32.totalorder %s30, 1
      %p43 = scmp.ne.s32.totalorder %s38, %s40
      %p44 = scmp.eq.s32.totalorder %s30, 0
      %p45 = por %p43, %p44
      %p46 = scmp.ne.s32.totalorder %s38, %s40
      %p47 = scmp.eq.s32.totalorder %s35, 1
      %p48 = por %p46, %p47
      %p49 = scmp.ne.s32.totalorder %s40, %s41
      %p50 = scmp.eq.s32.totalorder %s35, 0
      %p51 = por %p49, %p50
      %p52 = scmp.ne.s32.totalorder %s40, %s41
      %p53 = scmp.eq.s32.totalorder %s36, 1
      %p54 = por %p52, %p53
      %p56 = scmp.ne.s32.totalorder %s41, %s55
      %p57 = scmp.eq.s32.totalorder %s36, 0
      %p58 = por %p56, %p57
      %s60 = sadd.s32 %s59, 1
      %p63 = scmp.eq.s32.totalorder %s30, 1
      %p64 = scmp.ne.s32.totalorder %s59, %s61
      %p65 = scmp.eq.s32.totalorder %s30, 0
      %p66 = por %p64, %p65
      %p67 = scmp.ne.s32.totalorder %s59, %s61
      %p68 = scmp.eq.s32.totalorder %s35, 1
      %p69 = por %p67, %p68
      %p70 = scmp.ne.s32.totalorder %s61, %s62
      %p71 = scmp.eq.s32.totalorder %s35, 0
      %p72 = por %p70, %p71
      %p73 = scmp.ne.s32.totalorder %s61, %s62
      %p74 = scmp.eq.s32.totalorder %s36, 1
      %p75 = por %p73, %p74
      %p77 = scmp.ne.s32.totalorder %s62, %s76
      %p78 = scmp.eq.s32.totalorder %s36, 0
      %p79 = por %p77, %p78
      %s81 = sadd.s32 %s80, 1
      %p84 = scmp.eq.s32.totalorder %s30, 1
      %p85 = scmp.ne.s32.totalorder %s80, %s82
      %p86 = scmp.eq.s32.totalorder %s30, 0
      %p87 = por %p85, %p86
      %p88 = scmp.ne.s32.totalorder %s80, %s82
      %p89 = scmp.eq.s32.totalorder %s35, 1
      %p90 = por %p88, %p89
      %p91 = scmp.ne.s32.totalorder %s82, %s83
      %p92 = scmp.eq.s32.totalorder %s35, 0
      %p93 = por %p91, %p92
      %p94 = scmp.ne.s32.totalorder %s82, %s83
      %p95 = scmp.eq.s32.totalorder %s36, 1
      %p96 = por %p94, %p95
      %p98 = scmp.ne.s32.totalorder %s83, %s97
      %p99 = scmp.eq.s32.totalorder %s36, 0
      %p100 = por %p98, %p99
      %s102 = sadd.s32 %s101, 1
      %p105 = scmp.eq.s32.totalorder %s30, 1
      %p106 = scmp.ne.s32.totalorder %s101, %s103
      %p107 = scmp.eq.s32.totalorder %s30, 0
      %p108 = por %p106, %p107
      %p109 = scmp.ne.s32.totalorder %s101, %s103
      %p110 = scmp.eq.s32.totalorder %s35, 1
      %p111 = por %p109, %p110
      %p112 = scmp.ne.s32.totalorder %s103, %s104
      %p113 = scmp.eq.s32.totalorder %s35, 0
      %p114 = por %p112, %p113
      %p115 = scmp.ne.s32.totalorder %s103, %s104
      %p116 = scmp.eq.s32.totalorder %s36, 1
      %p117 = por %p115, %p116
      %p119 = scmp.ne.s32.totalorder %s104, %s118
      %p120 = scmp.eq.s32.totalorder %s36, 0
      %p121 = por %p119, %p120
      %s122 = ssub.s32 %s30, %s37
      %p123 = scmp.eq.s32.totalorder %s122, 0
      %s125 = sadd.s32 %s124, 1
      %s126 = scalar_select %p123, %s124, %s125
      %p129 = pneg %p123
      %p130 = scmp.eq.s32.totalorder %s30, 1
      %p131 = por %p129, %p130
      %p132 = scmp.ne.s32.totalorder %s124, %s127
      %p133 = scmp.eq.s32.totalorder %s30, 0
      %p134 = por %p132, %p133
      %p135 = scmp.ne.s32.totalorder %s124, %s127
      %p136 = scmp.eq.s32.totalorder %s35, 1
      %p137 = por %p135, %p136
      %p138 = scmp.ne.s32.totalorder %s127, %s128
      %p139 = scmp.eq.s32.totalorder %s35, 0
      %p140 = por %p138, %p139
      %p141 = scmp.ne.s32.totalorder %s127, %s128
      %p142 = scmp.eq.s32.totalorder %s36, 1
      %p143 = por %p141, %p142
      %p145 = scmp.ne.s32.totalorder %s128, %s144
      %p146 = scmp.eq.s32.totalorder %s36, 0
      %p147 = por %p145, %p146
      %s148 = ssub.s32 %s30, %s37
      %p149 = scmp.eq.s32.totalorder %s148, 0
      %s151 = sadd.s32 %s150, 1
      %s152 = scalar_select %p149, %s150, %s151
      %p155 = pneg %p149
      %p156 = scmp.eq.s32.totalorder %s30, 1
      %p157 = por %p155, %p156
      %p158 = scmp.ne.s32.totalorder %s150, %s153
      %p159 = scmp.eq.s32.totalorder %s30, 0
      %p160 = por %p158, %p159
      %p161 = scmp.ne.s32.totalorder %s150, %s153
      %p162 = scmp.eq.s32.totalorder %s35, 1
      %p163 = por %p161, %p162
      %p164 = scmp.ne.s32.totalorder %s153, %s154
      %p165 = scmp.eq.s32.totalorder %s35, 0
      %p166 = por %p164, %p165
      %p167 = scmp.ne.s32.totalorder %s153, %s154
      %p168 = scmp.eq.s32.totalorder %s36, 1
      %p169 = por %p167, %p168
      %p171 = scmp.ne.s32.totalorder %s154, %s170
      %p172 = scmp.eq.s32.totalorder %s36, 0
      %p173 = por %p171, %p172
      %s174 = ssub.s32 %s30, %s37
      %p175 = scmp.eq.s32.totalorder %s174, 0
      %s177 = sadd.s32 %s176, 1
      %s178 = scalar_select %p175, %s176, %s177
      %p181 = pneg %p175
      %p182 = scmp.eq.s32.totalorder %s30, 1
      %p183 = por %p181, %p182
      %p184 = scmp.ne.s32.totalorder %s176, %s179
      %p185 = scmp.eq.s32.totalorder %s30, 0
      %p186 = por %p184, %p185
      %p187 = scmp.ne.s32.totalorder %s176, %s179
      %p188 = scmp.eq.s32.totalorder %s35, 1
      %p189 = por %p187, %p188
      %p190 = scmp.ne.s32.totalorder %s179, %s180
      %p191 = scmp.eq.s32.totalorder %s35, 0
      %p192 = por %p190, %p191
      %p193 = scmp.ne.s32.totalorder %s179, %s180
      %p194 = scmp.eq.s32.totalorder %s36, 1
      %p195 = por %p193, %p194
      %p197 = scmp.ne.s32.totalorder %s180, %s196
      %p198 = scmp.eq.s32.totalorder %s36, 0
      %p199 = por %p197, %p198
      %s200 = ssub.s32 %s30, %s37
      %p201 = scmp.eq.s32.totalorder %s200, 0
      %s203 = sadd.s32 %s202, 1
      %s204 = scalar_select %p201, %s202, %s203
      %p207 = pneg %p201
      %p208 = scmp.eq.s32.totalorder %s30, 1
      %p209 = por %p207, %p208
      %p210 = scmp.ne.s32.totalorder %s202, %s205
      %p211 = scmp.eq.s32.totalorder %s30, 0
      %p212 = por %p210, %p211
      %p213 = scmp.ne.s32.totalorder %s202, %s205
      %p214 = scmp.eq.s32.totalorder %s35, 1
      %p215 = por %p213, %p214
      %p216 = scmp.ne.s32.totalorder %s205, %s206
      %p217 = scmp.eq.s32.totalorder %s35, 0
      %p218 = por %p216, %p217
      %p219 = scmp.ne.s32.totalorder %s205, %s206
      %p220 = scmp.eq.s32.totalorder %s36, 1
      %p221 = por %p219, %p220
      %p223 = scmp.ne.s32.totalorder %s206, %s222
      %p224 = scmp.eq.s32.totalorder %s36, 0
      %p225 = por %p223, %p224
      %s226 = ssub.s32 %s30, %s37
      %p227 = scmp.eq.s32.totalorder %s226, 0
      %s229 = sadd.s32 %s228, 1
      %s230 = scalar_select %p227, %s228, %s229
      %p233 = pneg %p227
      %p234 = scmp.eq.s32.totalorder %s30, 1
      %p235 = por %p233, %p234
      %p236 = scmp.ne.s32.totalorder %s228, %s231
      %p237 = scmp.eq.s32.totalorder %s30, 0
      %p238 = por %p236, %p237
      %p239 = scmp.ne.s32.totalorder %s228, %s231
      %p240 = scmp.eq.s32.totalorder %s35, 1
      %p241 = por %p239, %p240
      %p242 = scmp.ne.s32.totalorder %s231, %s232
      %p243 = scmp.eq.s32.totalorder %s35, 0
      %p244 = por %p242, %p243
      %p245 = scmp.ne.s32.totalorder %s231, %s232
      %p246 = scmp.eq.s32.totalorder %s36, 1
      %p247 = por %p245, %p246
      %p249 = scmp.ne.s32.totalorder %s232, %s248
      %p250 = scmp.eq.s32.totalorder %s36, 0
      %p251 = por %p249, %p250
      %s252 = ssub.s32 %s30, %s37
      %p253 = scmp.eq.s32.totalorder %s252, 0
      %s255 = sadd.s32 %s254, 1
      %s256 = scalar_select %p253, %s254, %s255
      %p259 = pneg %p253
      %p260 = scmp.eq.s32.totalorder %s30, 1
      %p261 = por %p259, %p260
      %p262 = scmp.ne.s32.totalorder %s254, %s257
      %p263 = scmp.eq.s32.totalorder %s30, 0
      %p264 = por %p262, %p263
      %p265 = scmp.ne.s32.totalorder %s254, %s257
      %p266 = scmp.eq.s32.totalorder %s35, 1
      %p267 = por %p265, %p266
      %p268 = scmp.ne.s32.totalorder %s257, %s258
      %p269 = scmp.eq.s32.totalorder %s35, 0
      %p270 = por %p268, %p269
      %p271 = scmp.ne.s32.totalorder %s257, %s258
      %p272 = scmp.eq.s32.totalorder %s36, 1
      %p273 = por %p271, %p272
      %p275 = scmp.ne.s32.totalorder %s258, %s274
      %p276 = scmp.eq.s32.totalorder %s36, 0
      %p277 = por %p275, %p276
      %s278 = ssub.s32 %s30, %s37
      %p279 = scmp.eq.s32.totalorder %s278, 0
      %s281 = sadd.s32 %s280, 1
      %s282 = scalar_select %p279, %s280, %s281
      %p285 = pneg %p279
      %p286 = scmp.eq.s32.totalorder %s30, 1
      %p287 = por %p285, %p286
      %p288 = scmp.ne.s32.totalorder %s280, %s283
      %p289 = scmp.eq.s32.totalorder %s30, 0
      %p290 = por %p288, %p289
      %p291 = scmp.ne.s32.totalorder %s280, %s283
      %p292 = scmp.eq.s32.totalorder %s35, 1
      %p293 = por %p291, %p292
      %p294 = scmp.ne.s32.totalorder %s283, %s284
      %p295 = scmp.eq.s32.totalorder %s35, 0
      %p296 = por %p294, %p295
      %p297 = scmp.ne.s32.totalorder %s283, %s284
      %p298 = scmp.eq.s32.totalorder %s36, 1
      %p299 = por %p297, %p298
      %p301 = scmp.ne.s32.totalorder %s284, %s300
      %p302 = scmp.eq.s32.totalorder %s36, 0
      %p303 = por %p301, %p302
      %s304 = ssub.s32 %s30, %s37
      %p305 = scmp.eq.s32.totalorder %s304, 0
      %s307 = sadd.s32 %s306, 1
      %s308 = scalar_select %p305, %s306, %s307
      %p311 = pneg %p305
      %p312 = scmp.eq.s32.totalorder %s30, 1
      %p313 = por %p311, %p312
      %p314 = scmp.ne.s32.totalorder %s306, %s309
      %p315 = scmp.eq.s32.totalorder %s30, 0
      %p316 = por %p314, %p315
      %p317 = scmp.ne.s32.totalorder %s306, %s309
      %p318 = scmp.eq.s32.totalorder %s35, 1
      %p319 = por %p317, %p318
      %p320 = scmp.ne.s32.totalorder %s309, %s310
      %p321 = scmp.eq.s32.totalorder %s35, 0
      %p322 = por %p320, %p321
      %p323 = scmp.ne.s32.totalorder %s309, %s310
      %p324 = scmp.eq.s32.totalorder %s36, 1
      %p325 = por %p323, %p324
      %p327 = scmp.ne.s32.totalorder %s310, %s326
      %p328 = scmp.eq.s32.totalorder %s36, 0
      %p329 = por %p327, %p328
      %s330 = ssub.s32 %s30, %s37
      %p331 = scmp.eq.s32.totalorder %s330, 0
      %s333 = sadd.s32 %s332, 1
      %s334 = scalar_select %p331, %s332, %s333
      %p337 = pneg %p331
      %p338 = scmp.eq.s32.totalorder %s30, 1
      %p339 = por %p337, %p338
      %p340 = scmp.ne.s32.totalorder %s332, %s335
      %p341 = scmp.eq.s32.totalorder %s30, 0
      %p342 = por %p340, %p341
      %p343 = scmp.ne.s32.totalorder %s332, %s335
      %p344 = scmp.eq.s32.totalorder %s35, 1
      %p345 = por %p343, %p344
      %p346 = scmp.ne.s32.totalorder %s335, %s336
      %p347 = scmp.eq.s32.totalorder %s35, 0
      %p348 = por %p346, %p347
      %p349 = scmp.ne.s32.totalorder %s335, %s336
      %p350 = scmp.eq.s32.totalorder %s36, 1
      %p351 = por %p349, %p350
      %p353 = scmp.ne.s32.totalorder %s336, %s352
      %p354 = scmp.eq.s32.totalorder %s36, 0
      %p355 = por %p353, %p354
      %s356 = ssub.s32 %s30, %s37
      %p357 = scmp.eq.s32.totalorder %s356, 0
      %s359 = sadd.s32 %s358, 1
      %s360 = scalar_select %p357, %s358, %s359
      %p363 = pneg %p357
      %p364 = scmp.eq.s32.totalorder %s30, 1
      %p365 = por %p363, %p364
      %p366 = scmp.ne.s32.totalorder %s358, %s361
      %p367 = scmp.eq.s32.totalorder %s30, 0
      %p368 = por %p366, %p367
      %p369 = scmp.ne.s32.totalorder %s358, %s361
      %p370 = scmp.eq.s32.totalorder %s35, 1
      %p371 = por %p369, %p370
      %p372 = scmp.ne.s32.totalorder %s361, %s362
      %p373 = scmp.eq.s32.totalorder %s35, 0
      %p374 = por %p372, %p373
      %p375 = scmp.ne.s32.totalorder %s361, %s362
      %p376 = scmp.eq.s32.totalorder %s36, 1
      %p377 = por %p375, %p376
      %p379 = scmp.ne.s32.totalorder %s362, %s378
      %p380 = scmp.eq.s32.totalorder %s36, 0
      %p381 = por %p379, %p380
      %s382 = ssub.s32 %s30, %s37
      %p383 = scmp.eq.s32.totalorder %s382, 0
      %s385 = sadd.s32 %s384, 1
      %s386 = scalar_select %p383, %s384, %s385
      %p389 = pneg %p383
      %p390 = scmp.eq.s32.totalorder %s30, 1
      %p391 = por %p389, %p390
      %p392 = scmp.ne.s32.totalorder %s384, %s387
      %p393 = scmp.eq.s32.totalorder %s30, 0
      %p394 = por %p392, %p393
      %p395 = scmp.ne.s32.totalorder %s384, %s387
      %p396 = scmp.eq.s32.totalorder %s35, 1
      %p397 = por %p395, %p396
      %p398 = scmp.ne.s32.totalorder %s387, %s388
      %p399 = scmp.eq.s32.totalorder %s35, 0
      %p400 = por %p398, %p399
      %p401 = scmp.ne.s32.totalorder %s387, %s388
      %p402 = scmp.eq.s32.totalorder %s36, 1
      %p403 = por %p401, %p402
      %p405 = scmp.ne.s32.totalorder %s388, %s404
      %p406 = scmp.eq.s32.totalorder %s36, 0
      %p407 = por %p405, %p406
      %s408 = ssub.s32 %s30, %s37
      %p409 = scmp.eq.s32.totalorder %s408, 0
      %s411 = sadd.s32 %s410, 1
      %s412 = scalar_select %p409, %s410, %s411
      %p415 = pneg %p409
      %p416 = scmp.eq.s32.totalorder %s30, 1
      %p417 = por %p415, %p416
      %p418 = scmp.ne.s32.totalorder %s410, %s413
      %p419 = scmp.eq.s32.totalorder %s30, 0
      %p420 = por %p418, %p419
      %p421 = scmp.ne.s32.totalorder %s410, %s413
      %p422 = scmp.eq.s32.totalorder %s35, 1
      %p423 = por %p421, %p422
      %p424 = scmp.ne.s32.totalorder %s413, %s414
      %p425 = scmp.eq.s32.totalorder %s35, 0
      %p426 = por %p424, %p425
      %p427 = scmp.ne.s32.totalorder %s413, %s414
      %p428 = scmp.eq.s32.totalorder %s36, 1
      %p429 = por %p427, %p428
      %p431 = scmp.ne.s32.totalorder %s414, %s430
      %p432 = scmp.eq.s32.totalorder %s36, 0
      %p433 = por %p431, %p432
      %s435 = sadd.s32 %s434, 1
      %p438 = scmp.eq.s32.totalorder %s30, 1
      %p439 = scmp.ne.s32.totalorder %s434, %s436
      %p440 = scmp.eq.s32.totalorder %s30, 0
      %p441 = por %p439, %p440
      %p442 = scmp.ne.s32.totalorder %s434, %s436
      %p443 = scmp.eq.s32.totalorder %s35, 1
      %p444 = por %p442, %p443
      %p445 = scmp.ne.s32.totalorder %s436, %s437
      %p446 = scmp.eq.s32.totalorder %s35, 0
      %p447 = por %p445, %p446
      %p448 = scmp.ne.s32.totalorder %s436, %s437
      %p449 = scmp.eq.s32.totalorder %s36, 1
      %p450 = por %p448, %p449
      %p452 = scmp.ne.s32.totalorder %s437, %s451
      %p453 = scmp.eq.s32.totalorder %s36, 0
      %p454 = por %p452, %p453
      %s456 = sadd.s32 %s455, 1
      %p459 = scmp.eq.s32.totalorder %s30, 1
      %p460 = scmp.ne.s32.totalorder %s455, %s457
      %p461 = scmp.eq.s32.totalorder %s30, 0
      %p462 = por %p460, %p461
      %p463 = scmp.ne.s32.totalorder %s455, %s457
      %p464 = scmp.eq.s32.totalorder %s35, 1
      %p465 = por %p463, %p464
      %p466 = scmp.ne.s32.totalorder %s457, %s458
      %p467 = scmp.eq.s32.totalorder %s35, 0
      %p468 = por %p466, %p467
      %p469 = scmp.ne.s32.totalorder %s457, %s458
      %p470 = scmp.eq.s32.totalorder %s36, 1
      %p471 = por %p469, %p470
      %p473 = scmp.ne.s32.totalorder %s458, %s472
      %p474 = scmp.eq.s32.totalorder %s36, 0
      %p475 = por %p473, %p474
      %s477 = sadd.s32 %s476, 1
      %p480 = scmp.eq.s32.totalorder %s30, 1
      %p481 = scmp.ne.s32.totalorder %s476, %s478
      %p482 = scmp.eq.s32.totalorder %s30, 0
      %p483 = por %p481, %p482
      %p484 = scmp.ne.s32.totalorder %s476, %s478
      %p485 = scmp.eq.s32.totalorder %s35, 1
      %p486 = por %p484, %p485
      %p487 = scmp.ne.s32.totalorder %s478, %s479
      %p488 = scmp.eq.s32.totalorder %s35, 0
      %p489 = por %p487, %p488
      %p490 = scmp.ne.s32.totalorder %s478, %s479
      %p491 = scmp.eq.s32.totalorder %s36, 1
      %p492 = por %p490, %p491
      %p494 = scmp.ne.s32.totalorder %s479, %s493
      %p495 = scmp.eq.s32.totalorder %s36, 0
      %p496 = por %p494, %p495
      %s498 = sadd.s32 %s497, 1
      %p501 = scmp.eq.s32.totalorder %s30, 1
      %p502 = scmp.ne.s32.totalorder %s497, %s499
      %p503 = scmp.eq.s32.totalorder %s30, 0
      %p504 = por %p502, %p503
      %p505 = scmp.ne.s32.totalorder %s497, %s499
      %p506 = scmp.eq.s32.totalorder %s35, 1
      %p507 = por %p505, %p506
      %p508 = scmp.ne.s32.totalorder %s499, %s500
      %p509 = scmp.eq.s32.totalorder %s35, 0
      %p510 = por %p508, %p509
      %p511 = scmp.ne.s32.totalorder %s499, %s500
      %p512 = scmp.eq.s32.totalorder %s36, 1
      %p513 = por %p511, %p512
      %p515 = scmp.ne.s32.totalorder %s500, %s514
      %p516 = scmp.eq.s32.totalorder %s36, 0
      %p517 = por %p515, %p516
      %s519 = sadd.s32 %s518, 1
      %p522 = scmp.eq.s32.totalorder %s30, 1
      %p523 = scmp.ne.s32.totalorder %s518, %s520
      %p524 = scmp.eq.s32.totalorder %s30, 0
      %p525 = por %p523, %p524
      %p526 = scmp.ne.s32.totalorder %s518, %s520
      %p527 = scmp.eq.s32.totalorder %s35, 1
      %p528 = por %p526, %p527
      %p529 = scmp.ne.s32.totalorder %s520, %s521
      %p530 = scmp.eq.s32.totalorder %s35, 0
      %p531 = por %p529, %p530
      %p532 = scmp.ne.s32.totalorder %s520, %s521
      %p533 = scmp.eq.s32.totalorder %s36, 1
      %p534 = por %p532, %p533
      %p536 = scmp.ne.s32.totalorder %s521, %s535
      %p537 = scmp.eq.s32.totalorder %s36, 0
      %p538 = por %p536, %p537
      %p539 = scmp.le.s32.totalorder 1, %s30
      %p540 = scmp.lt.s32.totalorder %s30, 3
      %p541 = pnand %p539, %p540
      %p542 = pneg %p541
      // Predicated region
      $region9: #{bert_base_uncased_forward.1} parent=5 // pred_check
        _
      $region10: #{bert_base_uncased_forward.1} parent=5 // pred_check_branch
        %544 = sbr.rel (%p541) target = $region12
      $region11: #{bert_base_uncased_forward.1} parent=5 // pred_region
        %s545 = ssub.s32 %s30, 1
        // Predicated region
        $region13: #{bert_base_uncased_forward.1} parent=11 // pred_check
          %p546 = pneg %p51
        $region14: #{bert_base_uncased_forward.1} parent=11 // pred_check_branch
          %548 = sbr.rel (%p546) target = $region16
        $region15: #{bert_base_uncased_forward.1} parent=11 // pred_region
          _
        $region16: #{bert_base_uncased_forward.1} parent=11 // pred_fallthru
          _
        // Predicated region
        $region17: #{bert_base_uncased_forward.1} parent=11 // pred_check
          %p549 = pneg %p72
        $region18: #{bert_base_uncased_forward.1} parent=11 // pred_check_branch
          %551 = sbr.rel (%p549) target = $region20
        $region19: #{bert_base_uncased_forward.1} parent=11 // pred_region
          _
        $region20: #{bert_base_uncased_forward.1} parent=11 // pred_fallthru
          _
        // Predicated region
        $region21: #{bert_base_uncased_forward.1} parent=11 // pred_check
          %p552 = pneg %p93
        $region22: #{bert_base_uncased_forward.1} parent=11 // pred_check_branch
          %554 = sbr.rel (%p552) target = $region24
        $region23: #{bert_base_uncased_forward.1} parent=11 // pred_region
          %s556 = ssub.s32 16, 16
          %557 = vsyncadd [#allocation5], %s556
          %s559 = sshll.u32 [#allocation4], 4
          %s560 = int_to_ptr.vmem [resolvable:$true] %s559
          %562 = dma.hbm_to_vmem [thread:$0]  %s2, 16, %s560, [#allocation5]
        $region24: #{bert_base_uncased_forward.1} parent=11 // pred_fallthru
          _
        // Predicated region
        $region25: #{bert_base_uncased_forward.1} parent=11 // pred_check
          %p563 = pneg %p114
        $region26: #{bert_base_uncased_forward.1} parent=11 // pred_check_branch
          %565 = sbr.rel (%p563) target = $region28
        $region27: #{bert_base_uncased_forward.1} parent=11 // pred_region
          %s567 = ssub.s32 16, 16
          %568 = vsyncadd [#allocation7], %s567
          %s570 = sshll.u32 [#allocation6], 4
          %s571 = int_to_ptr.vmem [resolvable:$true] %s570
          %573 = dma.hbm_to_vmem [thread:$0]  %s3, 16, %s571, [#allocation7]
        $region28: #{bert_base_uncased_forward.1} parent=11 // pred_fallthru
          _
        // Predicated region
        $region29: #{bert_base_uncased_forward.1} parent=11 // pred_check
          %p574 = pneg %p447
        $region30: #{bert_base_uncased_forward.1} parent=11 // pred_check_branch
          %576 = sbr.rel (%p574) target = $region32
        $region31: #{bert_base_uncased_forward.1} parent=11 // pred_region
          %s578 = ssub.s32 1024, 1024
          %579 = vsyncadd [#allocation7], %s578
          %s580 = sshll.u32 [#allocation10], 4
          %s581 = int_to_ptr.vmem [resolvable:$true] %s580
          %586 = dma.hbm_to_vmem [thread:$0]  %s16, 1024, %s581, [#allocation7], 64, 64, 4
        $region32: #{bert_base_uncased_forward.1} parent=11 // pred_fallthru
          _
        // Predicated region
        $region33: #{bert_base_uncased_forward.1} parent=11 // pred_check
          %p587 = pneg %p468
        $region34: #{bert_base_uncased_forward.1} parent=11 // pred_check_branch
          %589 = sbr.rel (%p587) target = $region36
        $region35: #{bert_base_uncased_forward.1} parent=11 // pred_region
          _
        $region36: #{bert_base_uncased_forward.1} parent=11 // pred_fallthru
          _
        // Predicated region
        $region37: #{bert_base_uncased_forward.1} parent=11 // pred_check
          %p590 = pneg %p489
        $region38: #{bert_base_uncased_forward.1} parent=11 // pred_check_branch
          %592 = sbr.rel (%p590) target = $region40
        $region39: #{bert_base_uncased_forward.1} parent=11 // pred_region
          _
        $region40: #{bert_base_uncased_forward.1} parent=11 // pred_fallthru
          _
        // Predicated region
        $region41: #{bert_base_uncased_forward.1} parent=11 // pred_check
          %p593 = pneg %p510
        $region42: #{bert_base_uncased_forward.1} parent=11 // pred_check_branch
          %595 = sbr.rel (%p593) target = $region44
        $region43: #{bert_base_uncased_forward.1} parent=11 // pred_region
          _
        $region44: #{bert_base_uncased_forward.1} parent=11 // pred_fallthru
          _
      $region12: #{bert_base_uncased_forward.1} parent=5 // pred_fallthru
        _
      %p596 = scmp.lt.s32.totalorder %s30, 2
      // Predicated region
      $region45: #{bert_base_uncased_forward.1} parent=5 // pred_check
        %p597 = pneg %p596
      $region46: #{bert_base_uncased_forward.1} parent=5 // pred_check_branch
        %599 = sbr.rel (%p597) target = $region48
      $region47: #{bert_base_uncased_forward.1} parent=5 // pred_region
        // Predicated region
        $region49: #{bert_base_uncased_forward.1} parent=47 // pred_check
          %p600 = pneg %p134
        $region50: #{bert_base_uncased_forward.1} parent=47 // pred_check_branch
          %602 = sbr.rel (%p600) target = $region52
        $region51: #{bert_base_uncased_forward.1} parent=47 // pred_region
          %s603 = sand.u32 %s30, 1
          %s604 = scalar_lea.sflag [#allocation5], %s603
          %s605 = sand.u32 %s124, 1
          %s606 = smul.addr %s605, 192
          %s607 = scalar_lea.vmem [#allocation8], %s606
          %s609 = ssub.s32 3072, 3072
          %610 = vsyncadd %s604, %s609
          %s611 = smul.addr %s30, 48
          %s612 = smul.addr %s611, 64
          %s613 = scalar_lea.hbm %s4, %s612
          %s614 = sshll.u32 %s607, 4
          %s615 = int_to_ptr.vmem [resolvable:$true] %s614
          %620 = dma.hbm_to_vmem [thread:$0]  %s613, 3072, %s615, %s604, 192, 192, 12
        $region52: #{bert_base_uncased_forward.1} parent=47 // pred_fallthru
          _
        // Predicated region
        $region53: #{bert_base_uncased_forward.1} parent=47 // pred_check
          %p621 = pneg %p160
        $region54: #{bert_base_uncased_forward.1} parent=47 // pred_check_branch
          %623 = sbr.rel (%p621) target = $region56
        $region55: #{bert_base_uncased_forward.1} parent=47 // pred_region
          %p624 = scmp.lt.s32.totalorder %s30, 1
          %s625 = scalar_select %p624, %s30, 1
          %s626 = smul.addr %s625, 3
          %s627 = scalar_lea.vmem %s5, %s626
        $region56: #{bert_base_uncased_forward.1} parent=47 // pred_fallthru
          _
        // Predicated region
        $region57: #{bert_base_uncased_forward.1} parent=47 // pred_check
          %p628 = pneg %p186
        $region58: #{bert_base_uncased_forward.1} parent=47 // pred_check_branch
          %630 = sbr.rel (%p628) target = $region60
        $region59: #{bert_base_uncased_forward.1} parent=47 // pred_region
          %s631 = sand.u32 %s30, 1
          %s632 = scalar_lea.sflag [#allocation5], %s631
          %s633 = sand.u32 %s176, 1
          %s634 = smul.addr %s633, 64
          %s635 = scalar_lea.vmem [#allocation9], %s634
          %s637 = ssub.s32 1024, 1024
          %638 = vsyncadd %s632, %s637
          %s639 = smul.addr %s30, 16
          %s640 = smul.addr %s639, 64
          %s641 = scalar_lea.hbm %s6, %s640
          %s642 = sshll.u32 %s635, 4
          %s643 = int_to_ptr.vmem [resolvable:$true] %s642
          %648 = dma.hbm_to_vmem [thread:$0]  %s641, 1024, %s643, %s632, 64, 64, 4
        $region60: #{bert_base_uncased_forward.1} parent=47 // pred_fallthru
          _
        // Predicated region
        $region61: #{bert_base_uncased_forward.1} parent=47 // pred_check
          %p649 = pneg %p212
        $region62: #{bert_base_uncased_forward.1} parent=47 // pred_check_branch
          %651 = sbr.rel (%p649) target = $region64
        $region63: #{bert_base_uncased_forward.1} parent=47 // pred_region
          %p652 = scmp.lt.s32.totalorder %s30, 1
          %s653 = scalar_select %p652, %s30, 1
          %s654 = scalar_lea.vmem %s7, %s653
        $region64: #{bert_base_uncased_forward.1} parent=47 // pred_fallthru
          _
        // Predicated region
        $region65: #{bert_base_uncased_forward.1} parent=47 // pred_check
          %p655 = pneg %p238
        $region66: #{bert_base_uncased_forward.1} parent=47 // pred_check_branch
          %657 = sbr.rel (%p655) target = $region68
        $region67: #{bert_base_uncased_forward.1} parent=47 // pred_region
          %p658 = scmp.lt.s32.totalorder %s30, 1
          %s659 = scalar_select %p658, %s30, 1
          %s660 = scalar_lea.vmem %s8, %s659
        $region68: #{bert_base_uncased_forward.1} parent=47 // pred_fallthru
          _
        // Predicated region
        $region69: #{bert_base_uncased_forward.1} parent=47 // pred_check
          %p661 = pneg %p264
        $region70: #{bert_base_uncased_forward.1} parent=47 // pred_check_branch
          %663 = sbr.rel (%p661) target = $region72
        $region71: #{bert_base_uncased_forward.1} parent=47 // pred_region
          %p664 = scmp.lt.s32.totalorder %s30, 1
          %s665 = scalar_select %p664, %s30, 1
          %s666 = scalar_lea.vmem %s9, %s665
        $region72: #{bert_base_uncased_forward.1} parent=47 // pred_fallthru
          _
        // Predicated region
        $region73: #{bert_base_uncased_forward.1} parent=47 // pred_check
          %p667 = pneg %p290
        $region74: #{bert_base_uncased_forward.1} parent=47 // pred_check_branch
          %669 = sbr.rel (%p667) target = $region76
        $region75: #{bert_base_uncased_forward.1} parent=47 // pred_region
          %p670 = scmp.lt.s32.totalorder %s30, 1
          %s671 = scalar_select %p670, %s30, 1
          %s672 = smul.addr %s671, 64
          %s673 = smul.addr %s672, 4
          %s674 = scalar_lea.vmem %s10, %s673
        $region76: #{bert_base_uncased_forward.1} parent=47 // pred_fallthru
          _
        // Predicated region
        $region77: #{bert_base_uncased_forward.1} parent=47 // pred_check
          %p675 = pneg %p316
        $region78: #{bert_base_uncased_forward.1} parent=47 // pred_check_branch
          %677 = sbr.rel (%p675) target = $region80
        $region79: #{bert_base_uncased_forward.1} parent=47 // pred_region
          %p678 = scmp.lt.s32.totalorder %s30, 1
          %s679 = scalar_select %p678, %s30, 1
          %s680 = smul.addr %s679, 4
          %s681 = scalar_lea.vmem %s11, %s680
        $region80: #{bert_base_uncased_forward.1} parent=47 // pred_fallthru
          _
        // Predicated region
        $region81: #{bert_base_uncased_forward.1} parent=47 // pred_check
          %p682 = pneg %p342
        $region82: #{bert_base_uncased_forward.1} parent=47 // pred_check_branch
          %684 = sbr.rel (%p682) target = $region84
        $region83: #{bert_base_uncased_forward.1} parent=47 // pred_region
          %p685 = scmp.lt.s32.totalorder %s30, 1
          %s686 = scalar_select %p685, %s30, 1
          %s687 = smul.addr %s686, 64
          %s688 = smul.addr %s687, 4
          %s689 = scalar_lea.vmem %s12, %s688
        $region84: #{bert_base_uncased_forward.1} parent=47 // pred_fallthru
          _
        // Predicated region
        $region85: #{bert_base_uncased_forward.1} parent=47 // pred_check
          %p690 = pneg %p368
        $region86: #{bert_base_uncased_forward.1} parent=47 // pred_check_branch
          %692 = sbr.rel (%p690) target = $region88
        $region87: #{bert_base_uncased_forward.1} parent=47 // pred_region
          %p693 = scmp.lt.s32.totalorder %s30, 1
          %s694 = scalar_select %p693, %s30, 1
          %s695 = scalar_lea.vmem %s13, %s694
        $region88: #{bert_base_uncased_forward.1} parent=47 // pred_fallthru
          _
        // Predicated region
        $region89: #{bert_base_uncased_forward.1} parent=47 // pred_check
          %p696 = pneg %p394
        $region90: #{bert_base_uncased_forward.1} parent=47 // pred_check_branch
          %698 = sbr.rel (%p696) target = $region92
        $region91: #{bert_base_uncased_forward.1} parent=47 // pred_region
          %p699 = scmp.lt.s32.totalorder %s30, 1
          %s700 = scalar_select %p699, %s30, 1
          %s701 = scalar_lea.vmem %s14, %s700
        $region92: #{bert_base_uncased_forward.1} parent=47 // pred_fallthru
          _
        // Predicated region
        $region93: #{bert_base_uncased_forward.1} parent=47 // pred_check
          %p702 = pneg %p420
        $region94: #{bert_base_uncased_forward.1} parent=47 // pred_check_branch
          %704 = sbr.rel (%p702) target = $region96
        $region95: #{bert_base_uncased_forward.1} parent=47 // pred_region
          %p705 = scmp.lt.s32.totalorder %s30, 1
          %s706 = scalar_select %p705, %s30, 1
          %s707 = scalar_lea.vmem %s15, %s706
        $region96: #{bert_base_uncased_forward.1} parent=47 // pred_fallthru
          _
      $region48: #{bert_base_uncased_forward.1} parent=5 // pred_fallthru
        _
      %p708 = scmp.le.s32.totalorder 1, %s30
      %p709 = scmp.lt.s32.totalorder %s30, 3
      %p710 = pnand %p708, %p709
      %p711 = pneg %p710
      // Predicated region
      $region97: #{bert_base_uncased_forward.1} parent=5 // pred_check
        _
      $region98: #{bert_base_uncased_forward.1} parent=5 // pred_check_branch
        %713 = sbr.rel (%p710) target = $region100
      $region99: #{bert_base_uncased_forward.1} parent=5 // pred_region
        %s714 = ssub.s32 %s30, 1
        // Predicated region
        $region101: #{bert_base_uncased_forward.1} parent=99 // pred_check
          %p715 = pneg %p93
        $region102: #{bert_base_uncased_forward.1} parent=99 // pred_check_branch
          %717 = sbr.rel (%p715) target = $region104
        $region103: #{bert_base_uncased_forward.1} parent=99 // pred_region
          %718 = dma.done [#allocation5], 16
        $region104: #{bert_base_uncased_forward.1} parent=99 // pred_fallthru
          _
        // Predicated region
        $region105: #{bert_base_uncased_forward.1} parent=99 // pred_check
          %p719 = pneg %p114
        $region106: #{bert_base_uncased_forward.1} parent=99 // pred_check_branch
          %721 = sbr.rel (%p719) target = $region108
        $region107: #{bert_base_uncased_forward.1} parent=99 // pred_region
          %722 = dma.done [#allocation7], 16
        $region108: #{bert_base_uncased_forward.1} parent=99 // pred_fallthru
          _
        %s723 = sand.u32 %s35, 1
        %s724 = scalar_lea.sflag [#allocation5], %s723
        %s725 = sand.u32 %s127, 1
        %s726 = smul.addr %s725, 192
        %s727 = scalar_lea.vmem [#allocation8], %s726
        // Predicated region
        $region109: #{bert_base_uncased_forward.1} parent=99 // pred_check
          %p728 = pneg %p140
        $region110: #{bert_base_uncased_forward.1} parent=99 // pred_check_branch
          %730 = sbr.rel (%p728) target = $region112
        $region111: #{bert_base_uncased_forward.1} parent=99 // pred_region
          %731 = dma.done %s724, 3072
        $region112: #{bert_base_uncased_forward.1} parent=99 // pred_fallthru
          _
        %s732 = sand.u32 %s35, 1
        %s733 = scalar_lea.sflag [#allocation5], %s732
        %s734 = sand.u32 %s179, 1
        %s735 = smul.addr %s734, 64
        %s736 = scalar_lea.vmem [#allocation9], %s735
        // Predicated region
        $region113: #{bert_base_uncased_forward.1} parent=99 // pred_check
          %p737 = pneg %p192
        $region114: #{bert_base_uncased_forward.1} parent=99 // pred_check_branch
          %739 = sbr.rel (%p737) target = $region116
        $region115: #{bert_base_uncased_forward.1} parent=99 // pred_region
          %740 = dma.done %s733, 1024
        $region116: #{bert_base_uncased_forward.1} parent=99 // pred_fallthru
          _
        // Predicated region
        $region117: #{bert_base_uncased_forward.1} parent=99 // pred_check
          %p741 = pneg %p447
        $region118: #{bert_base_uncased_forward.1} parent=99 // pred_check_branch
          %743 = sbr.rel (%p741) target = $region120
        $region119: #{bert_base_uncased_forward.1} parent=99 // pred_region
          %744 = dma.done [#allocation7], 1024
        $region120: #{bert_base_uncased_forward.1} parent=99 // pred_fallthru
          _
        %p745 = pneg %p51
        %p746 = pneg %p48
        %p747 = pneg %p72
        %p748 = pneg %p69
        %p749 = pneg %p93
        %p750 = pneg %p90
        %p751 = pneg %p114
        %p752 = pneg %p111
        %s753 = sand.u32 %s35, 1
        %s754 = scalar_lea.sflag [#allocation5], %s753
        %s755 = sand.u32 %s127, 1
        %s756 = smul.addr %s755, 192
        %s757 = scalar_lea.vmem [#allocation8], %s756
        %p758 = pneg %p140
        %p759 = pneg %p137
        %p760 = scmp.lt.s32.totalorder %s35, 1
        %s761 = scalar_select %p760, %s35, 1
        %s762 = smul.addr %s761, 3
        %s763 = scalar_lea.vmem %s5, %s762
        %p764 = pneg %p166
        %p765 = pneg %p163
        %s766 = sand.u32 %s35, 1
        %s767 = scalar_lea.sflag [#allocation5], %s766
        %s768 = sand.u32 %s179, 1
        %s769 = smul.addr %s768, 64
        %s770 = scalar_lea.vmem [#allocation9], %s769
        %p771 = pneg %p192
        %p772 = pneg %p189
        %p773 = scmp.lt.s32.totalorder %s35, 1
        %s774 = scalar_select %p773, %s35, 1
        %s775 = scalar_lea.vmem %s7, %s774
        %p776 = pneg %p218
        %p777 = pneg %p215
        %p778 = scmp.lt.s32.totalorder %s35, 1
        %s779 = scalar_select %p778, %s35, 1
        %s780 = scalar_lea.vmem %s8, %s779
        %p781 = pneg %p244
        %p782 = pneg %p241
        %p783 = scmp.lt.s32.totalorder %s35, 1
        %s784 = scalar_select %p783, %s35, 1
        %s785 = scalar_lea.vmem %s9, %s784
        %p786 = pneg %p270
        %p787 = pneg %p267
        %p788 = scmp.lt.s32.totalorder %s35, 1
        %s789 = scalar_select %p788, %s35, 1
        %s790 = smul.addr %s789, 64
        %s791 = smul.addr %s790, 4
        %s792 = scalar_lea.vmem %s10, %s791
        %p793 = pneg %p296
        %p794 = pneg %p293
        %p795 = scmp.lt.s32.totalorder %s35, 1
        %s796 = scalar_select %p795, %s35, 1
        %s797 = smul.addr %s796, 4
        %s798 = scalar_lea.vmem %s11, %s797
        %p799 = pneg %p322
        %p800 = pneg %p319
        %p801 = scmp.lt.s32.totalorder %s35, 1
        %s802 = scalar_select %p801, %s35, 1
        %s803 = smul.addr %s802, 64
        %s804 = smul.addr %s803, 4
        %s805 = scalar_lea.vmem %s12, %s804
        %p806 = pneg %p348
        %p807 = pneg %p345
        %p808 = scmp.lt.s32.totalorder %s35, 1
        %s809 = scalar_select %p808, %s35, 1
        %s810 = scalar_lea.vmem %s13, %s809
        %p811 = pneg %p374
        %p812 = pneg %p371
        %p813 = scmp.lt.s32.totalorder %s35, 1
        %s814 = scalar_select %p813, %s35, 1
        %s815 = scalar_lea.vmem %s14, %s814
        %p816 = pneg %p400
        %p817 = pneg %p397
        %p818 = scmp.lt.s32.totalorder %s35, 1
        %s819 = scalar_select %p818, %s35, 1
        %s820 = scalar_lea.vmem %s15, %s819
        %p821 = pneg %p426
        %p822 = pneg %p423
        %p823 = pneg %p447
        %p824 = pneg %p444
        %p825 = pneg %p468
        %p826 = pneg %p465
        %p827 = pneg %p489
        %p828 = pneg %p486
        %p829 = pneg %p510
        %p830 = pneg %p507
        %p831 = pneg %p531
        %p832 = pneg %p528
        %p833 = scmp.lt.s32.totalorder %s35, 1
        %s834 = scalar_select %p833, %s35, 1
        %s835 = smul.addr %s834, 3
        %s836 = scalar_lea.vmem %s5, %s835
        %p837 = scmp.lt.s32.totalorder %s35, 1
        %s838 = scalar_select %p837, %s35, 1
        %s839 = scalar_lea.vmem %s7, %s838
        %p840 = scmp.lt.s32.totalorder %s35, 1
        %s841 = scalar_select %p840, %s35, 1
        %s842 = scalar_lea.vmem %s8, %s841
        %p843 = scmp.lt.s32.totalorder %s35, 1
        %s844 = scalar_select %p843, %s35, 1
        %s845 = scalar_lea.vmem %s9, %s844
        %p846 = scmp.lt.s32.totalorder %s35, 1
        %s847 = scalar_select %p846, %s35, 1
        %s848 = smul.addr %s847, 64
        %s849 = smul.addr %s848, 4
        %s850 = scalar_lea.vmem %s10, %s849
        %p851 = scmp.lt.s32.totalorder %s35, 1
        %s852 = scalar_select %p851, %s35, 1
        %s853 = smul.addr %s852, 4
        %s854 = scalar_lea.vmem %s11, %s853
        %p855 = scmp.lt.s32.totalorder %s35, 1
        %s856 = scalar_select %p855, %s35, 1
        %s857 = smul.addr %s856, 64
        %s858 = smul.addr %s857, 4
        %s859 = scalar_lea.vmem %s12, %s858
        %p860 = scmp.lt.s32.totalorder %s35, 1
        %s861 = scalar_select %p860, %s35, 1
        %s862 = scalar_lea.vmem %s13, %s861
        %p863 = scmp.lt.s32.totalorder %s35, 1
        %s864 = scalar_select %p863, %s35, 1
        %s865 = scalar_lea.vmem %s14, %s864
        %p866 = scmp.lt.s32.totalorder %s35, 1
        %s867 = scalar_select %p866, %s35, 1
        %s868 = scalar_lea.vmem %s15, %s867
        %p870 = scmp.eq.s32.totalorder %s35, 0
        // Predicated region
        $region121: #{bert_base_uncased_forward.1} parent=99 // pred_check
          %p871 = pneg %p870
        $region122: #{bert_base_uncased_forward.1} parent=99 // pred_check_branch
          %873 = sbr.rel (%p871) target = $region124
        $region123: #{bert_base_uncased_forward.1} parent=99 // pred_region
          %v874 = vld [vmem:[%s0] sm:$0xff]
          %v875 = vld [vmem:[%s0 + $0x8] sm:$0xff]
          %v876 = vld [vmem:[%s0 + $0x10] sm:$0xff]
          %v877 = vld [vmem:[%s0 + $0x18] sm:$0xff]
          %v878 = vld [vmem:[#allocation4] sm:$0x1]
          %v879 = vld [vmem:[#allocation6] sm:$0x1]
          %880 = vadd.xlane.f32.xlu0 %v874
          %v881 = vpop.xlane.xlu0 %880
          %882 = vadd.xlane.f32.xlu0 %v875
          %v883 = vpop.xlane.xlu0 %882
          %884 = vadd.xlane.f32.xlu0 %v876
          %v885 = vpop.xlane.xlu0 %884
          %886 = vadd.xlane.f32.xlu0 %v877
          %v887 = vpop.xlane.xlu0 %886
          %v888 = vrcp.pop 128.0
          %v889 = vmul.f32 %v881, %v888
          %v890 = vmul.f32 %v883, %v888
          %v891 = vmul.f32 %v885, %v888
          %v892 = vmul.f32 %v887, %v888
          %v893 = vsub.f32 %v874, %v889
          %v894 = vsub.f32 %v875, %v890
          %v895 = vsub.f32 %v876, %v891
          %v896 = vsub.f32 %v877, %v892
          %v897 = vmul.f32 %v893, %v893
          %v898 = vmul.f32 %v894, %v894
          %v899 = vmul.f32 %v895, %v895
          %v900 = vmul.f32 %v896, %v896
          %901 = vadd.xlane.f32.xlu0 %v897
          %v902 = vpop.xlane.xlu0 %901
          %903 = vadd.xlane.f32.xlu0 %v898
          %v904 = vpop.xlane.xlu0 %903
          %905 = vadd.xlane.f32.xlu0 %v899
          %v906 = vpop.xlane.xlu0 %905
          %907 = vadd.xlane.f32.xlu0 %v900
          %v908 = vpop.xlane.xlu0 %907
          %v909 = vmul.f32 %v902, %v888
          %v910 = vmul.f32 %v904, %v888
          %v911 = vmul.f32 %v906, %v888
          %v912 = vmul.f32 %v908, %v888
          %v913 = vadd.f32 %v909, 1e-12
          %v914 = vadd.f32 %v910, 1e-12
          %v915 = vadd.f32 %v911, 1e-12
          %v916 = vadd.f32 %v912, 1e-12
          %v917 = vrsqrt.pop %v913
          %v918 = vrsqrt.pop %v914
          %v919 = vrsqrt.pop %v915
          %v920 = vrsqrt.pop %v916
          %v921 = vmul.f32 %v893, %v917
          %v922 = vmul.f32 %v894, %v918
          %v923 = vmul.f32 %v895, %v919
          %v924 = vmul.f32 %v896, %v920
          %v926 = vlaneseq
          %v927 = vshrl.u32 %v926, 7
          %v928 = vsub.s32 0, %v927
          %v929 = vrot.slane %v878, %v928
          %v931 = vmul.f32 %v921, %v929
          %v932 = vmul.f32 %v922, %v929
          %v933 = vmul.f32 %v923, %v929
          %v934 = vmul.f32 %v924, %v929
          %v936 = vlaneseq
          %v937 = vshrl.u32 %v936, 7
          %v938 = vsub.s32 0, %v937
          %v939 = vrot.slane %v879, %v938
          %v941 = vadd.f32 %v931, %v939
          %v942 = vadd.f32 %v932, %v939
          %v943 = vadd.f32 %v933, %v939
          %v944 = vadd.f32 %v934, %v939
          %945 = vst [vmem:[#allocation2] sm:$0xff] %v941
          %946 = vst [vmem:[#allocation2 + $0x8] sm:$0xff] %v942
          %947 = vst [vmem:[#allocation2 + $0x10] sm:$0xff] %v943
          %948 = vst [vmem:[#allocation2 + $0x18] sm:$0xff] %v944
        $region124: #{bert_base_uncased_forward.1} parent=99 // pred_fallthru
          _
        %v949 = vld [vmem:[#allocation2] sm:$0xff]
        %v950 = vld [vmem:[#allocation2 + $0x8] sm:$0xff]
        %v951 = vld [vmem:[#allocation2 + $0x10] sm:$0xff]
        %v952 = vld [vmem:[#allocation2 + $0x18] sm:$0xff]
        %v953 = vpack.c.bf16 %v950, %v949
        %v954 = vpack.c.bf16 %v952, %v951
        %v955 = vld [vmem:[%s727] sm:$0xff]
        %v956 = vld [vmem:[%s727 + $0x8] sm:$0xf]
        %v957 = vld [vmem:[%s727 + $0xc] sm:$0xff]
        %v958 = vld [vmem:[%s727 + $0x14] sm:$0xf]
        %v959 = vld [vmem:[%s727 + $0x18] sm:$0xff]
        %v960 = vld [vmem:[%s727 + $0x20] sm:$0xf]
        %v961 = vld [vmem:[%s727 + $0x24] sm:$0xff]
        %v962 = vld [vmem:[%s727 + $0x2c] sm:$0xf]
        %v963 = vld [vmem:[%s727 + $0x30] sm:$0xff]
        %v964 = vld [vmem:[%s727 + $0x38] sm:$0xf]
        %v965 = vld [vmem:[%s727 + $0x3c] sm:$0xff]
        %v966 = vld [vmem:[%s727 + $0x44] sm:$0xf]
        %v967 = vld [vmem:[%s727 + $0x48] sm:$0xff]
        %v968 = vld [vmem:[%s727 + $0x50] sm:$0xf]
        %v969 = vld [vmem:[%s727 + $0x54] sm:$0xff]
        %v970 = vld [vmem:[%s727 + $0x5c] sm:$0xf]
        %v971 = vld [vmem:[%s727 + $0x60] sm:$0xff]
        %v972 = vld [vmem:[%s727 + $0x68] sm:$0xf]
        %v973 = vld [vmem:[%s727 + $0x6c] sm:$0xff]
        %v974 = vld [vmem:[%s727 + $0x74] sm:$0xf]
        %v975 = vld [vmem:[%s727 + $0x78] sm:$0xff]
        %v976 = vld [vmem:[%s727 + $0x80] sm:$0xf]
        %v977 = vld [vmem:[%s727 + $0x84] sm:$0xff]
        %v978 = vld [vmem:[%s727 + $0x8c] sm:$0xf]
        %v979 = vld [vmem:[%s727 + $0x90] sm:$0xff]
        %v980 = vld [vmem:[%s727 + $0x98] sm:$0xf]
        %v981 = vld [vmem:[%s727 + $0x9c] sm:$0xff]
        %v982 = vld [vmem:[%s727 + $0xa4] sm:$0xf]
        %v983 = vld [vmem:[%s727 + $0xa8] sm:$0xff]
        %v984 = vld [vmem:[%s727 + $0xb0] sm:$0xf]
        %v985 = vld [vmem:[%s727 + $0xb4] sm:$0xff]
        %v986 = vld [vmem:[%s727 + $0xbc] sm:$0xf]
        %v987 = vld [vmem:[%s836] sm:$0x7]
        %v989 = vlaneseq
        %v990 = vshrl.u32 %v989, 7
        %v991 = vsub.s32 0, %v990
        %v992 = vrot.slane %v987, %v991
        %v993 = vlaneseq
        %v994 = vshrl.u32 %v993, 7
        %v995 = vsub.s32 1, %v994
        %v996 = vrot.slane %v987, %v995
        %v997 = vlaneseq
        %v998 = vshrl.u32 %v997, 7
        %v999 = vsub.s32 2, %v998
        %v1000 = vrot.slane %v987, %v999
        %v1036 = vunpack.c.l.b16 %v955
        %v1037 = vunpack.c.h.b16 %v955
        %v1038 = vunpack.c.l.b16 %v956
        %v1039 = vunpack.c.l.b16 %v957
        %v1040 = vunpack.c.h.b16 %v957
        %v1041 = vunpack.c.l.b16 %v958
        %v1042 = vunpack.c.l.b16 %v959
        %v1043 = vunpack.c.h.b16 %v959
        %v1044 = vunpack.c.l.b16 %v960
        %v1045 = vunpack.c.l.b16 %v961
        %v1046 = vunpack.c.h.b16 %v961
        %v1047 = vunpack.c.l.b16 %v962
        %v1048 = vunpack.c.l.b16 %v963
        %v1049 = vunpack.c.h.b16 %v963
        %v1050 = vunpack.c.l.b16 %v964
        %v1051 = vunpack.c.l.b16 %v965
        %v1052 = vunpack.c.h.b16 %v965
        %v1053 = vunpack.c.l.b16 %v966
        %v1054 = vunpack.c.l.b16 %v967
        %v1055 = vunpack.c.h.b16 %v967
        %v1056 = vunpack.c.l.b16 %v968
        %v1057 = vunpack.c.l.b16 %v969
        %v1058 = vunpack.c.h.b16 %v969
        %v1059 = vunpack.c.l.b16 %v970
        %v1060 = vunpack.c.l.b16 %v971
        %v1061 = vunpack.c.h.b16 %v971
        %v1062 = vunpack.c.l.b16 %v972
        %v1063 = vunpack.c.l.b16 %v973
        %v1064 = vunpack.c.h.b16 %v973
        %v1065 = vunpack.c.l.b16 %v974
        %v1066 = vunpack.c.l.b16 %v975
        %v1067 = vunpack.c.h.b16 %v975
        %v1068 = vunpack.c.l.b16 %v976
        %v1069 = vunpack.c.l.b16 %v977
        %v1070 = vunpack.c.h.b16 %v977
        %v1071 = vunpack.c.l.b16 %v978
        %v1072 = vunpack.c.l.b16 %v979
        %v1073 = vunpack.c.h.b16 %v979
        %v1074 = vunpack.c.l.b16 %v980
        %v1075 = vunpack.c.l.b16 %v981
        %v1076 = vunpack.c.h.b16 %v981
        %v1077 = vunpack.c.l.b16 %v982
        %v1078 = vunpack.c.l.b16 %v983
        %v1079 = vunpack.c.h.b16 %v983
        %v1080 = vunpack.c.l.b16 %v984
        %v1081 = vunpack.c.l.b16 %v985
        %v1082 = vunpack.c.h.b16 %v985
        %v1083 = vunpack.c.l.b16 %v986
        %v1084 = vpack.c.b16 %v1039, %v1036
        %v1085 = vpack.c.b16 %v1040, %v1037
        %v1086 = vpack.c.b16 %v1041, %v1038
        %v1087 = vpack.c.b16 %v1045, %v1042
        %v1088 = vpack.c.b16 %v1046, %v1043
        %v1089 = vpack.c.b16 %v1047, %v1044
        %v1090 = vpack.c.b16 %v1051, %v1048
        %v1091 = vpack.c.b16 %v1052, %v1049
        %v1092 = vpack.c.b16 %v1053, %v1050
        %v1093 = vpack.c.b16 %v1057, %v1054
        %v1094 = vpack.c.b16 %v1058, %v1055
        %v1095 = vpack.c.b16 %v1059, %v1056
        %v1096 = vpack.c.b16 %v1063, %v1060
        %v1097 = vpack.c.b16 %v1064, %v1061
        %v1098 = vpack.c.b16 %v1065, %v1062
        %v1099 = vpack.c.b16 %v1069, %v1066
        %v1100 = vpack.c.b16 %v1070, %v1067
        %v1101 = vpack.c.b16 %v1071, %v1068
        %v1102 = vpack.c.b16 %v1075, %v1072
        %v1103 = vpack.c.b16 %v1076, %v1073
        %v1104 = vpack.c.b16 %v1077, %v1074
        %v1105 = vpack.c.b16 %v1081, %v1078
        %v1106 = vpack.c.b16 %v1082, %v1079
        %v1107 = vpack.c.b16 %v1083, %v1080
        %1132 = vmatprep.subr.bf16.mxu0 %v1085
        %1133 = vmatpush1.bf16.msra.mxu0 %v1084
        %1134 = vmatprep.subr.bf16.mxu0 %v1088
        %1135 = vmatpush1.bf16.msra.mxu0 %v1087
        %1136 = vmatprep.subr.bf16.mxu0 %v1091
        %1137 = vmatpush1.bf16.msra.mxu0 %v1090
        %1138 = vmatprep.subr.bf16.mxu0 %v1094
        %1139 = vmatpush1.bf16.msra.mxu0 %v1093
        %1140 = vmatprep.subr.bf16.mxu0 %v1097
        %1141 = vmatpush1.bf16.msra.mxu0 %v1096
        %1142 = vmatprep.subr.bf16.mxu0 %v1100
        %1143 = vmatpush1.bf16.msra.mxu0 %v1099
        %1144 = vmatprep.subr.bf16.mxu0 %v1103
        %1145 = vmatpush1.bf16.msra.mxu0 %v1102
        %1146 = vmatprep.subr.bf16.mxu0 %v1106
        %1147 = vmatpush1.bf16.msra.mxu0 %v1105
        %1148 = vmatprep.subr.bf16.mxu0 0
        %1149 = vmatpush1.bf16.msra.mxu0 0
        %1150 = vmatprep.subr.bf16.mxu0 0
        %1151 = vmatpush1.bf16.msra.mxu0 0
        %1152 = vmatprep.subr.bf16.mxu0 0
        %1153 = vmatpush1.bf16.msra.mxu0 0
        %1154 = vmatprep.subr.bf16.mxu0 0
        %1155 = vmatpush1.bf16.msra.mxu0 0
        %1156 = vmatprep.subr.bf16.mxu0 0
        %1157 = vmatpush1.bf16.msra.mxu0 0
        %1158 = vmatprep.subr.bf16.mxu0 0
        %1159 = vmatpush1.bf16.msra.mxu0 0
        %1160 = vmatprep.subr.bf16.mxu0 0
        %1161 = vmatpush1.bf16.msra.mxu0 0
        %1162 = vmatprep.subr.bf16.mxu0 0
        %1163 = vmatpush1.bf16.msra.mxu0 0
        %1164 = vmatprep.mubr.bf16.mxu0 0
        %1165 = vmatmul.mubr.bf16.gmra.mrb[0].mxu0 %v953
        %v1166 = vpop.f32.mrb[0].mxu0
        %v1167 = vadd.f32 %v992, %v1166
        %v1168 = vpop.f32.mrb[0].mxu0
        %v1169 = vadd.f32 %v996, %v1168
        %v1170 = vpop.f32.mrb[0].mxu0
        %v1171 = vadd.f32 %v992, %v1170
        %v1172 = vpop.f32.mrb[0].mxu0
        %v1173 = vadd.f32 %v996, %v1172
        %1174 = vmatprep.mubr.bf16.mxu0 0
        %1175 = vmatmul.mubr.bf16.gmra.mrb[0].mxu0 %v954
        %v1176 = vpop.f32.mrb[0].mxu0
        %v1177 = vadd.f32 %v992, %v1176
        %v1178 = vpop.f32.mrb[0].mxu0
        %v1179 = vadd.f32 %v996, %v1178
        %v1180 = vpop.f32.mrb[0].mxu0
        %v1181 = vadd.f32 %v992, %v1180
        %v1182 = vpop.f32.mrb[0].mxu0
        %v1183 = vadd.f32 %v996, %v1182
        %1184 = vdwg.mxu0
        %1185 = vmatprep.subr.bf16.mxu0 0
        %1186 = vmatpush1.bf16.msra.mxu0 %v1086
        %1187 = vmatprep.subr.bf16.mxu0 0
        %1188 = vmatpush1.bf16.msra.mxu0 %v1089
        %1189 = vmatprep.subr.bf16.mxu0 0
        %1190 = vmatpush1.bf16.msra.mxu0 %v1092
        %1191 = vmatprep.subr.bf16.mxu0 0
        %1192 = vmatpush1.bf16.msra.mxu0 %v1095
        %1193 = vmatprep.subr.bf16.mxu0 0
        %1194 = vmatpush1.bf16.msra.mxu0 %v1098
        %1195 = vmatprep.subr.bf16.mxu0 0
        %1196 = vmatpush1.bf16.msra.mxu0 %v1101
        %1197 = vmatprep.subr.bf16.mxu0 0
        %1198 = vmatpush1.bf16.msra.mxu0 %v1104
        %1199 = vmatprep.subr.bf16.mxu0 0
        %1200 = vmatpush1.bf16.msra.mxu0 %v1107
        %1201 = vmatprep.subr.bf16.mxu0 0
        %1202 = vmatpush1.bf16.msra.mxu0 0
        %1203 = vmatprep.subr.bf16.mxu0 0
        %1204 = vmatpush1.bf16.msra.mxu0 0
        %1205 = vmatprep.subr.bf16.mxu0 0
        %1206 = vmatpush1.bf16.msra.mxu0 0
        %1207 = vmatprep.subr.bf16.mxu0 0
        %1208 = vmatpush1.bf16.msra.mxu0 0
        %1209 = vmatprep.subr.bf16.mxu0 0
        %1210 = vmatpush1.bf16.msra.mxu0 0
        %1211 = vmatprep.subr.bf16.mxu0 0
        %1212 = vmatpush1.bf16.msra.mxu0 0
        %1213 = vmatprep.subr.bf16.mxu0 0
        %1214 = vmatpush1.bf16.msra.mxu0 0
        %1215 = vmatprep.subr.bf16.mxu0 0
        %1216 = vmatpush1.bf16.msra.mxu0 0
        %1217 = vmatprep.mubr.bf16.mxu0 0
        %1218 = vmatmul.mubr.bf16.gmra.mrb[0].mxu0 %v953
        %v1219 = vpop.f32.mrb[0].mxu0
        %v1220 = vadd.f32 %v1000, %v1219
        %v1221 = vpop.f32.mrb[0].mxu0
        %v1222 = vpop.f32.mrb[0].mxu0
        %v1223 = vadd.f32 %v1000, %v1222
        %v1224 = vpop.f32.mrb[0].mxu0
        %1225 = vmatprep.mubr.bf16.mxu0 0
        %1226 = vmatmul.mubr.bf16.gmra.mrb[0].mxu0 %v954
        %v1227 = vpop.f32.mrb[0].mxu0
        %v1228 = vadd.f32 %v1000, %v1227
        %v1229 = vpop.f32.mrb[0].mxu0
        %v1230 = vpop.f32.mrb[0].mxu0
        %v1231 = vadd.f32 %v1000, %v1230
        %v1232 = vpop.f32.mrb[0].mxu0
        %1233 = vdwg.mxu0
        %1238 = vrot.lane.b32.xlu0 %v1167, 96
        %v1239 = vpop.permute.xlu0 %1238
        %1240 = vrot.lane.b32.xlu0 %v1171, 96
        %v1241 = vpop.permute.xlu0 %1240
        %1242 = vrot.lane.b32.xlu0 %v1177, 96
        %v1243 = vpop.permute.xlu0 %1242
        %1244 = vrot.lane.b32.xlu0 %v1181, 96
        %v1245 = vpop.permute.xlu0 %1244
        %1250 = vrot.lane.b32.xlu0 %v1167, 64
        %v1251 = vpop.permute.xlu0 %1250
        %1252 = vrot.lane.b32.xlu0 %v1171, 64
        %v1253 = vpop.permute.xlu0 %1252
        %1254 = vrot.lane.b32.xlu0 %v1177, 64
        %v1255 = vpop.permute.xlu0 %1254
        %1256 = vrot.lane.b32.xlu0 %v1181, 64
        %v1257 = vpop.permute.xlu0 %1256
        %1262 = vrot.lane.b32.xlu0 %v1167, 32
        %v1263 = vpop.permute.xlu0 %1262
        %1264 = vrot.lane.b32.xlu0 %v1171, 32
        %v1265 = vpop.permute.xlu0 %1264
        %1266 = vrot.lane.b32.xlu0 %v1177, 32
        %v1267 = vpop.permute.xlu0 %1266
        %1268 = vrot.lane.b32.xlu0 %v1181, 32
        %v1269 = vpop.permute.xlu0 %1268
        %1278 = vrot.lane.b32.xlu0 %v1169, 96
        %v1279 = vpop.permute.xlu0 %1278
        %1280 = vrot.lane.b32.xlu0 %v1173, 96
        %v1281 = vpop.permute.xlu0 %1280
        %1282 = vrot.lane.b32.xlu0 %v1179, 96
        %v1283 = vpop.permute.xlu0 %1282
        %1284 = vrot.lane.b32.xlu0 %v1183, 96
        %v1285 = vpop.permute.xlu0 %1284
        %1290 = vrot.lane.b32.xlu0 %v1169, 64
        %v1291 = vpop.permute.xlu0 %1290
        %1292 = vrot.lane.b32.xlu0 %v1173, 64
        %v1293 = vpop.permute.xlu0 %1292
        %1294 = vrot.lane.b32.xlu0 %v1179, 64
        %v1295 = vpop.permute.xlu0 %1294
        %1296 = vrot.lane.b32.xlu0 %v1183, 64
        %v1297 = vpop.permute.xlu0 %1296
        %1302 = vrot.lane.b32.xlu0 %v1169, 32
        %v1303 = vpop.permute.xlu0 %1302
        %1304 = vrot.lane.b32.xlu0 %v1173, 32
        %v1305 = vpop.permute.xlu0 %1304
        %1306 = vrot.lane.b32.xlu0 %v1179, 32
        %v1307 = vpop.permute.xlu0 %1306
        %1308 = vrot.lane.b32.xlu0 %v1183, 32
        %v1309 = vpop.permute.xlu0 %1308
        %1318 = vrot.lane.b32.xlu0 %v1220, 96
        %v1319 = vpop.permute.xlu0 %1318
        %1320 = vrot.lane.b32.xlu0 %v1223, 96
        %v1321 = vpop.permute.xlu0 %1320
        %1322 = vrot.lane.b32.xlu0 %v1228, 96
        %v1323 = vpop.permute.xlu0 %1322
        %1324 = vrot.lane.b32.xlu0 %v1231, 96
        %v1325 = vpop.permute.xlu0 %1324
        %1330 = vrot.lane.b32.xlu0 %v1220, 64
        %v1331 = vpop.permute.xlu0 %1330
        %1332 = vrot.lane.b32.xlu0 %v1223, 64
        %v1333 = vpop.permute.xlu0 %1332
        %1334 = vrot.lane.b32.xlu0 %v1228, 64
        %v1335 = vpop.permute.xlu0 %1334
        %1336 = vrot.lane.b32.xlu0 %v1231, 64
        %v1337 = vpop.permute.xlu0 %1336
        %1342 = vrot.lane.b32.xlu0 %v1220, 32
        %v1343 = vpop.permute.xlu0 %1342
        %1344 = vrot.lane.b32.xlu0 %v1223, 32
        %v1345 = vpop.permute.xlu0 %1344
        %1346 = vrot.lane.b32.xlu0 %v1228, 32
        %v1347 = vpop.permute.xlu0 %1346
        %1348 = vrot.lane.b32.xlu0 %v1231, 32
        %v1349 = vpop.permute.xlu0 %1348
        %v1354 = vpack.c.bf16 %v1171, %v1167
        %v1355 = vpack.c.bf16 %v1181, %v1177
        %v1356 = vpack.c.bf16 %v1241, %v1239
        %v1357 = vpack.c.bf16 %v1245, %v1243
        %v1358 = vpack.c.bf16 %v1253, %v1251
        %v1359 = vpack.c.bf16 %v1257, %v1255
        %v1360 = vpack.c.bf16 %v1265, %v1263
        %v1361 = vpack.c.bf16 %v1269, %v1267
        %v1362 = vpack.c.bf16 %v1173, %v1169
        %v1363 = vpack.c.bf16 %v1183, %v1179
        %v1364 = vpack.c.bf16 %v1281, %v1279
        %v1365 = vpack.c.bf16 %v1285, %v1283
        %v1366 = vpack.c.bf16 %v1293, %v1291
        %v1367 = vpack.c.bf16 %v1297, %v1295
        %v1368 = vpack.c.bf16 %v1305, %v1303
        %v1369 = vpack.c.bf16 %v1309, %v1307
        %v1370 = vpack.c.bf16 %v1223, %v1220
        %v1371 = vpack.c.bf16 %v1231, %v1228
        %v1372 = vpack.c.bf16 %v1321, %v1319
        %v1373 = vpack.c.bf16 %v1325, %v1323
        %v1374 = vpack.c.bf16 %v1333, %v1331
        %v1375 = vpack.c.bf16 %v1337, %v1335
        %v1376 = vpack.c.bf16 %v1345, %v1343
        %v1377 = vpack.c.bf16 %v1349, %v1347
        %vm1378 = vcmask 261120
        %v1380 = vsel %vm1378, %v1354, 0
        %v1383 = vsel %vm1378, %v1362, 0
        %1385 = vmatprep.subr.bf16.mxu0 0
        %1386 = vmatpush1.bf16.xpose.msra.mxu0 %v1383
        %1387 = vmatprep.subr.bf16.mxu0 0
        %1388 = vmatpush1.bf16.xpose.msra.mxu0 0
        %1389 = vmatprep.subr.bf16.mxu0 0
        %1390 = vmatpush1.bf16.xpose.msra.mxu0 0
        %1391 = vmatprep.subr.bf16.mxu0 0
        %1392 = vmatpush1.bf16.xpose.msra.mxu0 0
        %1393 = vmatprep.subr.bf16.mxu0 0
        %1394 = vmatpush1.bf16.xpose.msra.mxu0 0
        %1395 = vmatprep.subr.bf16.mxu0 0
        %1396 = vmatpush1.bf16.xpose.msra.mxu0 0
        %1397 = vmatprep.subr.bf16.mxu0 0
        %1398 = vmatpush1.bf16.xpose.msra.mxu0 0
        %1399 = vmatprep.subr.bf16.mxu0 0
        %1400 = vmatpush1.bf16.xpose.msra.mxu0 0
        %1401 = vmatprep.subr.bf16.mxu0 0
        %1402 = vmatpush1.bf16.xpose.msra.mxu0 0
        %1403 = vmatprep.subr.bf16.mxu0 0
        %1404 = vmatpush1.bf16.xpose.msra.mxu0 0
        %1405 = vmatprep.subr.bf16.mxu0 0
        %1406 = vmatpush1.bf16.xpose.msra.mxu0 0
        %1407 = vmatprep.subr.bf16.mxu0 0
        %1408 = vmatpush1.bf16.xpose.msra.mxu0 0
        %1409 = vmatprep.subr.bf16.mxu0 0
        %1410 = vmatpush1.bf16.xpose.msra.mxu0 0
        %1411 = vmatprep.subr.bf16.mxu0 0
        %1412 = vmatpush1.bf16.xpose.msra.mxu0 0
        %1413 = vmatprep.subr.bf16.mxu0 0
        %1414 = vmatpush1.bf16.xpose.msra.mxu0 0
        %1415 = vmatprep.subr.bf16.mxu0 0
        %1416 = vmatpush1.bf16.xpose.msra.mxu0 0
        %1417 = vmatprep.mubr.bf16.mxu0 0
        %1418 = vmatmul.mubr.bf16.gmra.mrb[0].mxu0 %v1380
        %v1419 = vpop.f32.mrb[0].mxu0
        %v1420 = vadd.f32 0.0, %v1419
        %v1421 = vpop.f32.mrb[0].mxu0
        %v1422 = vpop.f32.mrb[0].mxu0
        %v1423 = vadd.f32 0.0, %v1422
        %v1424 = vpop.f32.mrb[0].mxu0
        %1425 = vdwg.mxu0
        %v1427 = vsel %vm1378, %v1355, 0
        %v1430 = vsel %vm1378, %v1363, 0
        %1432 = vmatprep.subr.bf16.mxu0 0
        %1433 = vmatpush1.bf16.xpose.msra.mxu0 %v1430
        %1434 = vmatprep.subr.bf16.mxu0 0
        %1435 = vmatpush1.bf16.xpose.msra.mxu0 0
        %1436 = vmatprep.subr.bf16.mxu0 0
        %1437 = vmatpush1.bf16.xpose.msra.mxu0 0
        %1438 = vmatprep.subr.bf16.mxu0 0
        %1439 = vmatpush1.bf16.xpose.msra.mxu0 0
        %1440 = vmatprep.subr.bf16.mxu0 0
        %1441 = vmatpush1.bf16.xpose.msra.mxu0 0
        %1442 = vmatprep.subr.bf16.mxu0 0
        %1443 = vmatpush1.bf16.xpose.msra.mxu0 0
        %1444 = vmatprep.subr.bf16.mxu0 0
        %1445 = vmatpush1.bf16.xpose.msra.mxu0 0
        %1446 = vmatprep.subr.bf16.mxu0 0
        %1447 = vmatpush1.bf16.xpose.msra.mxu0 0
        %1448 = vmatprep.subr.bf16.mxu0 0
        %1449 = vmatpush1.bf16.xpose.msra.mxu0 0
        %1450 = vmatprep.subr.bf16.mxu0 0
        %1451 = vmatpush1.bf16.xpose.msra.mxu0 0
        %1452 = vmatprep.subr.bf16.mxu0 0
        %1453 = vmatpush1.bf16.xpose.msra.mxu0 0
        %1454 = vmatprep.subr.bf16.mxu0 0
        %1455 = vmatpush1.bf16.xpose.msra.mxu0 0
        %1456 = vmatprep.subr.bf16.mxu0 0
        %1457 = vmatpush1.bf16.xpose.msra.mxu0 0
        %1458 = vmatprep.subr.bf16.mxu0 0
        %1459 = vmatpush1.bf16.xpose.msra.mxu0 0
        %1460 = vmatprep.subr.bf16.mxu0 0
        %1461 = vmatpush1.bf16.xpose.msra.mxu0 0
        %1462 = vmatprep.subr.bf16.mxu0 0
        %1463 = vmatpush1.bf16.xpose.msra.mxu0 0
        %1464 = vmatprep.mubr.bf16.mxu0 0
        %1465 = vmatmul.mubr.bf16.gmra.mrb[0].mxu0 %v1427
        %v1466 = vpop.f32.mrb[0].mxu0
        %v1467 = vadd.f32 0.0, %v1466
        %v1468 = vpop.f32.mrb[0].mxu0
        %v1469 = vpop.f32.mrb[0].mxu0
        %v1470 = vadd.f32 0.0, %v1469
        %v1471 = vpop.f32.mrb[0].mxu0
        %1472 = vdwg.mxu0
        %v1474 = vsel %vm1378, %v1356, 0
        %v1477 = vsel %vm1378, %v1364, 0
        %1479 = vmatprep.subr.bf16.mxu0 0
        %1480 = vmatpush1.bf16.xpose.msra.mxu0 %v1477
        %1481 = vmatprep.subr.bf16.mxu0 0
        %1482 = vmatpush1.bf16.xpose.msra.mxu0 0
        %1483 = vmatprep.subr.bf16.mxu0 0
        %1484 = vmatpush1.bf16.xpose.msra.mxu0 0
        %1485 = vmatprep.subr.bf16.mxu0 0
        %1486 = vmatpush1.bf16.xpose.msra.mxu0 0
        %1487 = vmatprep.subr.bf16.mxu0 0
        %1488 = vmatpush1.bf16.xpose.msra.mxu0 0
        %1489 = vmatprep.subr.bf16.mxu0 0
        %1490 = vmatpush1.bf16.xpose.msra.mxu0 0
        %1491 = vmatprep.subr.bf16.mxu0 0
        %1492 = vmatpush1.bf16.xpose.msra.mxu0 0
        %1493 = vmatprep.subr.bf16.mxu0 0
        %1494 = vmatpush1.bf16.xpose.msra.mxu0 0
        %1495 = vmatprep.subr.bf16.mxu0 0
        %1496 = vmatpush1.bf16.xpose.msra.mxu0 0
        %1497 = vmatprep.subr.bf16.mxu0 0
        %1498 = vmatpush1.bf16.xpose.msra.mxu0 0
        %1499 = vmatprep.subr.bf16.mxu0 0
        %1500 = vmatpush1.bf16.xpose.msra.mxu0 0
        %1501 = vmatprep.subr.bf16.mxu0 0
        %1502 = vmatpush1.bf16.xpose.msra.mxu0 0
        %1503 = vmatprep.subr.bf16.mxu0 0
        %1504 = vmatpush1.bf16.xpose.msra.mxu0 0
        %1505 = vmatprep.subr.bf16.mxu0 0
        %1506 = vmatpush1.bf16.xpose.msra.mxu0 0
        %1507 = vmatprep.subr.bf16.mxu0 0
        %1508 = vmatpush1.bf16.xpose.msra.mxu0 0
        %1509 = vmatprep.subr.bf16.mxu0 0
        %1510 = vmatpush1.bf16.xpose.msra.mxu0 0
        %1511 = vmatprep.mubr.bf16.mxu0 0
        %1512 = vmatmul.mubr.bf16.gmra.mrb[0].mxu0 %v1474
        %v1513 = vpop.f32.mrb[0].mxu0
        %v1514 = vadd.f32 0.0, %v1513
        %v1515 = vpop.f32.mrb[0].mxu0
        %v1516 = vpop.f32.mrb[0].mxu0
        %v1517 = vadd.f32 0.0, %v1516
        %v1518 = vpop.f32.mrb[0].mxu0
        %1519 = vdwg.mxu0
        %v1521 = vsel %vm1378, %v1357, 0
        %v1524 = vsel %vm1378, %v1365, 0
        %1526 = vmatprep.subr.bf16.mxu0 0
        %1527 = vmatpush1.bf16.xpose.msra.mxu0 %v1524
        %1528 = vmatprep.subr.bf16.mxu0 0
        %1529 = vmatpush1.bf16.xpose.msra.mxu0 0
        %1530 = vmatprep.subr.bf16.mxu0 0
        %1531 = vmatpush1.bf16.xpose.msra.mxu0 0
        %1532 = vmatprep.subr.bf16.mxu0 0
        %1533 = vmatpush1.bf16.xpose.msra.mxu0 0
        %1534 = vmatprep.subr.bf16.mxu0 0
        %1535 = vmatpush1.bf16.xpose.msra.mxu0 0
        %1536 = vmatprep.subr.bf16.mxu0 0
        %1537 = vmatpush1.bf16.xpose.msra.mxu0 0
        %1538 = vmatprep.subr.bf16.mxu0 0
        %1539 = vmatpush1.bf16.xpose.msra.mxu0 0
        %1540 = vmatprep.subr.bf16.mxu0 0
        %1541 = vmatpush1.bf16.xpose.msra.mxu0 0
        %1542 = vmatprep.subr.bf16.mxu0 0
        %1543 = vmatpush1.bf16.xpose.msra.mxu0 0
        %1544 = vmatprep.subr.bf16.mxu0 0
        %1545 = vmatpush1.bf16.xpose.msra.mxu0 0
        %1546 = vmatprep.subr.bf16.mxu0 0
        %1547 = vmatpush1.bf16.xpose.msra.mxu0 0
        %1548 = vmatprep.subr.bf16.mxu0 0
        %1549 = vmatpush1.bf16.xpose.msra.mxu0 0
        %1550 = vmatprep.subr.bf16.mxu0 0
        %1551 = vmatpush1.bf16.xpose.msra.mxu0 0
        %1552 = vmatprep.subr.bf16.mxu0 0
        %1553 = vmatpush1.bf16.xpose.msra.mxu0 0
        %1554 = vmatprep.subr.bf16.mxu0 0
        %1555 = vmatpush1.bf16.xpose.msra.mxu0 0
        %1556 = vmatprep.subr.bf16.mxu0 0
        %1557 = vmatpush1.bf16.xpose.msra.mxu0 0
        %1558 = vmatprep.mubr.bf16.mxu0 0
        %1559 = vmatmul.mubr.bf16.gmra.mrb[0].mxu0 %v1521
        %v1560 = vpop.f32.mrb[0].mxu0
        %v1561 = vadd.f32 0.0, %v1560
        %v1562 = vpop.f32.mrb[0].mxu0
        %v1563 = vpop.f32.mrb[0].mxu0
        %v1564 = vadd.f32 0.0, %v1563
        %v1565 = vpop.f32.mrb[0].mxu0
        %1566 = vdwg.mxu0
        %v1568 = vsel %vm1378, %v1358, 0
        %v1571 = vsel %vm1378, %v1366, 0
        %1573 = vmatprep.subr.bf16.mxu0 0
        %1574 = vmatpush1.bf16.xpose.msra.mxu0 %v1571
        %1575 = vmatprep.subr.bf16.mxu0 0
        %1576 = vmatpush1.bf16.xpose.msra.mxu0 0
        %1577 = vmatprep.subr.bf16.mxu0 0
        %1578 = vmatpush1.bf16.xpose.msra.mxu0 0
        %1579 = vmatprep.subr.bf16.mxu0 0
        %1580 = vmatpush1.bf16.xpose.msra.mxu0 0
        %1581 = vmatprep.subr.bf16.mxu0 0
        %1582 = vmatpush1.bf16.xpose.msra.mxu0 0
        %1583 = vmatprep.subr.bf16.mxu0 0
        %1584 = vmatpush1.bf16.xpose.msra.mxu0 0
        %1585 = vmatprep.subr.bf16.mxu0 0
        %1586 = vmatpush1.bf16.xpose.msra.mxu0 0
        %1587 = vmatprep.subr.bf16.mxu0 0
        %1588 = vmatpush1.bf16.xpose.msra.mxu0 0
        %1589 = vmatprep.subr.bf16.mxu0 0
        %1590 = vmatpush1.bf16.xpose.msra.mxu0 0
        %1591 = vmatprep.subr.bf16.mxu0 0
        %1592 = vmatpush1.bf16.xpose.msra.mxu0 0
        %1593 = vmatprep.subr.bf16.mxu0 0
        %1594 = vmatpush1.bf16.xpose.msra.mxu0 0
        %1595 = vmatprep.subr.bf16.mxu0 0
        %1596 = vmatpush1.bf16.xpose.msra.mxu0 0
        %1597 = vmatprep.subr.bf16.mxu0 0
        %1598 = vmatpush1.bf16.xpose.msra.mxu0 0
        %1599 = vmatprep.subr.bf16.mxu0 0
        %1600 = vmatpush1.bf16.xpose.msra.mxu0 0
        %1601 = vmatprep.subr.bf16.mxu0 0
        %1602 = vmatpush1.bf16.xpose.msra.mxu0 0
        %1603 = vmatprep.subr.bf16.mxu0 0
        %1604 = vmatpush1.bf16.xpose.msra.mxu0 0
        %1605 = vmatprep.mubr.bf16.mxu0 0
        %1606 = vmatmul.mubr.bf16.gmra.mrb[0].mxu0 %v1568
        %v1607 = vpop.f32.mrb[0].mxu0
        %v1608 = vadd.f32 0.0, %v1607
        %v1609 = vpop.f32.mrb[0].mxu0
        %v1610 = vpop.f32.mrb[0].mxu0
        %v1611 = vadd.f32 0.0, %v1610
        %v1612 = vpop.f32.mrb[0].mxu0
        %1613 = vdwg.mxu0
        %v1615 = vsel %vm1378, %v1359, 0
        %v1618 = vsel %vm1378, %v1367, 0
        %1620 = vmatprep.subr.bf16.mxu0 0
        %1621 = vmatpush1.bf16.xpose.msra.mxu0 %v1618
        %1622 = vmatprep.subr.bf16.mxu0 0
        %1623 = vmatpush1.bf16.xpose.msra.mxu0 0
        %1624 = vmatprep.subr.bf16.mxu0 0
        %1625 = vmatpush1.bf16.xpose.msra.mxu0 0
        %1626 = vmatprep.subr.bf16.mxu0 0
        %1627 = vmatpush1.bf16.xpose.msra.mxu0 0
        %1628 = vmatprep.subr.bf16.mxu0 0
        %1629 = vmatpush1.bf16.xpose.msra.mxu0 0
        %1630 = vmatprep.subr.bf16.mxu0 0
        %1631 = vmatpush1.bf16.xpose.msra.mxu0 0
        %1632 = vmatprep.subr.bf16.mxu0 0
        %1633 = vmatpush1.bf16.xpose.msra.mxu0 0
        %1634 = vmatprep.subr.bf16.mxu0 0
        %1635 = vmatpush1.bf16.xpose.msra.mxu0 0
        %1636 = vmatprep.subr.bf16.mxu0 0
        %1637 = vmatpush1.bf16.xpose.msra.mxu0 0
        %1638 = vmatprep.subr.bf16.mxu0 0
        %1639 = vmatpush1.bf16.xpose.msra.mxu0 0
        %1640 = vmatprep.subr.bf16.mxu0 0
        %1641 = vmatpush1.bf16.xpose.msra.mxu0 0
        %1642 = vmatprep.subr.bf16.mxu0 0
        %1643 = vmatpush1.bf16.xpose.msra.mxu0 0
        %1644 = vmatprep.subr.bf16.mxu0 0
        %1645 = vmatpush1.bf16.xpose.msra.mxu0 0
        %1646 = vmatprep.subr.bf16.mxu0 0
        %1647 = vmatpush1.bf16.xpose.msra.mxu0 0
        %1648 = vmatprep.subr.bf16.mxu0 0
        %1649 = vmatpush1.bf16.xpose.msra.mxu0 0
        %1650 = vmatprep.subr.bf16.mxu0 0
        %1651 = vmatpush1.bf16.xpose.msra.mxu0 0
        %1652 = vmatprep.mubr.bf16.mxu0 0
        %1653 = vmatmul.mubr.bf16.gmra.mrb[0].mxu0 %v1615
        %v1654 = vpop.f32.mrb[0].mxu0
        %v1655 = vadd.f32 0.0, %v1654
        %v1656 = vpop.f32.mrb[0].mxu0
        %v1657 = vpop.f32.mrb[0].mxu0
        %v1658 = vadd.f32 0.0, %v1657
        %v1659 = vpop.f32.mrb[0].mxu0
        %1660 = vdwg.mxu0
        %v1662 = vsel %vm1378, %v1360, 0
        %v1665 = vsel %vm1378, %v1368, 0
        %1667 = vmatprep.subr.bf16.mxu0 0
        %1668 = vmatpush1.bf16.xpose.msra.mxu0 %v1665
        %1669 = vmatprep.subr.bf16.mxu0 0
        %1670 = vmatpush1.bf16.xpose.msra.mxu0 0
        %1671 = vmatprep.subr.bf16.mxu0 0
        %1672 = vmatpush1.bf16.xpose.msra.mxu0 0
        %1673 = vmatprep.subr.bf16.mxu0 0
        %1674 = vmatpush1.bf16.xpose.msra.mxu0 0
        %1675 = vmatprep.subr.bf16.mxu0 0
        %1676 = vmatpush1.bf16.xpose.msra.mxu0 0
        %1677 = vmatprep.subr.bf16.mxu0 0
        %1678 = vmatpush1.bf16.xpose.msra.mxu0 0
        %1679 = vmatprep.subr.bf16.mxu0 0
        %1680 = vmatpush1.bf16.xpose.msra.mxu0 0
        %1681 = vmatprep.subr.bf16.mxu0 0
        %1682 = vmatpush1.bf16.xpose.msra.mxu0 0
        %1683 = vmatprep.subr.bf16.mxu0 0
        %1684 = vmatpush1.bf16.xpose.msra.mxu0 0
        %1685 = vmatprep.subr.bf16.mxu0 0
        %1686 = vmatpush1.bf16.xpose.msra.mxu0 0
        %1687 = vmatprep.subr.bf16.mxu0 0
        %1688 = vmatpush1.bf16.xpose.msra.mxu0 0
        %1689 = vmatprep.subr.bf16.mxu0 0
        %1690 = vmatpush1.bf16.xpose.msra.mxu0 0
        %1691 = vmatprep.subr.bf16.mxu0 0
        %1692 = vmatpush1.bf16.xpose.msra.mxu0 0
        %1693 = vmatprep.subr.bf16.mxu0 0
        %1694 = vmatpush1.bf16.xpose.msra.mxu0 0
        %1695 = vmatprep.subr.bf16.mxu0 0
        %1696 = vmatpush1.bf16.xpose.msra.mxu0 0
        %1697 = vmatprep.subr.bf16.mxu0 0
        %1698 = vmatpush1.bf16.xpose.msra.mxu0 0
        %1699 = vmatprep.mubr.bf16.mxu0 0
        %1700 = vmatmul.mubr.bf16.gmra.mrb[0].mxu0 %v1662
        %v1701 = vpop.f32.mrb[0].mxu0
        %v1702 = vadd.f32 0.0, %v1701
        %v1703 = vpop.f32.mrb[0].mxu0
        %v1704 = vpop.f32.mrb[0].mxu0
        %v1705 = vadd.f32 0.0, %v1704
        %v1706 = vpop.f32.mrb[0].mxu0
        %1707 = vdwg.mxu0
        %v1709 = vsel %vm1378, %v1361, 0
        %v1712 = vsel %vm1378, %v1369, 0
        %1714 = vmatprep.subr.bf16.mxu0 0
        %1715 = vmatpush1.bf16.xpose.msra.mxu0 %v1712
        %1716 = vmatprep.subr.bf16.mxu0 0
        %1717 = vmatpush1.bf16.xpose.msra.mxu0 0
        %1718 = vmatprep.subr.bf16.mxu0 0
        %1719 = vmatpush1.bf16.xpose.msra.mxu0 0
        %1720 = vmatprep.subr.bf16.mxu0 0
        %1721 = vmatpush1.bf16.xpose.msra.mxu0 0
        %1722 = vmatprep.subr.bf16.mxu0 0
        %1723 = vmatpush1.bf16.xpose.msra.mxu0 0
        %1724 = vmatprep.subr.bf16.mxu0 0
        %1725 = vmatpush1.bf16.xpose.msra.mxu0 0
        %1726 = vmatprep.subr.bf16.mxu0 0
        %1727 = vmatpush1.bf16.xpose.msra.mxu0 0
        %1728 = vmatprep.subr.bf16.mxu0 0
        %1729 = vmatpush1.bf16.xpose.msra.mxu0 0
        %1730 = vmatprep.subr.bf16.mxu0 0
        %1731 = vmatpush1.bf16.xpose.msra.mxu0 0
        %1732 = vmatprep.subr.bf16.mxu0 0
        %1733 = vmatpush1.bf16.xpose.msra.mxu0 0
        %1734 = vmatprep.subr.bf16.mxu0 0
        %1735 = vmatpush1.bf16.xpose.msra.mxu0 0
        %1736 = vmatprep.subr.bf16.mxu0 0
        %1737 = vmatpush1.bf16.xpose.msra.mxu0 0
        %1738 = vmatprep.subr.bf16.mxu0 0
        %1739 = vmatpush1.bf16.xpose.msra.mxu0 0
        %1740 = vmatprep.subr.bf16.mxu0 0
        %1741 = vmatpush1.bf16.xpose.msra.mxu0 0
        %1742 = vmatprep.subr.bf16.mxu0 0
        %1743 = vmatpush1.bf16.xpose.msra.mxu0 0
        %1744 = vmatprep.subr.bf16.mxu0 0
        %1745 = vmatpush1.bf16.xpose.msra.mxu0 0
        %1746 = vmatprep.mubr.bf16.mxu0 0
        %1747 = vmatmul.mubr.bf16.gmra.mrb[0].mxu0 %v1709
        %v1748 = vpop.f32.mrb[0].mxu0
        %v1749 = vadd.f32 0.0, %v1748
        %v1750 = vpop.f32.mrb[0].mxu0
        %v1751 = vpop.f32.mrb[0].mxu0
        %v1752 = vadd.f32 0.0, %v1751
        %v1753 = vpop.f32.mrb[0].mxu0
        %1754 = vdwg.mxu0
        %v1755 = vmul.f32 %v1420, 0.17677669
        %v1756 = vmul.f32 %v1423, 0.17677669
        %v1757 = vmul.f32 %v1467, 0.17677669
        %v1758 = vmul.f32 %v1470, 0.17677669
        %v1759 = vmul.f32 %v1514, 0.17677669
        %v1760 = vmul.f32 %v1517, 0.17677669
        %v1761 = vmul.f32 %v1561, 0.17677669
        %v1762 = vmul.f32 %v1564, 0.17677669
        %v1763 = vmul.f32 %v1608, 0.17677669
        %v1764 = vmul.f32 %v1611, 0.17677669
        %v1765 = vmul.f32 %v1655, 0.17677669
        %v1766 = vmul.f32 %v1658, 0.17677669
        %v1767 = vmul.f32 %v1702, 0.17677669
        %v1768 = vmul.f32 %v1705, 0.17677669
        %v1769 = vmul.f32 %v1749, 0.17677669
        %v1770 = vmul.f32 %v1752, 0.17677669
        %v1771 = vld [vmem:[%s1] sm:$0x1]
        %v1772 = vld [vmem:[%s1 + $0x1] sm:$0x1]
        %v1775 = vlaneseq
        %v1776 = vshrl.u32 %v1775, 7
        %v1777 = vsub.s32 0, %v1776
        %v1778 = vrot.slane %v1771, %v1777
        %v1779 = vlaneseq
        %v1780 = vshrl.u32 %v1779, 7
        %v1781 = vsub.s32 0, %v1780
        %v1782 = vrot.slane %v1772, %v1781
        %v1785 = vadd.f32 %v1755, %v1778
        %v1786 = vadd.f32 %v1756, %v1778
        %v1787 = vadd.f32 %v1757, %v1782
        %v1788 = vadd.f32 %v1758, %v1782
        %v1789 = vadd.f32 %v1759, %v1778
        %v1790 = vadd.f32 %v1760, %v1778
        %v1791 = vadd.f32 %v1761, %v1782
        %v1792 = vadd.f32 %v1762, %v1782
        %v1793 = vadd.f32 %v1763, %v1778
        %v1794 = vadd.f32 %v1764, %v1778
        %v1795 = vadd.f32 %v1765, %v1782
        %v1796 = vadd.f32 %v1766, %v1782
        %v1797 = vadd.f32 %v1767, %v1778
        %v1798 = vadd.f32 %v1768, %v1778
        %v1799 = vadd.f32 %v1769, %v1782
        %v1800 = vadd.f32 %v1770, %v1782
        %vm1801 = vcmask 130048
        %v1802 = vsel %vm1801, %v1785, -inf
        %1803 = vmax.xlane.f32.xlu0 %v1802
        %v1804 = vpop.xlane.xlu0 %1803
        %v1805 = vsel %vm1801, %v1786, -inf
        %1806 = vmax.xlane.f32.xlu0 %v1805
        %v1807 = vpop.xlane.xlu0 %1806
        %v1808 = vsel %vm1801, %v1787, -inf
        %1809 = vmax.xlane.f32.xlu0 %v1808
        %v1810 = vpop.xlane.xlu0 %1809
        %v1811 = vsel %vm1801, %v1788, -inf
        %1812 = vmax.xlane.f32.xlu0 %v1811
        %v1813 = vpop.xlane.xlu0 %1812
        %v1814 = vsel %vm1801, %v1789, -inf
        %1815 = vmax.xlane.f32.xlu0 %v1814
        %v1816 = vpop.xlane.xlu0 %1815
        %v1817 = vsel %vm1801, %v1790, -inf
        %1818 = vmax.xlane.f32.xlu0 %v1817
        %v1819 = vpop.xlane.xlu0 %1818
        %v1820 = vsel %vm1801, %v1791, -inf
        %1821 = vmax.xlane.f32.xlu0 %v1820
        %v1822 = vpop.xlane.xlu0 %1821
        %v1823 = vsel %vm1801, %v1792, -inf
        %1824 = vmax.xlane.f32.xlu0 %v1823
        %v1825 = vpop.xlane.xlu0 %1824
        %v1826 = vsel %vm1801, %v1793, -inf
        %1827 = vmax.xlane.f32.xlu0 %v1826
        %v1828 = vpop.xlane.xlu0 %1827
        %v1829 = vsel %vm1801, %v1794, -inf
        %1830 = vmax.xlane.f32.xlu0 %v1829
        %v1831 = vpop.xlane.xlu0 %1830
        %v1832 = vsel %vm1801, %v1795, -inf
        %1833 = vmax.xlane.f32.xlu0 %v1832
        %v1834 = vpop.xlane.xlu0 %1833
        %v1835 = vsel %vm1801, %v1796, -inf
        %1836 = vmax.xlane.f32.xlu0 %v1835
        %v1837 = vpop.xlane.xlu0 %1836
        %v1838 = vsel %vm1801, %v1797, -inf
        %1839 = vmax.xlane.f32.xlu0 %v1838
        %v1840 = vpop.xlane.xlu0 %1839
        %v1841 = vsel %vm1801, %v1798, -inf
        %1842 = vmax.xlane.f32.xlu0 %v1841
        %v1843 = vpop.xlane.xlu0 %1842
        %v1844 = vsel %vm1801, %v1799, -inf
        %1845 = vmax.xlane.f32.xlu0 %v1844
        %v1846 = vpop.xlane.xlu0 %1845
        %v1847 = vsel %vm1801, %v1800, -inf
        %1848 = vmax.xlane.f32.xlu0 %v1847
        %v1849 = vpop.xlane.xlu0 %1848
        %v1850 = vsub.f32 %v1785, %v1804
        %v1851 = vsub.f32 %v1786, %v1807
        %v1852 = vsub.f32 %v1787, %v1810
        %v1853 = vsub.f32 %v1788, %v1813
        %v1854 = vsub.f32 %v1789, %v1816
        %v1855 = vsub.f32 %v1790, %v1819
        %v1856 = vsub.f32 %v1791, %v1822
        %v1857 = vsub.f32 %v1792, %v1825
        %v1858 = vsub.f32 %v1793, %v1828
        %v1859 = vsub.f32 %v1794, %v1831
        %v1860 = vsub.f32 %v1795, %v1834
        %v1861 = vsub.f32 %v1796, %v1837
        %v1862 = vsub.f32 %v1797, %v1840
        %v1863 = vsub.f32 %v1798, %v1843
        %v1864 = vsub.f32 %v1799, %v1846
        %v1865 = vsub.f32 %v1800, %v1849
        %v1866 = vmul.f32 %v1850, 1.442695
        %v1867 = vpow.pop %v1866
        %v1868 = vmul.f32 %v1851, 1.442695
        %v1869 = vpow.pop %v1868
        %v1870 = vmul.f32 %v1852, 1.442695
        %v1871 = vpow.pop %v1870
        %v1872 = vmul.f32 %v1853, 1.442695
        %v1873 = vpow.pop %v1872
        %v1874 = vmul.f32 %v1854, 1.442695
        %v1875 = vpow.pop %v1874
        %v1876 = vmul.f32 %v1855, 1.442695
        %v1877 = vpow.pop %v1876
        %v1878 = vmul.f32 %v1856, 1.442695
        %v1879 = vpow.pop %v1878
        %v1880 = vmul.f32 %v1857, 1.442695
        %v1881 = vpow.pop %v1880
        %v1882 = vmul.f32 %v1858, 1.442695
        %v1883 = vpow.pop %v1882
        %v1884 = vmul.f32 %v1859, 1.442695
        %v1885 = vpow.pop %v1884
        %v1886 = vmul.f32 %v1860, 1.442695
        %v1887 = vpow.pop %v1886
        %v1888 = vmul.f32 %v1861, 1.442695
        %v1889 = vpow.pop %v1888
        %v1890 = vmul.f32 %v1862, 1.442695
        %v1891 = vpow.pop %v1890
        %v1892 = vmul.f32 %v1863, 1.442695
        %v1893 = vpow.pop %v1892
        %v1894 = vmul.f32 %v1864, 1.442695
        %v1895 = vpow.pop %v1894
        %v1896 = vmul.f32 %v1865, 1.442695
        %v1897 = vpow.pop %v1896
        %v1898 = vsel %vm1801, %v1867, 0.0
        %1899 = vadd.xlane.f32.xlu0 %v1898
        %v1900 = vpop.xlane.xlu0 %1899
        %v1901 = vsel %vm1801, %v1869, 0.0
        %1902 = vadd.xlane.f32.xlu0 %v1901
        %v1903 = vpop.xlane.xlu0 %1902
        %v1904 = vsel %vm1801, %v1871, 0.0
        %1905 = vadd.xlane.f32.xlu0 %v1904
        %v1906 = vpop.xlane.xlu0 %1905
        %v1907 = vsel %vm1801, %v1873, 0.0
        %1908 = vadd.xlane.f32.xlu0 %v1907
        %v1909 = vpop.xlane.xlu0 %1908
        %v1910 = vsel %vm1801, %v1875, 0.0
        %1911 = vadd.xlane.f32.xlu0 %v1910
        %v1912 = vpop.xlane.xlu0 %1911
        %v1913 = vsel %vm1801, %v1877, 0.0
        %1914 = vadd.xlane.f32.xlu0 %v1913
        %v1915 = vpop.xlane.xlu0 %1914
        %v1916 = vsel %vm1801, %v1879, 0.0
        %1917 = vadd.xlane.f32.xlu0 %v1916
        %v1918 = vpop.xlane.xlu0 %1917
        %v1919 = vsel %vm1801, %v1881, 0.0
        %1920 = vadd.xlane.f32.xlu0 %v1919
        %v1921 = vpop.xlane.xlu0 %1920
        %v1922 = vsel %vm1801, %v1883, 0.0
        %1923 = vadd.xlane.f32.xlu0 %v1922
        %v1924 = vpop.xlane.xlu0 %1923
        %v1925 = vsel %vm1801, %v1885, 0.0
        %1926 = vadd.xlane.f32.xlu0 %v1925
        %v1927 = vpop.xlane.xlu0 %1926
        %v1928 = vsel %vm1801, %v1887, 0.0
        %1929 = vadd.xlane.f32.xlu0 %v1928
        %v1930 = vpop.xlane.xlu0 %1929
        %v1931 = vsel %vm1801, %v1889, 0.0
        %1932 = vadd.xlane.f32.xlu0 %v1931
        %v1933 = vpop.xlane.xlu0 %1932
        %v1934 = vsel %vm1801, %v1891, 0.0
        %1935 = vadd.xlane.f32.xlu0 %v1934
        %v1936 = vpop.xlane.xlu0 %1935
        %v1937 = vsel %vm1801, %v1893, 0.0
        %1938 = vadd.xlane.f32.xlu0 %v1937
        %v1939 = vpop.xlane.xlu0 %1938
        %v1940 = vsel %vm1801, %v1895, 0.0
        %1941 = vadd.xlane.f32.xlu0 %v1940
        %v1942 = vpop.xlane.xlu0 %1941
        %v1943 = vsel %vm1801, %v1897, 0.0
        %1944 = vadd.xlane.f32.xlu0 %v1943
        %v1945 = vpop.xlane.xlu0 %1944
        %v1946 = vrcp.pop %v1900
        %v1947 = vrcp.pop %v1903
        %v1948 = vrcp.pop %v1906
        %v1949 = vrcp.pop %v1909
        %v1950 = vrcp.pop %v1912
        %v1951 = vrcp.pop %v1915
        %v1952 = vrcp.pop %v1918
        %v1953 = vrcp.pop %v1921
        %v1954 = vrcp.pop %v1924
        %v1955 = vrcp.pop %v1927
        %v1956 = vrcp.pop %v1930
        %v1957 = vrcp.pop %v1933
        %v1958 = vrcp.pop %v1936
        %v1959 = vrcp.pop %v1939
        %v1960 = vrcp.pop %v1942
        %v1961 = vrcp.pop %v1945
        %v1962 = vmul.f32 %v1867, %v1946
        %v1963 = vmul.f32 %v1869, %v1947
        %v1964 = vmul.f32 %v1871, %v1948
        %v1965 = vmul.f32 %v1873, %v1949
        %v1966 = vmul.f32 %v1875, %v1950
        %v1967 = vmul.f32 %v1877, %v1951
        %v1968 = vmul.f32 %v1879, %v1952
        %v1969 = vmul.f32 %v1881, %v1953
        %v1970 = vmul.f32 %v1883, %v1954
        %v1971 = vmul.f32 %v1885, %v1955
        %v1972 = vmul.f32 %v1887, %v1956
        %v1973 = vmul.f32 %v1889, %v1957
        %v1974 = vmul.f32 %v1891, %v1958
        %v1975 = vmul.f32 %v1893, %v1959
        %v1976 = vmul.f32 %v1895, %v1960
        %v1977 = vmul.f32 %v1897, %v1961
        %v1978 = vpack.c.bf16 %v1963, %v1962
        %v1979 = vpack.c.bf16 %v1965, %v1964
        %v1980 = vpack.c.bf16 %v1967, %v1966
        %v1981 = vpack.c.bf16 %v1969, %v1968
        %v1982 = vpack.c.bf16 %v1971, %v1970
        %v1983 = vpack.c.bf16 %v1973, %v1972
        %v1984 = vpack.c.bf16 %v1975, %v1974
        %v1985 = vpack.c.bf16 %v1977, %v1976
        %v1987 = vsel %vm1801, %v1978, 0
        %1989 = vmatprep.subr.bf16.mxu0 0
        %1990 = vmatpush1.bf16.msra.mxu0 %v1370
        %1991 = vmatprep.subr.bf16.mxu0 0
        %1992 = vmatpush1.bf16.msra.mxu0 0
        %1993 = vmatprep.subr.bf16.mxu0 0
        %1994 = vmatpush1.bf16.msra.mxu0 0
        %1995 = vmatprep.subr.bf16.mxu0 0
        %1996 = vmatpush1.bf16.msra.mxu0 0
        %1997 = vmatprep.subr.bf16.mxu0 0
        %1998 = vmatpush1.bf16.msra.mxu0 0
        %1999 = vmatprep.subr.bf16.mxu0 0
        %2000 = vmatpush1.bf16.msra.mxu0 0
        %2001 = vmatprep.subr.bf16.mxu0 0
        %2002 = vmatpush1.bf16.msra.mxu0 0
        %2003 = vmatprep.subr.bf16.mxu0 0
        %2004 = vmatpush1.bf16.msra.mxu0 0
        %2005 = vmatprep.subr.bf16.mxu0 0
        %2006 = vmatpush1.bf16.msra.mxu0 0
        %2007 = vmatprep.subr.bf16.mxu0 0
        %2008 = vmatpush1.bf16.msra.mxu0 0
        %2009 = vmatprep.subr.bf16.mxu0 0
        %2010 = vmatpush1.bf16.msra.mxu0 0
        %2011 = vmatprep.subr.bf16.mxu0 0
        %2012 = vmatpush1.bf16.msra.mxu0 0
        %2013 = vmatprep.subr.bf16.mxu0 0
        %2014 = vmatpush1.bf16.msra.mxu0 0
        %2015 = vmatprep.subr.bf16.mxu0 0
        %2016 = vmatpush1.bf16.msra.mxu0 0
        %2017 = vmatprep.subr.bf16.mxu0 0
        %2018 = vmatpush1.bf16.msra.mxu0 0
        %2019 = vmatprep.subr.bf16.mxu0 0
        %2020 = vmatpush1.bf16.msra.mxu0 0
        %2021 = vmatprep.mubr.bf16.mxu0 0
        %2022 = vmatmul.mubr.bf16.gmra.mrb[0].mxu0 %v1987
        %v2023 = vpop.f32.mrb[0].mxu0
        %v2024 = vadd.f32 0.0, %v2023
        %v2025 = vpop.f32.mrb[0].mxu0
        %v2026 = vpop.f32.mrb[0].mxu0
        %v2027 = vadd.f32 0.0, %v2026
        %v2028 = vpop.f32.mrb[0].mxu0
        %2029 = vdwg.mxu0
        %v2031 = vsel %vm1801, %v1979, 0
        %2033 = vmatprep.subr.bf16.mxu0 0
        %2034 = vmatpush1.bf16.msra.mxu0 %v1371
        %2035 = vmatprep.subr.bf16.mxu0 0
        %2036 = vmatpush1.bf16.msra.mxu0 0
        %2037 = vmatprep.subr.bf16.mxu0 0
        %2038 = vmatpush1.bf16.msra.mxu0 0
        %2039 = vmatprep.subr.bf16.mxu0 0
        %2040 = vmatpush1.bf16.msra.mxu0 0
        %2041 = vmatprep.subr.bf16.mxu0 0
        %2042 = vmatpush1.bf16.msra.mxu0 0
        %2043 = vmatprep.subr.bf16.mxu0 0
        %2044 = vmatpush1.bf16.msra.mxu0 0
        %2045 = vmatprep.subr.bf16.mxu0 0
        %2046 = vmatpush1.bf16.msra.mxu0 0
        %2047 = vmatprep.subr.bf16.mxu0 0
        %2048 = vmatpush1.bf16.msra.mxu0 0
        %2049 = vmatprep.subr.bf16.mxu0 0
        %2050 = vmatpush1.bf16.msra.mxu0 0
        %2051 = vmatprep.subr.bf16.mxu0 0
        %2052 = vmatpush1.bf16.msra.mxu0 0
        %2053 = vmatprep.subr.bf16.mxu0 0
        %2054 = vmatpush1.bf16.msra.mxu0 0
        %2055 = vmatprep.subr.bf16.mxu0 0
        %2056 = vmatpush1.bf16.msra.mxu0 0
        %2057 = vmatprep.subr.bf16.mxu0 0
        %2058 = vmatpush1.bf16.msra.mxu0 0
        %2059 = vmatprep.subr.bf16.mxu0 0
        %2060 = vmatpush1.bf16.msra.mxu0 0
        %2061 = vmatprep.subr.bf16.mxu0 0
        %2062 = vmatpush1.bf16.msra.mxu0 0
        %2063 = vmatprep.subr.bf16.mxu0 0
        %2064 = vmatpush1.bf16.msra.mxu0 0
        %2065 = vmatprep.mubr.bf16.mxu0 0
        %2066 = vmatmul.mubr.bf16.gmra.mrb[0].mxu0 %v2031
        %v2067 = vpop.f32.mrb[0].mxu0
        %v2068 = vadd.f32 0.0, %v2067
        %v2069 = vpop.f32.mrb[0].mxu0
        %v2070 = vpop.f32.mrb[0].mxu0
        %v2071 = vadd.f32 0.0, %v2070
        %v2072 = vpop.f32.mrb[0].mxu0
        %2073 = vdwg.mxu0
        %v2075 = vsel %vm1801, %v1980, 0
        %2077 = vmatprep.subr.bf16.mxu0 0
        %2078 = vmatpush1.bf16.msra.mxu0 %v1372
        %2079 = vmatprep.subr.bf16.mxu0 0
        %2080 = vmatpush1.bf16.msra.mxu0 0
        %2081 = vmatprep.subr.bf16.mxu0 0
        %2082 = vmatpush1.bf16.msra.mxu0 0
        %2083 = vmatprep.subr.bf16.mxu0 0
        %2084 = vmatpush1.bf16.msra.mxu0 0
        %2085 = vmatprep.subr.bf16.mxu0 0
        %2086 = vmatpush1.bf16.msra.mxu0 0
        %2087 = vmatprep.subr.bf16.mxu0 0
        %2088 = vmatpush1.bf16.msra.mxu0 0
        %2089 = vmatprep.subr.bf16.mxu0 0
        %2090 = vmatpush1.bf16.msra.mxu0 0
        %2091 = vmatprep.subr.bf16.mxu0 0
        %2092 = vmatpush1.bf16.msra.mxu0 0
        %2093 = vmatprep.subr.bf16.mxu0 0
        %2094 = vmatpush1.bf16.msra.mxu0 0
        %2095 = vmatprep.subr.bf16.mxu0 0
        %2096 = vmatpush1.bf16.msra.mxu0 0
        %2097 = vmatprep.subr.bf16.mxu0 0
        %2098 = vmatpush1.bf16.msra.mxu0 0
        %2099 = vmatprep.subr.bf16.mxu0 0
        %2100 = vmatpush1.bf16.msra.mxu0 0
        %2101 = vmatprep.subr.bf16.mxu0 0
        %2102 = vmatpush1.bf16.msra.mxu0 0
        %2103 = vmatprep.subr.bf16.mxu0 0
        %2104 = vmatpush1.bf16.msra.mxu0 0
        %2105 = vmatprep.subr.bf16.mxu0 0
        %2106 = vmatpush1.bf16.msra.mxu0 0
        %2107 = vmatprep.subr.bf16.mxu0 0
        %2108 = vmatpush1.bf16.msra.mxu0 0
        %2109 = vmatprep.mubr.bf16.mxu0 0
        %2110 = vmatmul.mubr.bf16.gmra.mrb[0].mxu0 %v2075
        %v2111 = vpop.f32.mrb[0].mxu0
        %v2112 = vadd.f32 0.0, %v2111
        %v2113 = vpop.f32.mrb[0].mxu0
        %v2114 = vpop.f32.mrb[0].mxu0
        %v2115 = vadd.f32 0.0, %v2114
        %v2116 = vpop.f32.mrb[0].mxu0
        %2117 = vdwg.mxu0
        %v2119 = vsel %vm1801, %v1981, 0
        %2121 = vmatprep.subr.bf16.mxu0 0
        %2122 = vmatpush1.bf16.msra.mxu0 %v1373
        %2123 = vmatprep.subr.bf16.mxu0 0
        %2124 = vmatpush1.bf16.msra.mxu0 0
        %2125 = vmatprep.subr.bf16.mxu0 0
        %2126 = vmatpush1.bf16.msra.mxu0 0
        %2127 = vmatprep.subr.bf16.mxu0 0
        %2128 = vmatpush1.bf16.msra.mxu0 0
        %2129 = vmatprep.subr.bf16.mxu0 0
        %2130 = vmatpush1.bf16.msra.mxu0 0
        %2131 = vmatprep.subr.bf16.mxu0 0
        %2132 = vmatpush1.bf16.msra.mxu0 0
        %2133 = vmatprep.subr.bf16.mxu0 0
        %2134 = vmatpush1.bf16.msra.mxu0 0
        %2135 = vmatprep.subr.bf16.mxu0 0
        %2136 = vmatpush1.bf16.msra.mxu0 0
        %2137 = vmatprep.subr.bf16.mxu0 0
        %2138 = vmatpush1.bf16.msra.mxu0 0
        %2139 = vmatprep.subr.bf16.mxu0 0
        %2140 = vmatpush1.bf16.msra.mxu0 0
        %2141 = vmatprep.subr.bf16.mxu0 0
        %2142 = vmatpush1.bf16.msra.mxu0 0
        %2143 = vmatprep.subr.bf16.mxu0 0
        %2144 = vmatpush1.bf16.msra.mxu0 0
        %2145 = vmatprep.subr.bf16.mxu0 0
        %2146 = vmatpush1.bf16.msra.mxu0 0
        %2147 = vmatprep.subr.bf16.mxu0 0
        %2148 = vmatpush1.bf16.msra.mxu0 0
        %2149 = vmatprep.subr.bf16.mxu0 0
        %2150 = vmatpush1.bf16.msra.mxu0 0
        %2151 = vmatprep.subr.bf16.mxu0 0
        %2152 = vmatpush1.bf16.msra.mxu0 0
        %2153 = vmatprep.mubr.bf16.mxu0 0
        %2154 = vmatmul.mubr.bf16.gmra.mrb[0].mxu0 %v2119
        %v2155 = vpop.f32.mrb[0].mxu0
        %v2156 = vadd.f32 0.0, %v2155
        %v2157 = vpop.f32.mrb[0].mxu0
        %v2158 = vpop.f32.mrb[0].mxu0
        %v2159 = vadd.f32 0.0, %v2158
        %v2160 = vpop.f32.mrb[0].mxu0
        %2161 = vdwg.mxu0
        %v2163 = vsel %vm1801, %v1982, 0
        %2165 = vmatprep.subr.bf16.mxu0 0
        %2166 = vmatpush1.bf16.msra.mxu0 %v1374
        %2167 = vmatprep.subr.bf16.mxu0 0
        %2168 = vmatpush1.bf16.msra.mxu0 0
        %2169 = vmatprep.subr.bf16.mxu0 0
        %2170 = vmatpush1.bf16.msra.mxu0 0
        %2171 = vmatprep.subr.bf16.mxu0 0
        %2172 = vmatpush1.bf16.msra.mxu0 0
        %2173 = vmatprep.subr.bf16.mxu0 0
        %2174 = vmatpush1.bf16.msra.mxu0 0
        %2175 = vmatprep.subr.bf16.mxu0 0
        %2176 = vmatpush1.bf16.msra.mxu0 0
        %2177 = vmatprep.subr.bf16.mxu0 0
        %2178 = vmatpush1.bf16.msra.mxu0 0
        %2179 = vmatprep.subr.bf16.mxu0 0
        %2180 = vmatpush1.bf16.msra.mxu0 0
        %2181 = vmatprep.subr.bf16.mxu0 0
        %2182 = vmatpush1.bf16.msra.mxu0 0
        %2183 = vmatprep.subr.bf16.mxu0 0
        %2184 = vmatpush1.bf16.msra.mxu0 0
        %2185 = vmatprep.subr.bf16.mxu0 0
        %2186 = vmatpush1.bf16.msra.mxu0 0
        %2187 = vmatprep.subr.bf16.mxu0 0
        %2188 = vmatpush1.bf16.msra.mxu0 0
        %2189 = vmatprep.subr.bf16.mxu0 0
        %2190 = vmatpush1.bf16.msra.mxu0 0
        %2191 = vmatprep.subr.bf16.mxu0 0
        %2192 = vmatpush1.bf16.msra.mxu0 0
        %2193 = vmatprep.subr.bf16.mxu0 0
        %2194 = vmatpush1.bf16.msra.mxu0 0
        %2195 = vmatprep.subr.bf16.mxu0 0
        %2196 = vmatpush1.bf16.msra.mxu0 0
        %2197 = vmatprep.mubr.bf16.mxu0 0
        %2198 = vmatmul.mubr.bf16.gmra.mrb[0].mxu0 %v2163
        %v2199 = vpop.f32.mrb[0].mxu0
        %v2200 = vadd.f32 0.0, %v2199
        %v2201 = vpop.f32.mrb[0].mxu0
        %v2202 = vpop.f32.mrb[0].mxu0
        %v2203 = vadd.f32 0.0, %v2202
        %v2204 = vpop.f32.mrb[0].mxu0
        %2205 = vdwg.mxu0
        %v2207 = vsel %vm1801, %v1983, 0
        %2209 = vmatprep.subr.bf16.mxu0 0
        %2210 = vmatpush1.bf16.msra.mxu0 %v1375
        %2211 = vmatprep.subr.bf16.mxu0 0
        %2212 = vmatpush1.bf16.msra.mxu0 0
        %2213 = vmatprep.subr.bf16.mxu0 0
        %2214 = vmatpush1.bf16.msra.mxu0 0
        %2215 = vmatprep.subr.bf16.mxu0 0
        %2216 = vmatpush1.bf16.msra.mxu0 0
        %2217 = vmatprep.subr.bf16.mxu0 0
        %2218 = vmatpush1.bf16.msra.mxu0 0
        %2219 = vmatprep.subr.bf16.mxu0 0
        %2220 = vmatpush1.bf16.msra.mxu0 0
        %2221 = vmatprep.subr.bf16.mxu0 0
        %2222 = vmatpush1.bf16.msra.mxu0 0
        %2223 = vmatprep.subr.bf16.mxu0 0
        %2224 = vmatpush1.bf16.msra.mxu0 0
        %2225 = vmatprep.subr.bf16.mxu0 0
        %2226 = vmatpush1.bf16.msra.mxu0 0
        %2227 = vmatprep.subr.bf16.mxu0 0
        %2228 = vmatpush1.bf16.msra.mxu0 0
        %2229 = vmatprep.subr.bf16.mxu0 0
        %2230 = vmatpush1.bf16.msra.mxu0 0
        %2231 = vmatprep.subr.bf16.mxu0 0
        %2232 = vmatpush1.bf16.msra.mxu0 0
        %2233 = vmatprep.subr.bf16.mxu0 0
        %2234 = vmatpush1.bf16.msra.mxu0 0
        %2235 = vmatprep.subr.bf16.mxu0 0
        %2236 = vmatpush1.bf16.msra.mxu0 0
        %2237 = vmatprep.subr.bf16.mxu0 0
        %2238 = vmatpush1.bf16.msra.mxu0 0
        %2239 = vmatprep.subr.bf16.mxu0 0
        %2240 = vmatpush1.bf16.msra.mxu0 0
        %2241 = vmatprep.mubr.bf16.mxu0 0
        %2242 = vmatmul.mubr.bf16.gmra.mrb[0].mxu0 %v2207
        %v2243 = vpop.f32.mrb[0].mxu0
        %v2244 = vadd.f32 0.0, %v2243
        %v2245 = vpop.f32.mrb[0].mxu0
        %v2246 = vpop.f32.mrb[0].mxu0
        %v2247 = vadd.f32 0.0, %v2246
        %v2248 = vpop.f32.mrb[0].mxu0
        %2249 = vdwg.mxu0
        %v2251 = vsel %vm1801, %v1984, 0
        %2253 = vmatprep.subr.bf16.mxu0 0
        %2254 = vmatpush1.bf16.msra.mxu0 %v1376
        %2255 = vmatprep.subr.bf16.mxu0 0
        %2256 = vmatpush1.bf16.msra.mxu0 0
        %2257 = vmatprep.subr.bf16.mxu0 0
        %2258 = vmatpush1.bf16.msra.mxu0 0
        %2259 = vmatprep.subr.bf16.mxu0 0
        %2260 = vmatpush1.bf16.msra.mxu0 0
        %2261 = vmatprep.subr.bf16.mxu0 0
        %2262 = vmatpush1.bf16.msra.mxu0 0
        %2263 = vmatprep.subr.bf16.mxu0 0
        %2264 = vmatpush1.bf16.msra.mxu0 0
        %2265 = vmatprep.subr.bf16.mxu0 0
        %2266 = vmatpush1.bf16.msra.mxu0 0
        %2267 = vmatprep.subr.bf16.mxu0 0
        %2268 = vmatpush1.bf16.msra.mxu0 0
        %2269 = vmatprep.subr.bf16.mxu0 0
        %2270 = vmatpush1.bf16.msra.mxu0 0
        %2271 = vmatprep.subr.bf16.mxu0 0
        %2272 = vmatpush1.bf16.msra.mxu0 0
        %2273 = vmatprep.subr.bf16.mxu0 0
        %2274 = vmatpush1.bf16.msra.mxu0 0
        %2275 = vmatprep.subr.bf16.mxu0 0
        %2276 = vmatpush1.bf16.msra.mxu0 0
        %2277 = vmatprep.subr.bf16.mxu0 0
        %2278 = vmatpush1.bf16.msra.mxu0 0
        %2279 = vmatprep.subr.bf16.mxu0 0
        %2280 = vmatpush1.bf16.msra.mxu0 0
        %2281 = vmatprep.subr.bf16.mxu0 0
        %2282 = vmatpush1.bf16.msra.mxu0 0
        %2283 = vmatprep.subr.bf16.mxu0 0
        %2284 = vmatpush1.bf16.msra.mxu0 0
        %2285 = vmatprep.mubr.bf16.mxu0 0
        %2286 = vmatmul.mubr.bf16.gmra.mrb[0].mxu0 %v2251
        %v2287 = vpop.f32.mrb[0].mxu0
        %v2288 = vadd.f32 0.0, %v2287
        %v2289 = vpop.f32.mrb[0].mxu0
        %v2290 = vpop.f32.mrb[0].mxu0
        %v2291 = vadd.f32 0.0, %v2290
        %v2292 = vpop.f32.mrb[0].mxu0
        %2293 = vdwg.mxu0
        %v2295 = vsel %vm1801, %v1985, 0
        %2297 = vmatprep.subr.bf16.mxu0 0
        %2298 = vmatpush1.bf16.msra.mxu0 %v1377
        %2299 = vmatprep.subr.bf16.mxu0 0
        %2300 = vmatpush1.bf16.msra.mxu0 0
        %2301 = vmatprep.subr.bf16.mxu0 0
        %2302 = vmatpush1.bf16.msra.mxu0 0
        %2303 = vmatprep.subr.bf16.mxu0 0
        %2304 = vmatpush1.bf16.msra.mxu0 0
        %2305 = vmatprep.subr.bf16.mxu0 0
        %2306 = vmatpush1.bf16.msra.mxu0 0
        %2307 = vmatprep.subr.bf16.mxu0 0
        %2308 = vmatpush1.bf16.msra.mxu0 0
        %2309 = vmatprep.subr.bf16.mxu0 0
        %2310 = vmatpush1.bf16.msra.mxu0 0
        %2311 = vmatprep.subr.bf16.mxu0 0
        %2312 = vmatpush1.bf16.msra.mxu0 0
        %2313 = vmatprep.subr.bf16.mxu0 0
        %2314 = vmatpush1.bf16.msra.mxu0 0
        %2315 = vmatprep.subr.bf16.mxu0 0
        %2316 = vmatpush1.bf16.msra.mxu0 0
        %2317 = vmatprep.subr.bf16.mxu0 0
        %2318 = vmatpush1.bf16.msra.mxu0 0
        %2319 = vmatprep.subr.bf16.mxu0 0
        %2320 = vmatpush1.bf16.msra.mxu0 0
        %2321 = vmatprep.subr.bf16.mxu0 0
        %2322 = vmatpush1.bf16.msra.mxu0 0
        %2323 = vmatprep.subr.bf16.mxu0 0
        %2324 = vmatpush1.bf16.msra.mxu0 0
        %2325 = vmatprep.subr.bf16.mxu0 0
        %2326 = vmatpush1.bf16.msra.mxu0 0
        %2327 = vmatprep.subr.bf16.mxu0 0
        %2328 = vmatpush1.bf16.msra.mxu0 0
        %2329 = vmatprep.mubr.bf16.mxu0 0
        %2330 = vmatmul.mubr.bf16.gmra.mrb[0].mxu0 %v2295
        %v2331 = vpop.f32.mrb[0].mxu0
        %v2332 = vadd.f32 0.0, %v2331
        %v2333 = vpop.f32.mrb[0].mxu0
        %v2334 = vpop.f32.mrb[0].mxu0
        %v2335 = vadd.f32 0.0, %v2334
        %v2336 = vpop.f32.mrb[0].mxu0
        %2337 = vdwg.mxu0
        %2342 = vrot.lane.b32.xlu0 %v2112, 32
        %v2343 = vpop.permute.xlu0 %2342
        %2344 = vrot.lane.b32.xlu0 %v2115, 32
        %v2345 = vpop.permute.xlu0 %2344
        %2346 = vrot.lane.b32.xlu0 %v2156, 32
        %v2347 = vpop.permute.xlu0 %2346
        %2348 = vrot.lane.b32.xlu0 %v2159, 32
        %v2349 = vpop.permute.xlu0 %2348
        %2358 = vrot.lane.b32.xlu0 %v2200, 64
        %v2359 = vpop.permute.xlu0 %2358
        %2360 = vrot.lane.b32.xlu0 %v2203, 64
        %v2361 = vpop.permute.xlu0 %2360
        %2362 = vrot.lane.b32.xlu0 %v2244, 64
        %v2363 = vpop.permute.xlu0 %2362
        %2364 = vrot.lane.b32.xlu0 %v2247, 64
        %v2365 = vpop.permute.xlu0 %2364
        %2374 = vrot.lane.b32.xlu0 %v2288, 96
        %v2375 = vpop.permute.xlu0 %2374
        %2376 = vrot.lane.b32.xlu0 %v2291, 96
        %v2377 = vpop.permute.xlu0 %2376
        %2378 = vrot.lane.b32.xlu0 %v2332, 96
        %v2379 = vpop.permute.xlu0 %2378
        %2380 = vrot.lane.b32.xlu0 %v2335, 96
        %v2381 = vpop.permute.xlu0 %2380
        %v2386 = vsel %vm1378, %v2024, %v2343
        %v2387 = vsel %vm1378, %v2027, %v2345
        %v2388 = vsel %vm1378, %v2068, %v2347
        %v2389 = vsel %vm1378, %v2071, %v2349
        %vm2390 = vcmask 523264
        %v2391 = vsel %vm2390, %v2386, %v2359
        %v2392 = vsel %vm2390, %v2387, %v2361
        %v2393 = vsel %vm2390, %v2388, %v2363
        %v2394 = vsel %vm2390, %v2389, %v2365
        %vm2395 = vcmask 785408
        %v2396 = vsel %vm2395, %v2391, %v2375
        %v2397 = vsel %vm2395, %v2392, %v2377
        %v2398 = vsel %vm2395, %v2393, %v2379
        %v2399 = vsel %vm2395, %v2394, %v2381
        %v2400 = vpack.c.bf16 %v2397, %v2396
        %v2401 = vpack.c.bf16 %v2399, %v2398
        %v2402 = vld [vmem:[%s736] sm:$0xf]
        %v2403 = vld [vmem:[%s736 + $0x4] sm:$0xf]
        %v2404 = vld [vmem:[%s736 + $0x8] sm:$0xf]
        %v2405 = vld [vmem:[%s736 + $0xc] sm:$0xf]
        %v2406 = vld [vmem:[%s736 + $0x10] sm:$0xf]
        %v2407 = vld [vmem:[%s736 + $0x14] sm:$0xf]
        %v2408 = vld [vmem:[%s736 + $0x18] sm:$0xf]
        %v2409 = vld [vmem:[%s736 + $0x1c] sm:$0xf]
        %v2410 = vld [vmem:[%s736 + $0x20] sm:$0xf]
        %v2411 = vld [vmem:[%s736 + $0x24] sm:$0xf]
        %v2412 = vld [vmem:[%s736 + $0x28] sm:$0xf]
        %v2413 = vld [vmem:[%s736 + $0x2c] sm:$0xf]
        %v2414 = vld [vmem:[%s736 + $0x30] sm:$0xf]
        %v2415 = vld [vmem:[%s736 + $0x34] sm:$0xf]
        %v2416 = vld [vmem:[%s736 + $0x38] sm:$0xf]
        %v2417 = vld [vmem:[%s736 + $0x3c] sm:$0xf]
        %v2418 = vld [vmem:[%s839] sm:$0x1]
        %v2420 = vlaneseq
        %v2421 = vshrl.u32 %v2420, 7
        %v2422 = vsub.s32 0, %v2421
        %v2423 = vrot.slane %v2418, %v2422
        %v2441 = vunpack.c.l.b16 %v2402
        %v2442 = vunpack.c.l.b16 %v2403
        %v2443 = vunpack.c.l.b16 %v2404
        %v2444 = vunpack.c.l.b16 %v2405
        %v2445 = vunpack.c.l.b16 %v2406
        %v2446 = vunpack.c.l.b16 %v2407
        %v2447 = vunpack.c.l.b16 %v2408
        %v2448 = vunpack.c.l.b16 %v2409
        %v2449 = vunpack.c.l.b16 %v2410
        %v2450 = vunpack.c.l.b16 %v2411
        %v2451 = vunpack.c.l.b16 %v2412
        %v2452 = vunpack.c.l.b16 %v2413
        %v2453 = vunpack.c.l.b16 %v2414
        %v2454 = vunpack.c.l.b16 %v2415
        %v2455 = vunpack.c.l.b16 %v2416
        %v2456 = vunpack.c.l.b16 %v2417
        %v2457 = vpack.c.b16 %v2442, %v2441
        %v2458 = vpack.c.b16 %v2444, %v2443
        %v2459 = vpack.c.b16 %v2446, %v2445
        %v2460 = vpack.c.b16 %v2448, %v2447
        %v2461 = vpack.c.b16 %v2450, %v2449
        %v2462 = vpack.c.b16 %v2452, %v2451
        %v2463 = vpack.c.b16 %v2454, %v2453
        %v2464 = vpack.c.b16 %v2456, %v2455
        %2473 = vmatprep.subr.bf16.mxu0 0
        %2474 = vmatpush1.bf16.msra.mxu0 %v2457
        %2475 = vmatprep.subr.bf16.mxu0 0
        %2476 = vmatpush1.bf16.msra.mxu0 %v2458
        %2477 = vmatprep.subr.bf16.mxu0 0
        %2478 = vmatpush1.bf16.msra.mxu0 %v2459
        %2479 = vmatprep.subr.bf16.mxu0 0
        %2480 = vmatpush1.bf16.msra.mxu0 %v2460
        %2481 = vmatprep.subr.bf16.mxu0 0
        %2482 = vmatpush1.bf16.msra.mxu0 %v2461
        %2483 = vmatprep.subr.bf16.mxu0 0
        %2484 = vmatpush1.bf16.msra.mxu0 %v2462
        %2485 = vmatprep.subr.bf16.mxu0 0
        %2486 = vmatpush1.bf16.msra.mxu0 %v2463
        %2487 = vmatprep.subr.bf16.mxu0 0
        %2488 = vmatpush1.bf16.msra.mxu0 %v2464
        %2489 = vmatprep.subr.bf16.mxu0 0
        %2490 = vmatpush1.bf16.msra.mxu0 0
        %2491 = vmatprep.subr.bf16.mxu0 0
        %2492 = vmatpush1.bf16.msra.mxu0 0
        %2493 = vmatprep.subr.bf16.mxu0 0
        %2494 = vmatpush1.bf16.msra.mxu0 0
        %2495 = vmatprep.subr.bf16.mxu0 0
        %2496 = vmatpush1.bf16.msra.mxu0 0
        %2497 = vmatprep.subr.bf16.mxu0 0
        %2498 = vmatpush1.bf16.msra.mxu0 0
        %2499 = vmatprep.subr.bf16.mxu0 0
        %2500 = vmatpush1.bf16.msra.mxu0 0
        %2501 = vmatprep.subr.bf16.mxu0 0
        %2502 = vmatpush1.bf16.msra.mxu0 0
        %2503 = vmatprep.subr.bf16.mxu0 0
        %2504 = vmatpush1.bf16.msra.mxu0 0
        %2505 = vmatprep.mubr.bf16.mxu0 0
        %2506 = vmatmul.mubr.bf16.gmra.mrb[0].mxu0 %v2400
        %v2507 = vpop.f32.mrb[0].mxu0
        %v2508 = vadd.f32 %v2423, %v2507
        %v2509 = vpop.f32.mrb[0].mxu0
        %v2510 = vpop.f32.mrb[0].mxu0
        %v2511 = vadd.f32 %v2423, %v2510
        %v2512 = vpop.f32.mrb[0].mxu0
        %2513 = vmatprep.mubr.bf16.mxu0 0
        %2514 = vmatmul.mubr.bf16.gmra.mrb[0].mxu0 %v2401
        %v2515 = vpop.f32.mrb[0].mxu0
        %v2516 = vadd.f32 %v2423, %v2515
        %v2517 = vpop.f32.mrb[0].mxu0
        %v2518 = vpop.f32.mrb[0].mxu0
        %v2519 = vadd.f32 %v2423, %v2518
        %v2520 = vpop.f32.mrb[0].mxu0
        %2521 = vdwg.mxu0
        %v2522 = vadd.f32 %v949, %v2508
        %v2523 = vadd.f32 %v950, %v2511
        %v2524 = vadd.f32 %v951, %v2516
        %v2525 = vadd.f32 %v952, %v2519
        %v2526 = vld [vmem:[%s842] sm:$0x1]
        %v2527 = vld [vmem:[%s845] sm:$0x1]
        %2528 = vadd.xlane.f32.xlu0 %v2522
        %v2529 = vpop.xlane.xlu0 %2528
        %2530 = vadd.xlane.f32.xlu0 %v2523
        %v2531 = vpop.xlane.xlu0 %2530
        %2532 = vadd.xlane.f32.xlu0 %v2524
        %v2533 = vpop.xlane.xlu0 %2532
        %2534 = vadd.xlane.f32.xlu0 %v2525
        %v2535 = vpop.xlane.xlu0 %2534
        %v2536 = vrcp.pop 128.0
        %v2537 = vmul.f32 %v2529, %v2536
        %v2538 = vmul.f32 %v2531, %v2536
        %v2539 = vmul.f32 %v2533, %v2536
        %v2540 = vmul.f32 %v2535, %v2536
        %v2541 = vsub.f32 %v2522, %v2537
        %v2542 = vsub.f32 %v2523, %v2538
        %v2543 = vsub.f32 %v2524, %v2539
        %v2544 = vsub.f32 %v2525, %v2540
        %v2545 = vmul.f32 %v2541, %v2541
        %v2546 = vmul.f32 %v2542, %v2542
        %v2547 = vmul.f32 %v2543, %v2543
        %v2548 = vmul.f32 %v2544, %v2544
        %2549 = vadd.xlane.f32.xlu0 %v2545
        %v2550 = vpop.xlane.xlu0 %2549
        %2551 = vadd.xlane.f32.xlu0 %v2546
        %v2552 = vpop.xlane.xlu0 %2551
        %2553 = vadd.xlane.f32.xlu0 %v2547
        %v2554 = vpop.xlane.xlu0 %2553
        %2555 = vadd.xlane.f32.xlu0 %v2548
        %v2556 = vpop.xlane.xlu0 %2555
        %v2557 = vmul.f32 %v2550, %v2536
        %v2558 = vmul.f32 %v2552, %v2536
        %v2559 = vmul.f32 %v2554, %v2536
        %v2560 = vmul.f32 %v2556, %v2536
        %v2561 = vadd.f32 %v2557, 1e-12
        %v2562 = vadd.f32 %v2558, 1e-12
        %v2563 = vadd.f32 %v2559, 1e-12
        %v2564 = vadd.f32 %v2560, 1e-12
        %v2565 = vrsqrt.pop %v2561
        %v2566 = vrsqrt.pop %v2562
        %v2567 = vrsqrt.pop %v2563
        %v2568 = vrsqrt.pop %v2564
        %v2569 = vmul.f32 %v2541, %v2565
        %v2570 = vmul.f32 %v2542, %v2566
        %v2571 = vmul.f32 %v2543, %v2567
        %v2572 = vmul.f32 %v2544, %v2568
        %v2574 = vlaneseq
        %v2575 = vshrl.u32 %v2574, 7
        %v2576 = vsub.s32 0, %v2575
        %v2577 = vrot.slane %v2526, %v2576
        %v2579 = vmul.f32 %v2569, %v2577
        %v2580 = vmul.f32 %v2570, %v2577
        %v2581 = vmul.f32 %v2571, %v2577
        %v2582 = vmul.f32 %v2572, %v2577
        %v2584 = vlaneseq
        %v2585 = vshrl.u32 %v2584, 7
        %v2586 = vsub.s32 0, %v2585
        %v2587 = vrot.slane %v2527, %v2586
        %v2589 = vadd.f32 %v2579, %v2587
        %v2590 = vadd.f32 %v2580, %v2587
        %v2591 = vadd.f32 %v2581, %v2587
        %v2592 = vadd.f32 %v2582, %v2587
        %v2593 = vpack.c.bf16 %v2590, %v2589
        %v2594 = vpack.c.bf16 %v2592, %v2591
        %v2595 = vld [vmem:[%s850] sm:$0xff]
        %v2596 = vld [vmem:[%s850 + $0x8] sm:$0xff]
        %v2597 = vld [vmem:[%s850 + $0x10] sm:$0xff]
        %v2598 = vld [vmem:[%s850 + $0x18] sm:$0xff]
        %v2599 = vld [vmem:[%s850 + $0x20] sm:$0xff]
        %v2600 = vld [vmem:[%s850 + $0x28] sm:$0xff]
        %v2601 = vld [vmem:[%s850 + $0x30] sm:$0xff]
        %v2602 = vld [vmem:[%s850 + $0x38] sm:$0xff]
        %v2603 = vld [vmem:[%s850 + $0x40] sm:$0xff]
        %v2604 = vld [vmem:[%s850 + $0x48] sm:$0xff]
        %v2605 = vld [vmem:[%s850 + $0x50] sm:$0xff]
        %v2606 = vld [vmem:[%s850 + $0x58] sm:$0xff]
        %v2607 = vld [vmem:[%s850 + $0x60] sm:$0xff]
        %v2608 = vld [vmem:[%s850 + $0x68] sm:$0xff]
        %v2609 = vld [vmem:[%s850 + $0x70] sm:$0xff]
        %v2610 = vld [vmem:[%s850 + $0x78] sm:$0xff]
        %v2611 = vld [vmem:[%s850 + $0x80] sm:$0xff]
        %v2612 = vld [vmem:[%s850 + $0x88] sm:$0xff]
        %v2613 = vld [vmem:[%s850 + $0x90] sm:$0xff]
        %v2614 = vld [vmem:[%s850 + $0x98] sm:$0xff]
        %v2615 = vld [vmem:[%s850 + $0xa0] sm:$0xff]
        %v2616 = vld [vmem:[%s850 + $0xa8] sm:$0xff]
        %v2617 = vld [vmem:[%s850 + $0xb0] sm:$0xff]
        %v2618 = vld [vmem:[%s850 + $0xb8] sm:$0xff]
        %v2619 = vld [vmem:[%s850 + $0xc0] sm:$0xff]
        %v2620 = vld [vmem:[%s850 + $0xc8] sm:$0xff]
        %v2621 = vld [vmem:[%s850 + $0xd0] sm:$0xff]
        %v2622 = vld [vmem:[%s850 + $0xd8] sm:$0xff]
        %v2623 = vld [vmem:[%s850 + $0xe0] sm:$0xff]
        %v2624 = vld [vmem:[%s850 + $0xe8] sm:$0xff]
        %v2625 = vld [vmem:[%s850 + $0xf0] sm:$0xff]
        %v2626 = vld [vmem:[%s850 + $0xf8] sm:$0xff]
        %v2627 = vld [vmem:[%s854] sm:$0xf]
        %v2629 = vlaneseq
        %v2630 = vshrl.u32 %v2629, 7
        %v2631 = vsub.s32 0, %v2630
        %v2632 = vrot.slane %v2627, %v2631
        %v2633 = vlaneseq
        %v2634 = vshrl.u32 %v2633, 7
        %v2635 = vsub.s32 1, %v2634
        %v2636 = vrot.slane %v2627, %v2635
        %v2637 = vlaneseq
        %v2638 = vshrl.u32 %v2637, 7
        %v2639 = vsub.s32 2, %v2638
        %v2640 = vrot.slane %v2627, %v2639
        %v2641 = vlaneseq
        %v2642 = vshrl.u32 %v2641, 7
        %v2643 = vsub.s32 3, %v2642
        %v2644 = vrot.slane %v2627, %v2643
        %v2681 = vunpack.c.l.b16 %v2595
        %v2682 = vunpack.c.h.b16 %v2595
        %v2683 = vunpack.c.l.b16 %v2596
        %v2684 = vunpack.c.h.b16 %v2596
        %v2685 = vunpack.c.l.b16 %v2597
        %v2686 = vunpack.c.h.b16 %v2597
        %v2687 = vunpack.c.l.b16 %v2598
        %v2688 = vunpack.c.h.b16 %v2598
        %v2689 = vunpack.c.l.b16 %v2599
        %v2690 = vunpack.c.h.b16 %v2599
        %v2691 = vunpack.c.l.b16 %v2600
        %v2692 = vunpack.c.h.b16 %v2600
        %v2693 = vunpack.c.l.b16 %v2601
        %v2694 = vunpack.c.h.b16 %v2601
        %v2695 = vunpack.c.l.b16 %v2602
        %v2696 = vunpack.c.h.b16 %v2602
        %v2697 = vunpack.c.l.b16 %v2603
        %v2698 = vunpack.c.h.b16 %v2603
        %v2699 = vunpack.c.l.b16 %v2604
        %v2700 = vunpack.c.h.b16 %v2604
        %v2701 = vunpack.c.l.b16 %v2605
        %v2702 = vunpack.c.h.b16 %v2605
        %v2703 = vunpack.c.l.b16 %v2606
        %v2704 = vunpack.c.h.b16 %v2606
        %v2705 = vunpack.c.l.b16 %v2607
        %v2706 = vunpack.c.h.b16 %v2607
        %v2707 = vunpack.c.l.b16 %v2608
        %v2708 = vunpack.c.h.b16 %v2608
        %v2709 = vunpack.c.l.b16 %v2609
        %v2710 = vunpack.c.h.b16 %v2609
        %v2711 = vunpack.c.l.b16 %v2610
        %v2712 = vunpack.c.h.b16 %v2610
        %v2713 = vunpack.c.l.b16 %v2611
        %v2714 = vunpack.c.h.b16 %v2611
        %v2715 = vunpack.c.l.b16 %v2612
        %v2716 = vunpack.c.h.b16 %v2612
        %v2717 = vunpack.c.l.b16 %v2613
        %v2718 = vunpack.c.h.b16 %v2613
        %v2719 = vunpack.c.l.b16 %v2614
        %v2720 = vunpack.c.h.b16 %v2614
        %v2721 = vunpack.c.l.b16 %v2615
        %v2722 = vunpack.c.h.b16 %v2615
        %v2723 = vunpack.c.l.b16 %v2616
        %v2724 = vunpack.c.h.b16 %v2616
        %v2725 = vunpack.c.l.b16 %v2617
        %v2726 = vunpack.c.h.b16 %v2617
        %v2727 = vunpack.c.l.b16 %v2618
        %v2728 = vunpack.c.h.b16 %v2618
        %v2729 = vunpack.c.l.b16 %v2619
        %v2730 = vunpack.c.h.b16 %v2619
        %v2731 = vunpack.c.l.b16 %v2620
        %v2732 = vunpack.c.h.b16 %v2620
        %v2733 = vunpack.c.l.b16 %v2621
        %v2734 = vunpack.c.h.b16 %v2621
        %v2735 = vunpack.c.l.b16 %v2622
        %v2736 = vunpack.c.h.b16 %v2622
        %v2737 = vunpack.c.l.b16 %v2623
        %v2738 = vunpack.c.h.b16 %v2623
        %v2739 = vunpack.c.l.b16 %v2624
        %v2740 = vunpack.c.h.b16 %v2624
        %v2741 = vunpack.c.l.b16 %v2625
        %v2742 = vunpack.c.h.b16 %v2625
        %v2743 = vunpack.c.l.b16 %v2626
        %v2744 = vunpack.c.h.b16 %v2626
        %v2745 = vpack.c.b16 %v2685, %v2681
        %v2746 = vpack.c.b16 %v2686, %v2682
        %v2747 = vpack.c.b16 %v2687, %v2683
        %v2748 = vpack.c.b16 %v2688, %v2684
        %v2749 = vpack.c.b16 %v2693, %v2689
        %v2750 = vpack.c.b16 %v2694, %v2690
        %v2751 = vpack.c.b16 %v2695, %v2691
        %v2752 = vpack.c.b16 %v2696, %v2692
        %v2753 = vpack.c.b16 %v2701, %v2697
        %v2754 = vpack.c.b16 %v2702, %v2698
        %v2755 = vpack.c.b16 %v2703, %v2699
        %v2756 = vpack.c.b16 %v2704, %v2700
        %v2757 = vpack.c.b16 %v2709, %v2705
        %v2758 = vpack.c.b16 %v2710, %v2706
        %v2759 = vpack.c.b16 %v2711, %v2707
        %v2760 = vpack.c.b16 %v2712, %v2708
        %v2761 = vpack.c.b16 %v2717, %v2713
        %v2762 = vpack.c.b16 %v2718, %v2714
        %v2763 = vpack.c.b16 %v2719, %v2715
        %v2764 = vpack.c.b16 %v2720, %v2716
        %v2765 = vpack.c.b16 %v2725, %v2721
        %v2766 = vpack.c.b16 %v2726, %v2722
        %v2767 = vpack.c.b16 %v2727, %v2723
        %v2768 = vpack.c.b16 %v2728, %v2724
        %v2769 = vpack.c.b16 %v2733, %v2729
        %v2770 = vpack.c.b16 %v2734, %v2730
        %v2771 = vpack.c.b16 %v2735, %v2731
        %v2772 = vpack.c.b16 %v2736, %v2732
        %v2773 = vpack.c.b16 %v2741, %v2737
        %v2774 = vpack.c.b16 %v2742, %v2738
        %v2775 = vpack.c.b16 %v2743, %v2739
        %v2776 = vpack.c.b16 %v2744, %v2740
        %2809 = vmatprep.subr.bf16.mxu0 %v2746
        %2810 = vmatpush1.bf16.msra.mxu0 %v2745
        %2811 = vmatprep.subr.bf16.mxu0 %v2750
        %2812 = vmatpush1.bf16.msra.mxu0 %v2749
        %2813 = vmatprep.subr.bf16.mxu0 %v2754
        %2814 = vmatpush1.bf16.msra.mxu0 %v2753
        %2815 = vmatprep.subr.bf16.mxu0 %v2758
        %2816 = vmatpush1.bf16.msra.mxu0 %v2757
        %2817 = vmatprep.subr.bf16.mxu0 %v2762
        %2818 = vmatpush1.bf16.msra.mxu0 %v2761
        %2819 = vmatprep.subr.bf16.mxu0 %v2766
        %2820 = vmatpush1.bf16.msra.mxu0 %v2765
        %2821 = vmatprep.subr.bf16.mxu0 %v2770
        %2822 = vmatpush1.bf16.msra.mxu0 %v2769
        %2823 = vmatprep.subr.bf16.mxu0 %v2774
        %2824 = vmatpush1.bf16.msra.mxu0 %v2773
        %2825 = vmatprep.subr.bf16.mxu0 0
        %2826 = vmatpush1.bf16.msra.mxu0 0
        %2827 = vmatprep.subr.bf16.mxu0 0
        %2828 = vmatpush1.bf16.msra.mxu0 0
        %2829 = vmatprep.subr.bf16.mxu0 0
        %2830 = vmatpush1.bf16.msra.mxu0 0
        %2831 = vmatprep.subr.bf16.mxu0 0
        %2832 = vmatpush1.bf16.msra.mxu0 0
        %2833 = vmatprep.subr.bf16.mxu0 0
        %2834 = vmatpush1.bf16.msra.mxu0 0
        %2835 = vmatprep.subr.bf16.mxu0 0
        %2836 = vmatpush1.bf16.msra.mxu0 0
        %2837 = vmatprep.subr.bf16.mxu0 0
        %2838 = vmatpush1.bf16.msra.mxu0 0
        %2839 = vmatprep.subr.bf16.mxu0 0
        %2840 = vmatpush1.bf16.msra.mxu0 0
        %2841 = vmatprep.mubr.bf16.mxu0 0
        %2842 = vmatmul.mubr.bf16.gmra.mrb[0].mxu0 %v2593
        %v2843 = vpop.f32.mrb[0].mxu0
        %v2844 = vadd.f32 %v2632, %v2843
        %v2845 = vpop.f32.mrb[0].mxu0
        %v2846 = vadd.f32 %v2636, %v2845
        %v2847 = vpop.f32.mrb[0].mxu0
        %v2848 = vadd.f32 %v2632, %v2847
        %v2849 = vpop.f32.mrb[0].mxu0
        %v2850 = vadd.f32 %v2636, %v2849
        %2851 = vmatprep.mubr.bf16.mxu0 0
        %2852 = vmatmul.mubr.bf16.gmra.mrb[0].mxu0 %v2594
        %v2853 = vpop.f32.mrb[0].mxu0
        %v2854 = vadd.f32 %v2632, %v2853
        %v2855 = vpop.f32.mrb[0].mxu0
        %v2856 = vadd.f32 %v2636, %v2855
        %v2857 = vpop.f32.mrb[0].mxu0
        %v2858 = vadd.f32 %v2632, %v2857
        %v2859 = vpop.f32.mrb[0].mxu0
        %v2860 = vadd.f32 %v2636, %v2859
        %2861 = vdwg.mxu0
        %2862 = vmatprep.subr.bf16.mxu0 %v2748
        %2863 = vmatpush1.bf16.msra.mxu0 %v2747
        %2864 = vmatprep.subr.bf16.mxu0 %v2752
        %2865 = vmatpush1.bf16.msra.mxu0 %v2751
        %2866 = vmatprep.subr.bf16.mxu0 %v2756
        %2867 = vmatpush1.bf16.msra.mxu0 %v2755
        %2868 = vmatprep.subr.bf16.mxu0 %v2760
        %2869 = vmatpush1.bf16.msra.mxu0 %v2759
        %2870 = vmatprep.subr.bf16.mxu0 %v2764
        %2871 = vmatpush1.bf16.msra.mxu0 %v2763
        %2872 = vmatprep.subr.bf16.mxu0 %v2768
        %2873 = vmatpush1.bf16.msra.mxu0 %v2767
        %2874 = vmatprep.subr.bf16.mxu0 %v2772
        %2875 = vmatpush1.bf16.msra.mxu0 %v2771
        %2876 = vmatprep.subr.bf16.mxu0 %v2776
        %2877 = vmatpush1.bf16.msra.mxu0 %v2775
        %2878 = vmatprep.subr.bf16.mxu0 0
        %2879 = vmatpush1.bf16.msra.mxu0 0
        %2880 = vmatprep.subr.bf16.mxu0 0
        %2881 = vmatpush1.bf16.msra.mxu0 0
        %2882 = vmatprep.subr.bf16.mxu0 0
        %2883 = vmatpush1.bf16.msra.mxu0 0
        %2884 = vmatprep.subr.bf16.mxu0 0
        %2885 = vmatpush1.bf16.msra.mxu0 0
        %2886 = vmatprep.subr.bf16.mxu0 0
        %2887 = vmatpush1.bf16.msra.mxu0 0
        %2888 = vmatprep.subr.bf16.mxu0 0
        %2889 = vmatpush1.bf16.msra.mxu0 0
        %2890 = vmatprep.subr.bf16.mxu0 0
        %2891 = vmatpush1.bf16.msra.mxu0 0
        %2892 = vmatprep.subr.bf16.mxu0 0
        %2893 = vmatpush1.bf16.msra.mxu0 0
        %2894 = vmatprep.mubr.bf16.mxu0 0
        %2895 = vmatmul.mubr.bf16.gmra.mrb[0].mxu0 %v2593
        %v2896 = vpop.f32.mrb[0].mxu0
        %v2897 = vadd.f32 %v2640, %v2896
        %v2898 = vpop.f32.mrb[0].mxu0
        %v2899 = vadd.f32 %v2644, %v2898
        %v2900 = vpop.f32.mrb[0].mxu0
        %v2901 = vadd.f32 %v2640, %v2900
        %v2902 = vpop.f32.mrb[0].mxu0
        %v2903 = vadd.f32 %v2644, %v2902
        %2904 = vmatprep.mubr.bf16.mxu0 0
        %2905 = vmatmul.mubr.bf16.gmra.mrb[0].mxu0 %v2594
        %v2906 = vpop.f32.mrb[0].mxu0
        %v2907 = vadd.f32 %v2640, %v2906
        %v2908 = vpop.f32.mrb[0].mxu0
        %v2909 = vadd.f32 %v2644, %v2908
        %v2910 = vpop.f32.mrb[0].mxu0
        %v2911 = vadd.f32 %v2640, %v2910
        %v2912 = vpop.f32.mrb[0].mxu0
        %v2913 = vadd.f32 %v2644, %v2912
        %2914 = vdwg.mxu0
        %v2915 = vmul.f32 %v2844, 0.5
        %v2916 = vmul.f32 %v2846, 0.5
        %v2917 = vmul.f32 %v2897, 0.5
        %v2918 = vmul.f32 %v2899, 0.5
        %v2919 = vmul.f32 %v2848, 0.5
        %v2920 = vmul.f32 %v2850, 0.5
        %v2921 = vmul.f32 %v2901, 0.5
        %v2922 = vmul.f32 %v2903, 0.5
        %v2923 = vmul.f32 %v2854, 0.5
        %v2924 = vmul.f32 %v2856, 0.5
        %v2925 = vmul.f32 %v2907, 0.5
        %v2926 = vmul.f32 %v2909, 0.5
        %v2927 = vmul.f32 %v2858, 0.5
        %v2928 = vmul.f32 %v2860, 0.5
        %v2929 = vmul.f32 %v2911, 0.5
        %v2930 = vmul.f32 %v2913, 0.5
        %v2931 = vmul.f32 %v2844, 0.044715
        %v2932 = vmul.f32 %v2846, 0.044715
        %v2933 = vmul.f32 %v2897, 0.044715
        %v2934 = vmul.f32 %v2899, 0.044715
        %v2935 = vmul.f32 %v2848, 0.044715
        %v2936 = vmul.f32 %v2850, 0.044715
        %v2937 = vmul.f32 %v2901, 0.044715
        %v2938 = vmul.f32 %v2903, 0.044715
        %v2939 = vmul.f32 %v2854, 0.044715
        %v2940 = vmul.f32 %v2856, 0.044715
        %v2941 = vmul.f32 %v2907, 0.044715
        %v2942 = vmul.f32 %v2909, 0.044715
        %v2943 = vmul.f32 %v2858, 0.044715
        %v2944 = vmul.f32 %v2860, 0.044715
        %v2945 = vmul.f32 %v2911, 0.044715
        %v2946 = vmul.f32 %v2913, 0.044715
        %v2947 = vmul.f32 %v2931, %v2844
        %v2948 = vmul.f32 %v2932, %v2846
        %v2949 = vmul.f32 %v2933, %v2897
        %v2950 = vmul.f32 %v2934, %v2899
        %v2951 = vmul.f32 %v2935, %v2848
        %v2952 = vmul.f32 %v2936, %v2850
        %v2953 = vmul.f32 %v2937, %v2901
        %v2954 = vmul.f32 %v2938, %v2903
        %v2955 = vmul.f32 %v2939, %v2854
        %v2956 = vmul.f32 %v2940, %v2856
        %v2957 = vmul.f32 %v2941, %v2907
        %v2958 = vmul.f32 %v2942, %v2909
        %v2959 = vmul.f32 %v2943, %v2858
        %v2960 = vmul.f32 %v2944, %v2860
        %v2961 = vmul.f32 %v2945, %v2911
        %v2962 = vmul.f32 %v2946, %v2913
        %v2963 = vmul.f32 %v2947, %v2844
        %v2964 = vmul.f32 %v2948, %v2846
        %v2965 = vmul.f32 %v2949, %v2897
        %v2966 = vmul.f32 %v2950, %v2899
        %v2967 = vmul.f32 %v2951, %v2848
        %v2968 = vmul.f32 %v2952, %v2850
        %v2969 = vmul.f32 %v2953, %v2901
        %v2970 = vmul.f32 %v2954, %v2903
        %v2971 = vmul.f32 %v2955, %v2854
        %v2972 = vmul.f32 %v2956, %v2856
        %v2973 = vmul.f32 %v2957, %v2907
        %v2974 = vmul.f32 %v2958, %v2909
        %v2975 = vmul.f32 %v2959, %v2858
        %v2976 = vmul.f32 %v2960, %v2860
        %v2977 = vmul.f32 %v2961, %v2911
        %v2978 = vmul.f32 %v2962, %v2913
        %v2979 = vadd.f32 %v2844, %v2963
        %v2980 = vadd.f32 %v2846, %v2964
        %v2981 = vadd.f32 %v2897, %v2965
        %v2982 = vadd.f32 %v2899, %v2966
        %v2983 = vadd.f32 %v2848, %v2967
        %v2984 = vadd.f32 %v2850, %v2968
        %v2985 = vadd.f32 %v2901, %v2969
        %v2986 = vadd.f32 %v2903, %v2970
        %v2987 = vadd.f32 %v2854, %v2971
        %v2988 = vadd.f32 %v2856, %v2972
        %v2989 = vadd.f32 %v2907, %v2973
        %v2990 = vadd.f32 %v2909, %v2974
        %v2991 = vadd.f32 %v2858, %v2975
        %v2992 = vadd.f32 %v2860, %v2976
        %v2993 = vadd.f32 %v2911, %v2977
        %v2994 = vadd.f32 %v2913, %v2978
        %v2995 = vmul.f32 %v2979, 0.7978846
        %v2996 = vmul.f32 %v2980, 0.7978846
        %v2997 = vmul.f32 %v2981, 0.7978846
        %v2998 = vmul.f32 %v2982, 0.7978846
        %v2999 = vmul.f32 %v2983, 0.7978846
        %v3000 = vmul.f32 %v2984, 0.7978846
        %v3001 = vmul.f32 %v2985, 0.7978846
        %v3002 = vmul.f32 %v2986, 0.7978846
        %v3003 = vmul.f32 %v2987, 0.7978846
        %v3004 = vmul.f32 %v2988, 0.7978846
        %v3005 = vmul.f32 %v2989, 0.7978846
        %v3006 = vmul.f32 %v2990, 0.7978846
        %v3007 = vmul.f32 %v2991, 0.7978846
        %v3008 = vmul.f32 %v2992, 0.7978846
        %v3009 = vmul.f32 %v2993, 0.7978846
        %v3010 = vmul.f32 %v2994, 0.7978846
        %v3011 = vtanh.pop %v2995
        %v3012 = vtanh.pop %v2996
        %v3013 = vtanh.pop %v2997
        %v3014 = vtanh.pop %v2998
        %v3015 = vtanh.pop %v2999
        %v3016 = vtanh.pop %v3000
        %v3017 = vtanh.pop %v3001
        %v3018 = vtanh.pop %v3002
        %v3019 = vtanh.pop %v3003
        %v3020 = vtanh.pop %v3004
        %v3021 = vtanh.pop %v3005
        %v3022 = vtanh.pop %v3006
        %v3023 = vtanh.pop %v3007
        %v3024 = vtanh.pop %v3008
        %v3025 = vtanh.pop %v3009
        %v3026 = vtanh.pop %v3010
        %v3027 = vadd.f32 %v3011, 1.0
        %v3028 = vadd.f32 %v3012, 1.0
        %v3029 = vadd.f32 %v3013, 1.0
        %v3030 = vadd.f32 %v3014, 1.0
        %v3031 = vadd.f32 %v3015, 1.0
        %v3032 = vadd.f32 %v3016, 1.0
        %v3033 = vadd.f32 %v3017, 1.0
        %v3034 = vadd.f32 %v3018, 1.0
        %v3035 = vadd.f32 %v3019, 1.0
        %v3036 = vadd.f32 %v3020, 1.0
        %v3037 = vadd.f32 %v3021, 1.0
        %v3038 = vadd.f32 %v3022, 1.0
        %v3039 = vadd.f32 %v3023, 1.0
        %v3040 = vadd.f32 %v3024, 1.0
        %v3041 = vadd.f32 %v3025, 1.0
        %v3042 = vadd.f32 %v3026, 1.0
        %v3043 = vmul.f32 %v2915, %v3027
        %v3044 = vmul.f32 %v2916, %v3028
        %v3045 = vmul.f32 %v2917, %v3029
        %v3046 = vmul.f32 %v2918, %v3030
        %v3047 = vmul.f32 %v2919, %v3031
        %v3048 = vmul.f32 %v2920, %v3032
        %v3049 = vmul.f32 %v2921, %v3033
        %v3050 = vmul.f32 %v2922, %v3034
        %v3051 = vmul.f32 %v2923, %v3035
        %v3052 = vmul.f32 %v2924, %v3036
        %v3053 = vmul.f32 %v2925, %v3037
        %v3054 = vmul.f32 %v2926, %v3038
        %v3055 = vmul.f32 %v2927, %v3039
        %v3056 = vmul.f32 %v2928, %v3040
        %v3057 = vmul.f32 %v2929, %v3041
        %v3058 = vmul.f32 %v2930, %v3042
        %v3059 = vpack.c.bf16 %v3047, %v3043
        %v3060 = vpack.c.bf16 %v3048, %v3044
        %v3061 = vpack.c.bf16 %v3049, %v3045
        %v3062 = vpack.c.bf16 %v3050, %v3046
        %v3063 = vpack.c.bf16 %v3055, %v3051
        %v3064 = vpack.c.bf16 %v3056, %v3052
        %v3065 = vpack.c.bf16 %v3057, %v3053
        %v3066 = vpack.c.bf16 %v3058, %v3054
        %v3067 = vld [vmem:[%s859] sm:$0xf]
        %v3068 = vld [vmem:[%s859 + $0x4] sm:$0xf]
        %v3069 = vld [vmem:[%s859 + $0x8] sm:$0xf]
        %v3070 = vld [vmem:[%s859 + $0xc] sm:$0xf]
        %v3071 = vld [vmem:[%s859 + $0x10] sm:$0xf]
        %v3072 = vld [vmem:[%s859 + $0x14] sm:$0xf]
        %v3073 = vld [vmem:[%s859 + $0x18] sm:$0xf]
        %v3074 = vld [vmem:[%s859 + $0x1c] sm:$0xf]
        %v3075 = vld [vmem:[%s859 + $0x20] sm:$0xf]
        %v3076 = vld [vmem:[%s859 + $0x24] sm:$0xf]
        %v3077 = vld [vmem:[%s859 + $0x28] sm:$0xf]
        %v3078 = vld [vmem:[%s859 + $0x2c] sm:$0xf]
        %v3079 = vld [vmem:[%s859 + $0x30] sm:$0xf]
        %v3080 = vld [vmem:[%s859 + $0x34] sm:$0xf]
        %v3081 = vld [vmem:[%s859 + $0x38] sm:$0xf]
        %v3082 = vld [vmem:[%s859 + $0x3c] sm:$0xf]
        %v3083 = vld [vmem:[%s859 + $0x40] sm:$0xf]
        %v3084 = vld [vmem:[%s859 + $0x44] sm:$0xf]
        %v3085 = vld [vmem:[%s859 + $0x48] sm:$0xf]
        %v3086 = vld [vmem:[%s859 + $0x4c] sm:$0xf]
        %v3087 = vld [vmem:[%s859 + $0x50] sm:$0xf]
        %v3088 = vld [vmem:[%s859 + $0x54] sm:$0xf]
        %v3089 = vld [vmem:[%s859 + $0x58] sm:$0xf]
        %v3090 = vld [vmem:[%s859 + $0x5c] sm:$0xf]
        %v3091 = vld [vmem:[%s859 + $0x60] sm:$0xf]
        %v3092 = vld [vmem:[%s859 + $0x64] sm:$0xf]
        %v3093 = vld [vmem:[%s859 + $0x68] sm:$0xf]
        %v3094 = vld [vmem:[%s859 + $0x6c] sm:$0xf]
        %v3095 = vld [vmem:[%s859 + $0x70] sm:$0xf]
        %v3096 = vld [vmem:[%s859 + $0x74] sm:$0xf]
        %v3097 = vld [vmem:[%s859 + $0x78] sm:$0xf]
        %v3098 = vld [vmem:[%s859 + $0x7c] sm:$0xf]
        %v3099 = vld [vmem:[%s859 + $0x80] sm:$0xf]
        %v3100 = vld [vmem:[%s859 + $0x84] sm:$0xf]
        %v3101 = vld [vmem:[%s859 + $0x88] sm:$0xf]
        %v3102 = vld [vmem:[%s859 + $0x8c] sm:$0xf]
        %v3103 = vld [vmem:[%s859 + $0x90] sm:$0xf]
        %v3104 = vld [vmem:[%s859 + $0x94] sm:$0xf]
        %v3105 = vld [vmem:[%s859 + $0x98] sm:$0xf]
        %v3106 = vld [vmem:[%s859 + $0x9c] sm:$0xf]
        %v3107 = vld [vmem:[%s859 + $0xa0] sm:$0xf]
        %v3108 = vld [vmem:[%s859 + $0xa4] sm:$0xf]
        %v3109 = vld [vmem:[%s859 + $0xa8] sm:$0xf]
        %v3110 = vld [vmem:[%s859 + $0xac] sm:$0xf]
        %v3111 = vld [vmem:[%s859 + $0xb0] sm:$0xf]
        %v3112 = vld [vmem:[%s859 + $0xb4] sm:$0xf]
        %v3113 = vld [vmem:[%s859 + $0xb8] sm:$0xf]
        %v3114 = vld [vmem:[%s859 + $0xbc] sm:$0xf]
        %v3115 = vld [vmem:[%s859 + $0xc0] sm:$0xf]
        %v3116 = vld [vmem:[%s859 + $0xc4] sm:$0xf]
        %v3117 = vld [vmem:[%s859 + $0xc8] sm:$0xf]
        %v3118 = vld [vmem:[%s859 + $0xcc] sm:$0xf]
        %v3119 = vld [vmem:[%s859 + $0xd0] sm:$0xf]
        %v3120 = vld [vmem:[%s859 + $0xd4] sm:$0xf]
        %v3121 = vld [vmem:[%s859 + $0xd8] sm:$0xf]
        %v3122 = vld [vmem:[%s859 + $0xdc] sm:$0xf]
        %v3123 = vld [vmem:[%s859 + $0xe0] sm:$0xf]
        %v3124 = vld [vmem:[%s859 + $0xe4] sm:$0xf]
        %v3125 = vld [vmem:[%s859 + $0xe8] sm:$0xf]
        %v3126 = vld [vmem:[%s859 + $0xec] sm:$0xf]
        %v3127 = vld [vmem:[%s859 + $0xf0] sm:$0xf]
        %v3128 = vld [vmem:[%s859 + $0xf4] sm:$0xf]
        %v3129 = vld [vmem:[%s859 + $0xf8] sm:$0xf]
        %v3130 = vld [vmem:[%s859 + $0xfc] sm:$0xf]
        %v3131 = vld [vmem:[%s862] sm:$0x1]
        %v3133 = vlaneseq
        %v3134 = vshrl.u32 %v3133, 7
        %v3135 = vsub.s32 0, %v3134
        %v3136 = vrot.slane %v3131, %v3135
        %v3202 = vunpack.c.l.b16 %v3067
        %v3203 = vunpack.c.l.b16 %v3068
        %v3204 = vunpack.c.l.b16 %v3069
        %v3205 = vunpack.c.l.b16 %v3070
        %v3206 = vunpack.c.l.b16 %v3071
        %v3207 = vunpack.c.l.b16 %v3072
        %v3208 = vunpack.c.l.b16 %v3073
        %v3209 = vunpack.c.l.b16 %v3074
        %v3210 = vunpack.c.l.b16 %v3075
        %v3211 = vunpack.c.l.b16 %v3076
        %v3212 = vunpack.c.l.b16 %v3077
        %v3213 = vunpack.c.l.b16 %v3078
        %v3214 = vunpack.c.l.b16 %v3079
        %v3215 = vunpack.c.l.b16 %v3080
        %v3216 = vunpack.c.l.b16 %v3081
        %v3217 = vunpack.c.l.b16 %v3082
        %v3218 = vunpack.c.l.b16 %v3083
        %v3219 = vunpack.c.l.b16 %v3084
        %v3220 = vunpack.c.l.b16 %v3085
        %v3221 = vunpack.c.l.b16 %v3086
        %v3222 = vunpack.c.l.b16 %v3087
        %v3223 = vunpack.c.l.b16 %v3088
        %v3224 = vunpack.c.l.b16 %v3089
        %v3225 = vunpack.c.l.b16 %v3090
        %v3226 = vunpack.c.l.b16 %v3091
        %v3227 = vunpack.c.l.b16 %v3092
        %v3228 = vunpack.c.l.b16 %v3093
        %v3229 = vunpack.c.l.b16 %v3094
        %v3230 = vunpack.c.l.b16 %v3095
        %v3231 = vunpack.c.l.b16 %v3096
        %v3232 = vunpack.c.l.b16 %v3097
        %v3233 = vunpack.c.l.b16 %v3098
        %v3234 = vunpack.c.l.b16 %v3099
        %v3235 = vunpack.c.l.b16 %v3100
        %v3236 = vunpack.c.l.b16 %v3101
        %v3237 = vunpack.c.l.b16 %v3102
        %v3238 = vunpack.c.l.b16 %v3103
        %v3239 = vunpack.c.l.b16 %v3104
        %v3240 = vunpack.c.l.b16 %v3105
        %v3241 = vunpack.c.l.b16 %v3106
        %v3242 = vunpack.c.l.b16 %v3107
        %v3243 = vunpack.c.l.b16 %v3108
        %v3244 = vunpack.c.l.b16 %v3109
        %v3245 = vunpack.c.l.b16 %v3110
        %v3246 = vunpack.c.l.b16 %v3111
        %v3247 = vunpack.c.l.b16 %v3112
        %v3248 = vunpack.c.l.b16 %v3113
        %v3249 = vunpack.c.l.b16 %v3114
        %v3250 = vunpack.c.l.b16 %v3115
        %v3251 = vunpack.c.l.b16 %v3116
        %v3252 = vunpack.c.l.b16 %v3117
        %v3253 = vunpack.c.l.b16 %v3118
        %v3254 = vunpack.c.l.b16 %v3119
        %v3255 = vunpack.c.l.b16 %v3120
        %v3256 = vunpack.c.l.b16 %v3121
        %v3257 = vunpack.c.l.b16 %v3122
        %v3258 = vunpack.c.l.b16 %v3123
        %v3259 = vunpack.c.l.b16 %v3124
        %v3260 = vunpack.c.l.b16 %v3125
        %v3261 = vunpack.c.l.b16 %v3126
        %v3262 = vunpack.c.l.b16 %v3127
        %v3263 = vunpack.c.l.b16 %v3128
        %v3264 = vunpack.c.l.b16 %v3129
        %v3265 = vunpack.c.l.b16 %v3130
        %v3266 = vpack.c.b16 %v3203, %v3202
        %v3267 = vpack.c.b16 %v3205, %v3204
        %v3268 = vpack.c.b16 %v3207, %v3206
        %v3269 = vpack.c.b16 %v3209, %v3208
        %v3270 = vpack.c.b16 %v3211, %v3210
        %v3271 = vpack.c.b16 %v3213, %v3212
        %v3272 = vpack.c.b16 %v3215, %v3214
        %v3273 = vpack.c.b16 %v3217, %v3216
        %v3274 = vpack.c.b16 %v3219, %v3218
        %v3275 = vpack.c.b16 %v3221, %v3220
        %v3276 = vpack.c.b16 %v3223, %v3222
        %v3277 = vpack.c.b16 %v3225, %v3224
        %v3278 = vpack.c.b16 %v3227, %v3226
        %v3279 = vpack.c.b16 %v3229, %v3228
        %v3280 = vpack.c.b16 %v3231, %v3230
        %v3281 = vpack.c.b16 %v3233, %v3232
        %v3282 = vpack.c.b16 %v3235, %v3234
        %v3283 = vpack.c.b16 %v3237, %v3236
        %v3284 = vpack.c.b16 %v3239, %v3238
        %v3285 = vpack.c.b16 %v3241, %v3240
        %v3286 = vpack.c.b16 %v3243, %v3242
        %v3287 = vpack.c.b16 %v3245, %v3244
        %v3288 = vpack.c.b16 %v3247, %v3246
        %v3289 = vpack.c.b16 %v3249, %v3248
        %v3290 = vpack.c.b16 %v3251, %v3250
        %v3291 = vpack.c.b16 %v3253, %v3252
        %v3292 = vpack.c.b16 %v3255, %v3254
        %v3293 = vpack.c.b16 %v3257, %v3256
        %v3294 = vpack.c.b16 %v3259, %v3258
        %v3295 = vpack.c.b16 %v3261, %v3260
        %v3296 = vpack.c.b16 %v3263, %v3262
        %v3297 = vpack.c.b16 %v3265, %v3264
        %3330 = vmatprep.subr.bf16.mxu0 0
        %3331 = vmatpush1.bf16.msra.mxu0 %v3266
        %3332 = vmatprep.subr.bf16.mxu0 0
        %3333 = vmatpush1.bf16.msra.mxu0 %v3267
        %3334 = vmatprep.subr.bf16.mxu0 0
        %3335 = vmatpush1.bf16.msra.mxu0 %v3268
        %3336 = vmatprep.subr.bf16.mxu0 0
        %3337 = vmatpush1.bf16.msra.mxu0 %v3269
        %3338 = vmatprep.subr.bf16.mxu0 0
        %3339 = vmatpush1.bf16.msra.mxu0 %v3270
        %3340 = vmatprep.subr.bf16.mxu0 0
        %3341 = vmatpush1.bf16.msra.mxu0 %v3271
        %3342 = vmatprep.subr.bf16.mxu0 0
        %3343 = vmatpush1.bf16.msra.mxu0 %v3272
        %3344 = vmatprep.subr.bf16.mxu0 0
        %3345 = vmatpush1.bf16.msra.mxu0 %v3273
        %3346 = vmatprep.subr.bf16.mxu0 0
        %3347 = vmatpush1.bf16.msra.mxu0 %v3274
        %3348 = vmatprep.subr.bf16.mxu0 0
        %3349 = vmatpush1.bf16.msra.mxu0 %v3275
        %3350 = vmatprep.subr.bf16.mxu0 0
        %3351 = vmatpush1.bf16.msra.mxu0 %v3276
        %3352 = vmatprep.subr.bf16.mxu0 0
        %3353 = vmatpush1.bf16.msra.mxu0 %v3277
        %3354 = vmatprep.subr.bf16.mxu0 0
        %3355 = vmatpush1.bf16.msra.mxu0 %v3278
        %3356 = vmatprep.subr.bf16.mxu0 0
        %3357 = vmatpush1.bf16.msra.mxu0 %v3279
        %3358 = vmatprep.subr.bf16.mxu0 0
        %3359 = vmatpush1.bf16.msra.mxu0 %v3280
        %3360 = vmatprep.subr.bf16.mxu0 0
        %3361 = vmatpush1.bf16.msra.mxu0 %v3281
        %3362 = vmatprep.mubr.bf16.mxu0 %v3060
        %3363 = vmatmul.mubr.bf16.gmra.mrb[0].mxu0 %v3059
        %v3364 = vpop.f32.mrb[0].mxu0
        %v3365 = vadd.f32 %v3136, %v3364
        %v3366 = vpop.f32.mrb[0].mxu0
        %v3367 = vpop.f32.mrb[0].mxu0
        %v3368 = vadd.f32 %v3136, %v3367
        %v3369 = vpop.f32.mrb[0].mxu0
        %3370 = vmatprep.mubr.bf16.mxu0 %v3064
        %3371 = vmatmul.mubr.bf16.gmra.mrb[0].mxu0 %v3063
        %v3372 = vpop.f32.mrb[0].mxu0
        %v3373 = vadd.f32 %v3136, %v3372
        %v3374 = vpop.f32.mrb[0].mxu0
        %v3375 = vpop.f32.mrb[0].mxu0
        %v3376 = vadd.f32 %v3136, %v3375
        %v3377 = vpop.f32.mrb[0].mxu0
        %3378 = vdwg.mxu0
        %3379 = vmatprep.subr.bf16.mxu0 0
        %3380 = vmatpush1.bf16.msra.mxu0 %v3282
        %3381 = vmatprep.subr.bf16.mxu0 0
        %3382 = vmatpush1.bf16.msra.mxu0 %v3283
        %3383 = vmatprep.subr.bf16.mxu0 0
        %3384 = vmatpush1.bf16.msra.mxu0 %v3284
        %3385 = vmatprep.subr.bf16.mxu0 0
        %3386 = vmatpush1.bf16.msra.mxu0 %v3285
        %3387 = vmatprep.subr.bf16.mxu0 0
        %3388 = vmatpush1.bf16.msra.mxu0 %v3286
        %3389 = vmatprep.subr.bf16.mxu0 0
        %3390 = vmatpush1.bf16.msra.mxu0 %v3287
        %3391 = vmatprep.subr.bf16.mxu0 0
        %3392 = vmatpush1.bf16.msra.mxu0 %v3288
        %3393 = vmatprep.subr.bf16.mxu0 0
        %3394 = vmatpush1.bf16.msra.mxu0 %v3289
        %3395 = vmatprep.subr.bf16.mxu0 0
        %3396 = vmatpush1.bf16.msra.mxu0 %v3290
        %3397 = vmatprep.subr.bf16.mxu0 0
        %3398 = vmatpush1.bf16.msra.mxu0 %v3291
        %3399 = vmatprep.subr.bf16.mxu0 0
        %3400 = vmatpush1.bf16.msra.mxu0 %v3292
        %3401 = vmatprep.subr.bf16.mxu0 0
        %3402 = vmatpush1.bf16.msra.mxu0 %v3293
        %3403 = vmatprep.subr.bf16.mxu0 0
        %3404 = vmatpush1.bf16.msra.mxu0 %v3294
        %3405 = vmatprep.subr.bf16.mxu0 0
        %3406 = vmatpush1.bf16.msra.mxu0 %v3295
        %3407 = vmatprep.subr.bf16.mxu0 0
        %3408 = vmatpush1.bf16.msra.mxu0 %v3296
        %3409 = vmatprep.subr.bf16.mxu0 0
        %3410 = vmatpush1.bf16.msra.mxu0 %v3297
        %3411 = vmatprep.mubr.bf16.mxu0 %v3062
        %3412 = vmatmul.mubr.bf16.gmra.mrb[0].mxu0 %v3061
        %v3413 = vpop.f32.mrb[0].mxu0
        %v3414 = vadd.f32 %v3365, %v3413
        %v3415 = vpop.f32.mrb[0].mxu0
        %v3416 = vpop.f32.mrb[0].mxu0
        %v3417 = vadd.f32 %v3368, %v3416
        %v3418 = vpop.f32.mrb[0].mxu0
        %3419 = vmatprep.mubr.bf16.mxu0 %v3066
        %3420 = vmatmul.mubr.bf16.gmra.mrb[0].mxu0 %v3065
        %v3421 = vpop.f32.mrb[0].mxu0
        %v3422 = vadd.f32 %v3373, %v3421
        %v3423 = vpop.f32.mrb[0].mxu0
        %v3424 = vpop.f32.mrb[0].mxu0
        %v3425 = vadd.f32 %v3376, %v3424
        %v3426 = vpop.f32.mrb[0].mxu0
        %3427 = vdwg.mxu0
        %v3428 = vadd.f32 %v2589, %v3414
        %v3429 = vadd.f32 %v2590, %v3417
        %v3430 = vadd.f32 %v2591, %v3422
        %v3431 = vadd.f32 %v2592, %v3425
        %v3432 = vld [vmem:[%s865] sm:$0x1]
        %v3433 = vld [vmem:[%s868] sm:$0x1]
        %3434 = vadd.xlane.f32.xlu0 %v3428
        %v3435 = vpop.xlane.xlu0 %3434
        %3436 = vadd.xlane.f32.xlu0 %v3429
        %v3437 = vpop.xlane.xlu0 %3436
        %3438 = vadd.xlane.f32.xlu0 %v3430
        %v3439 = vpop.xlane.xlu0 %3438
        %3440 = vadd.xlane.f32.xlu0 %v3431
        %v3441 = vpop.xlane.xlu0 %3440
        %v3442 = vmul.f32 %v3435, %v2536
        %v3443 = vmul.f32 %v3437, %v2536
        %v3444 = vmul.f32 %v3439, %v2536
        %v3445 = vmul.f32 %v3441, %v2536
        %v3446 = vsub.f32 %v3428, %v3442
        %v3447 = vsub.f32 %v3429, %v3443
        %v3448 = vsub.f32 %v3430, %v3444
        %v3449 = vsub.f32 %v3431, %v3445
        %v3450 = vmul.f32 %v3446, %v3446
        %v3451 = vmul.f32 %v3447, %v3447
        %v3452 = vmul.f32 %v3448, %v3448
        %v3453 = vmul.f32 %v3449, %v3449
        %3454 = vadd.xlane.f32.xlu0 %v3450
        %v3455 = vpop.xlane.xlu0 %3454
        %3456 = vadd.xlane.f32.xlu0 %v3451
        %v3457 = vpop.xlane.xlu0 %3456
        %3458 = vadd.xlane.f32.xlu0 %v3452
        %v3459 = vpop.xlane.xlu0 %3458
        %3460 = vadd.xlane.f32.xlu0 %v3453
        %v3461 = vpop.xlane.xlu0 %3460
        %v3462 = vmul.f32 %v3455, %v2536
        %v3463 = vmul.f32 %v3457, %v2536
        %v3464 = vmul.f32 %v3459, %v2536
        %v3465 = vmul.f32 %v3461, %v2536
        %v3466 = vadd.f32 %v3462, 1e-12
        %v3467 = vadd.f32 %v3463, 1e-12
        %v3468 = vadd.f32 %v3464, 1e-12
        %v3469 = vadd.f32 %v3465, 1e-12
        %v3470 = vrsqrt.pop %v3466
        %v3471 = vrsqrt.pop %v3467
        %v3472 = vrsqrt.pop %v3468
        %v3473 = vrsqrt.pop %v3469
        %v3474 = vmul.f32 %v3446, %v3470
        %v3475 = vmul.f32 %v3447, %v3471
        %v3476 = vmul.f32 %v3448, %v3472
        %v3477 = vmul.f32 %v3449, %v3473
        %v3479 = vlaneseq
        %v3480 = vshrl.u32 %v3479, 7
        %v3481 = vsub.s32 0, %v3480
        %v3482 = vrot.slane %v3432, %v3481
        %v3484 = vmul.f32 %v3474, %v3482
        %v3485 = vmul.f32 %v3475, %v3482
        %v3486 = vmul.f32 %v3476, %v3482
        %v3487 = vmul.f32 %v3477, %v3482
        %v3489 = vlaneseq
        %v3490 = vshrl.u32 %v3489, 7
        %v3491 = vsub.s32 0, %v3490
        %v3492 = vrot.slane %v3433, %v3491
        %v3494 = vadd.f32 %v3484, %v3492
        %v3495 = vadd.f32 %v3485, %v3492
        %v3496 = vadd.f32 %v3486, %v3492
        %v3497 = vadd.f32 %v3487, %v3492
        %3498 = vst [vmem:[#allocation2] sm:$0xff] %v3494
        %3499 = vst [vmem:[#allocation2 + $0x8] sm:$0xff] %v3495
        %3500 = vst [vmem:[#allocation2 + $0x10] sm:$0xff] %v3496
        %3501 = vst [vmem:[#allocation2 + $0x18] sm:$0xff] %v3497
        %p3502 = scmp.eq.s32.totalorder %s35, 1
        // Predicated region
        $region125: #{bert_base_uncased_forward.1} parent=99 // pred_check
          %p3503 = pneg %p3502
        $region126: #{bert_base_uncased_forward.1} parent=99 // pred_check_branch
          %3505 = sbr.rel (%p3503) target = $region128
        $region127: #{bert_base_uncased_forward.1} parent=99 // pred_region
          %v3506 = vld [vmem:[#allocation2] ss:$16 sm:$0x3]
          %v3507 = vpack.c.bf16 %v3506, %v3506
          %v3508 = vld [vmem:[#allocation10] sm:$0xf]
          %v3509 = vld [vmem:[#allocation10 + $0x4] sm:$0xf]
          %v3510 = vld [vmem:[#allocation10 + $0x8] sm:$0xf]
          %v3511 = vld [vmem:[#allocation10 + $0xc] sm:$0xf]
          %v3512 = vld [vmem:[#allocation10 + $0x10] sm:$0xf]
          %v3513 = vld [vmem:[#allocation10 + $0x14] sm:$0xf]
          %v3514 = vld [vmem:[#allocation10 + $0x18] sm:$0xf]
          %v3515 = vld [vmem:[#allocation10 + $0x1c] sm:$0xf]
          %v3516 = vld [vmem:[#allocation10 + $0x20] sm:$0xf]
          %v3517 = vld [vmem:[#allocation10 + $0x24] sm:$0xf]
          %v3518 = vld [vmem:[#allocation10 + $0x28] sm:$0xf]
          %v3519 = vld [vmem:[#allocation10 + $0x2c] sm:$0xf]
          %v3520 = vld [vmem:[#allocation10 + $0x30] sm:$0xf]
          %v3521 = vld [vmem:[#allocation10 + $0x34] sm:$0xf]
          %v3522 = vld [vmem:[#allocation10 + $0x38] sm:$0xf]
          %v3523 = vld [vmem:[#allocation10 + $0x3c] sm:$0xf]
          %v3524 = vld [vmem:[%s17] sm:$0x1]
          %v3526 = vlaneseq
          %v3527 = vshrl.u32 %v3526, 7
          %v3528 = vsub.s32 0, %v3527
          %v3529 = vrot.slane %v3524, %v3528
          %v3547 = vunpack.c.l.b16 %v3508
          %v3548 = vunpack.c.l.b16 %v3509
          %v3549 = vunpack.c.l.b16 %v3510
          %v3550 = vunpack.c.l.b16 %v3511
          %v3551 = vunpack.c.l.b16 %v3512
          %v3552 = vunpack.c.l.b16 %v3513
          %v3553 = vunpack.c.l.b16 %v3514
          %v3554 = vunpack.c.l.b16 %v3515
          %v3555 = vunpack.c.l.b16 %v3516
          %v3556 = vunpack.c.l.b16 %v3517
          %v3557 = vunpack.c.l.b16 %v3518
          %v3558 = vunpack.c.l.b16 %v3519
          %v3559 = vunpack.c.l.b16 %v3520
          %v3560 = vunpack.c.l.b16 %v3521
          %v3561 = vunpack.c.l.b16 %v3522
          %v3562 = vunpack.c.l.b16 %v3523
          %v3563 = vpack.c.b16 %v3548, %v3547
          %v3564 = vpack.c.b16 %v3550, %v3549
          %v3565 = vpack.c.b16 %v3552, %v3551
          %v3566 = vpack.c.b16 %v3554, %v3553
          %v3567 = vpack.c.b16 %v3556, %v3555
          %v3568 = vpack.c.b16 %v3558, %v3557
          %v3569 = vpack.c.b16 %v3560, %v3559
          %v3570 = vpack.c.b16 %v3562, %v3561
          %3579 = vmatprep.subr.bf16.mxu0 0
          %3580 = vmatpush1.bf16.msra.mxu0 %v3563
          %3581 = vmatprep.subr.bf16.mxu0 0
          %3582 = vmatpush1.bf16.msra.mxu0 %v3564
          %3583 = vmatprep.subr.bf16.mxu0 0
          %3584 = vmatpush1.bf16.msra.mxu0 %v3565
          %3585 = vmatprep.subr.bf16.mxu0 0
          %3586 = vmatpush1.bf16.msra.mxu0 %v3566
          %3587 = vmatprep.subr.bf16.mxu0 0
          %3588 = vmatpush1.bf16.msra.mxu0 %v3567
          %3589 = vmatprep.subr.bf16.mxu0 0
          %3590 = vmatpush1.bf16.msra.mxu0 %v3568
          %3591 = vmatprep.subr.bf16.mxu0 0
          %3592 = vmatpush1.bf16.msra.mxu0 %v3569
          %3593 = vmatprep.subr.bf16.mxu0 0
          %3594 = vmatpush1.bf16.msra.mxu0 %v3570
          %3595 = vmatprep.subr.bf16.mxu0 0
          %3596 = vmatpush1.bf16.msra.mxu0 0
          %3597 = vmatprep.subr.bf16.mxu0 0
          %3598 = vmatpush1.bf16.msra.mxu0 0
          %3599 = vmatprep.subr.bf16.mxu0 0
          %3600 = vmatpush1.bf16.msra.mxu0 0
          %3601 = vmatprep.subr.bf16.mxu0 0
          %3602 = vmatpush1.bf16.msra.mxu0 0
          %3603 = vmatprep.subr.bf16.mxu0 0
          %3604 = vmatpush1.bf16.msra.mxu0 0
          %3605 = vmatprep.subr.bf16.mxu0 0
          %3606 = vmatpush1.bf16.msra.mxu0 0
          %3607 = vmatprep.subr.bf16.mxu0 0
          %3608 = vmatpush1.bf16.msra.mxu0 0
          %3609 = vmatprep.subr.bf16.mxu0 0
          %3610 = vmatpush1.bf16.msra.mxu0 0
          %3611 = vmatprep.mubr.bf16.mxu0 0
          %3612 = vmatmul.mubr.bf16.gmra.mrb[0].mxu0 %v3507
          %v3613 = vpop.f32.mrb[0].mxu0
          %v3614 = vadd.f32 %v3529, %v3613
          %v3615 = vpop.f32.mrb[0].mxu0
          %v3616 = vpop.f32.mrb[0].mxu0
          %v3617 = vpop.f32.mrb[0].mxu0
          %3618 = vdwg.mxu0
          %v3619 = vtanh.pop %v3614
          %v3620 = vld [vmem:[%s18] sm:$0xff]
          %v3621 = vld [vmem:[%s18 + $0x8] sm:$0xff]
          %v3622 = vld [vmem:[%s18 + $0x10] sm:$0xff]
          %v3623 = vld [vmem:[%s18 + $0x18] sm:$0xff]
          %v3624 = vld [vmem:[%s18 + $0x20] sm:$0xff]
          %v3625 = vld [vmem:[%s18 + $0x28] sm:$0xff]
          %v3626 = vld [vmem:[%s18 + $0x30] sm:$0xff]
          %v3627 = vld [vmem:[%s18 + $0x38] sm:$0xff]
          %v3628 = vld [vmem:[%s18 + $0x40] sm:$0xff]
          %v3629 = vld [vmem:[%s18 + $0x48] sm:$0xff]
          %v3630 = vld [vmem:[%s18 + $0x50] sm:$0xff]
          %v3631 = vld [vmem:[%s18 + $0x58] sm:$0xff]
          %v3632 = vld [vmem:[%s18 + $0x60] sm:$0xff]
          %v3633 = vld [vmem:[%s18 + $0x68] sm:$0xff]
          %v3634 = vld [vmem:[%s18 + $0x70] sm:$0xff]
          %v3635 = vld [vmem:[%s18 + $0x78] sm:$0xff]
          %v3636 = vld [vmem:[#allocation3] sm:$0x1]
          %v3638 = vlaneseq
          %v3639 = vshrl.u32 %v3638, 7
          %v3640 = vsub.s32 0, %v3639
          %v3641 = vrot.slane %v3636, %v3640
          %3643 = vmatprep.subr.mxu0 0.0
          %3644 = vmatpush1.msra.mxu0 %v3620
          %3645 = vmatprep.subr.mxu0 0.0
          %3646 = vmatpush1.msra.mxu0 %v3621
          %3647 = vmatprep.subr.mxu0 0.0
          %3648 = vmatpush1.msra.mxu0 %v3622
          %3649 = vmatprep.subr.mxu0 0.0
          %3650 = vmatpush1.msra.mxu0 %v3623
          %3651 = vmatprep.subr.mxu0 0.0
          %3652 = vmatpush1.msra.mxu0 %v3624
          %3653 = vmatprep.subr.mxu0 0.0
          %3654 = vmatpush1.msra.mxu0 %v3625
          %3655 = vmatprep.subr.mxu0 0.0
          %3656 = vmatpush1.msra.mxu0 %v3626
          %3657 = vmatprep.subr.mxu0 0.0
          %3658 = vmatpush1.msra.mxu0 %v3627
          %3659 = vmatprep.subr.mxu0 0.0
          %3660 = vmatpush1.msra.mxu0 %v3628
          %3661 = vmatprep.subr.mxu0 0.0
          %3662 = vmatpush1.msra.mxu0 %v3629
          %3663 = vmatprep.subr.mxu0 0.0
          %3664 = vmatpush1.msra.mxu0 %v3630
          %3665 = vmatprep.subr.mxu0 0.0
          %3666 = vmatpush1.msra.mxu0 %v3631
          %3667 = vmatprep.subr.mxu0 0.0
          %3668 = vmatpush1.msra.mxu0 %v3632
          %3669 = vmatprep.subr.mxu0 0.0
          %3670 = vmatpush1.msra.mxu0 %v3633
          %3671 = vmatprep.subr.mxu0 0.0
          %3672 = vmatpush1.msra.mxu0 %v3634
          %3673 = vmatprep.subr.mxu0 0.0
          %3674 = vmatpush1.msra.mxu0 %v3635
          %3675 = vmatprep.subr.mxu0 0.0
          %3676 = vmatpush1.msra.mxu0 0.0
          %3677 = vmatprep.subr.mxu0 0.0
          %3678 = vmatpush1.msra.mxu0 0.0
          %3679 = vmatprep.subr.mxu0 0.0
          %3680 = vmatpush1.msra.mxu0 0.0
          %3681 = vmatprep.subr.mxu0 0.0
          %3682 = vmatpush1.msra.mxu0 0.0
          %3683 = vmatprep.subr.mxu0 0.0
          %3684 = vmatpush1.msra.mxu0 0.0
          %3685 = vmatprep.subr.mxu0 0.0
          %3686 = vmatpush1.msra.mxu0 0.0
          %3687 = vmatprep.subr.mxu0 0.0
          %3688 = vmatpush1.msra.mxu0 0.0
          %3689 = vmatprep.subr.mxu0 0.0
          %3690 = vmatpush1.msra.mxu0 0.0
          %3691 = vmatprep.subr.mxu0 0.0
          %3692 = vmatpush1.msra.mxu0 0.0
          %3693 = vmatprep.subr.mxu0 0.0
          %3694 = vmatpush1.msra.mxu0 0.0
          %3695 = vmatprep.subr.mxu0 0.0
          %3696 = vmatpush1.msra.mxu0 0.0
          %3697 = vmatprep.subr.mxu0 0.0
          %3698 = vmatpush1.msra.mxu0 0.0
          %3699 = vmatprep.subr.mxu0 0.0
          %3700 = vmatpush1.msra.mxu0 0.0
          %3701 = vmatprep.subr.mxu0 0.0
          %3702 = vmatpush1.msra.mxu0 0.0
          %3703 = vmatprep.subr.mxu0 0.0
          %3704 = vmatpush1.msra.mxu0 0.0
          %3705 = vmatprep.subr.mxu0 0.0
          %3706 = vmatpush1.msra.mxu0 0.0
          %3707 = vmatprep.mubr.f32.mxu0 0.0
          %3708 = vmatmul.mubr.f32.gmra.mrb[0].mxu0 %v3619
          %v3709 = vpop.f32.mrb[0].mxu0
          %v3710 = vadd.f32 %v3641, %v3709
          %v3711 = vpop.f32.mrb[0].mxu0
          %3712 = vdwg.mxu0
          %vm3713 = vcmask 1024
          %3714 = vst.msk [vmem:[%s20] sm:$0x3] %vm3713, %v3710
        $region128: #{bert_base_uncased_forward.1} parent=99 // pred_fallthru
          _
        // Predicated region
        $region129: #{bert_base_uncased_forward.1} parent=99 // pred_check
          %p3715 = pneg %p528
        $region130: #{bert_base_uncased_forward.1} parent=99 // pred_check_branch
          %3717 = sbr.rel (%p3715) target = $region132
        $region131: #{bert_base_uncased_forward.1} parent=99 // pred_region
          _
        $region132: #{bert_base_uncased_forward.1} parent=99 // pred_fallthru
          _
        // Predicated region
        $region133: #{bert_base_uncased_forward.1} parent=99 // pred_check
          %p3718 = pneg %p528
        $region134: #{bert_base_uncased_forward.1} parent=99 // pred_check_branch
          %3720 = sbr.rel (%p3718) target = $region136
        $region135: #{bert_base_uncased_forward.1} parent=99 // pred_region
          _
        $region136: #{bert_base_uncased_forward.1} parent=99 // pred_fallthru
          _
      $region100: #{bert_base_uncased_forward.1} parent=5 // pred_fallthru
        _
      %p3721 = scmp.le.s32.totalorder 2, %s30
      // Predicated region
      $region137: #{bert_base_uncased_forward.1} parent=5 // pred_check
        %p3722 = pneg %p3721
      $region138: #{bert_base_uncased_forward.1} parent=5 // pred_check_branch
        %3724 = sbr.rel (%p3722) target = $region140
      $region139: #{bert_base_uncased_forward.1} parent=5 // pred_region
        %s3725 = ssub.s32 %s30, 2
      $region140: #{bert_base_uncased_forward.1} parent=5 // pred_fallthru
        _
    $region6: #{bert_base_uncased_forward.1} parent=1 // loop_footer
      %s34 = sadd.s32 1, %s30
    $region7: #{bert_base_uncased_forward.1} parent=1 // loop_footer_branch
      %29 = sbr.rel target = $region3
    $region8: #{bert_base_uncased_forward.1} parent=1 // loop_exit
      _
    %3726 = vsyncpa [#allocation5], 1
    %s3727 = scalar_lea.sflag [#allocation5], 1
    %3728 = vsyncpa %s3727, 1
    %3729 = vsyncpa [#allocation7], 1

</llo_original>
